<compile_context>
chip_gen: v5e
topology: v5e:2x2
jax: 0.10.0
libtpu: 0.0.40
codegen_flags: <defaults>
</compile_context>

<pallas_src>
import functools

import jax
import jax.numpy as jnp
from jax import lax
from jax.experimental import pallas as pl
from jax.experimental.pallas import tpu as pltpu


def _round_up(v, m):
    return (v + m - 1) // m * m


# -----------------------------------------------------------------------------
# Static geometry of the strided-flattened layout (all Python ints).
# Row index inside a step = b*H*W + h*W + w  (b = image within the step).
# -----------------------------------------------------------------------------
def _geometry(H, W, B):
    HW = H * W
    h1, w1 = H - 2, W - 2                       # conv1 output spatial (valid)
    hp1, wp1 = h1 // 2, w1 // 2                 # pool1 output (floor)
    h2, w2 = hp1 - 2, wp1 - 2                   # conv2 output spatial
    hp2, wp2 = h2 // 2, w2 // 2                 # pool2 output (floor)
    assert h2 >= 1 and w2 >= 1 and hp2 >= 1 and wp2 >= 1

    Nc1 = (B - 1) * HW + (h1 - 1) * W + w1                      # conv1 rows
    Np1 = Nc1 - 1 - W                                           # pool1 rows
    Nc2 = (B - 1) * HW + 2 * W * (h2 - 1) + 2 * (w2 - 1) + 1    # conv2 rows
    Np2 = Nc2 - 2 - 2 * W                                       # pool2 rows

    # lane offsets of the 3x3 taps / pooled cells in the strided indexing
    offs1 = [dy * W + dx for dy in range(3) for dx in range(3)]
    offs2 = [2 * W * dy + 2 * dx for dy in range(3) for dx in range(3)]
    offs_p2 = [4 * W * u + 4 * v for u in range(hp2) for v in range(wp2)]

    # static bound checks: every slice stays inside its source map and every
    # *valid* output row only ever reads *valid* rows of the previous map.
    assert Nc1 + offs1[-1] <= B * HW
    assert (B - 1) * HW + 2 * W * (hp1 - 1) + 2 * (wp1 - 1) <= Np1 - 1
    assert Nc2 + offs2[-1] <= Np1
    assert (B - 1) * HW + offs_p2[-1] <= Np2 - 1

    return dict(HW=HW, Nc1=Nc1, Np1=Np1, Nc2=Nc2, Np2=Np2,
                offs1=offs1, offs2=offs2, offs_p2=offs_p2)


# -----------------------------------------------------------------------------
# Fused kernel factory (all geometry baked into the trace)
# -----------------------------------------------------------------------------
def _make_kernel(geo, W, B):
    HW = geo["HW"]
    Nc1, Np1 = geo["Nc1"], geo["Np1"]
    Nc2, Np2 = geo["Nc2"], geo["Np2"]
    offs1, offs2, offs_p2 = geo["offs1"], geo["offs2"], geo["offs_p2"]
    inv_pool = 1.0 / float(len(offs_p2))

    def kernel(x_ref, w1_ref, b1_ref, s1_ref, t1_ref,
               w2_ref, b2_ref, s2_ref, t2_ref,
               f1w_ref, f1b_ref, f2w_ref, f2b_ref, f3w_ref, f3b_ref,
               o_ref):
        x = x_ref[...]                                           # (cin_pad, B*HW)

        # ---- Conv2d(cin->16, k3, valid) + ReLU: one merged-K MXU dot
        p1 = jnp.concatenate([x[:, o:o + Nc1] for o in offs1], axis=0)
        y1 = jnp.maximum(
            jnp.dot(w1_ref[...], p1, preferred_element_type=jnp.float32)
            + b1_ref[...], 0.0)                                  # (16, Nc1)

        # ---- MaxPool2d(2,2) (floor) as two shifted lane maxes, then BN1(eval)
        mw1 = jnp.maximum(y1[:, :Nc1 - 1], y1[:, 1:])
        mp1 = jnp.maximum(mw1[:, :Np1], mw1[:, W:W + Np1])
        z1 = mp1 * s1_ref[...] + t1_ref[...]                     # (16, Np1)

        # ---- Conv2d(16->32, k3, valid) + ReLU: one merged-K MXU dot
        # (the pooled map stays in the strided layout, so the taps are just
        #  larger lane shifts -- no compaction/gather needed)
        p2 = jnp.concatenate([z1[:, o:o + Nc2] for o in offs2], axis=0)
        y2 = jnp.maximum(
            jnp.dot(w2_ref[...], p2, preferred_element_type=jnp.float32)
            + b2_ref[...], 0.0)                                  # (32, Nc2)

        # ---- MaxPool2d(2,2) + AdaptiveAvgPool2d(1): two shifted maxes, then
        # one (32, Np2) @ (Np2, B) dot against an in-kernel 0/0.25 selector
        mw2 = jnp.maximum(y2[:, :Nc2 - 2], y2[:, 2:])
        mp2 = jnp.maximum(mw2[:, :Np2], mw2[:, 2 * W:2 * W + Np2])  # (32, Np2)

        r = lax.broadcasted_iota(jnp.int32, (Np2, B), 0)
        b = lax.broadcasted_iota(jnp.int32, (Np2, B), 1)
        rel = r - b * HW
        hit = functools.reduce(jnp.logical_or, [rel == o for o in offs_p2])
        avg = jnp.where(hit, inv_pool, 0.0).astype(jnp.float32)     # (Np2, B)
        feat = jnp.dot(mp2, avg, preferred_element_type=jnp.float32)  # (32, B)

        # ---- BN2 (eval, folded) + MLP head (batch on lanes) + exact sigmoid
        feat = feat * s2_ref[...] + t2_ref[...]
        h = jnp.maximum(
            jnp.dot(f1w_ref[...], feat, preferred_element_type=jnp.float32)
            + f1b_ref[...], 0.0)                                 # (16, B)
        h = jnp.maximum(
            jnp.dot(f2w_ref[...], h, preferred_element_type=jnp.float32)
            + f2b_ref[...], 0.0)                                 # (8, B)
        z = (jnp.dot(f3w_ref[...], h, preferred_element_type=jnp.float32)
             + f3b_ref[...])                                     # (1, B)
        o_ref[0] = 1.0 / (1.0 + jnp.exp(-z))

    return kernel


# -----------------------------------------------------------------------------
# Forward pass (single pallas_call); params stay in PyTorch layouts.
# -----------------------------------------------------------------------------
@functools.partial(jax.jit, static_argnames=("batch_per_step",))
def net_forward(imgs, params, batch_per_step=None):
    n, cin, H, W = imgs.shape
    HW = H * W
    if batch_per_step is None:
        # keep >= 2 parallel grid steps so both TensorCores on v7x get work
        batch_per_step = n // 2 if (n >= 2 and n % 2 == 0) else n
    assert n % batch_per_step == 0
    B = batch_per_step
    steps = n // B
    cin_pad = _round_up(cin, 8)

    geo = _geometry(H, W, B)

    # ---- repack inputs / params (cheap XLA-side layout plumbing) ------------
    # images: channels on sublanes, batch*spatial flattened on lanes
    x = imgs.astype(jnp.float32).reshape(n, cin, HW)
    x = jnp.transpose(x, (1, 0, 2)).reshape(cin, n * HW)
    x = jnp.pad(x, ((0, cin_pad - cin), (0, 0)))                 # (cin_pad, n*HW)

    # conv weights -> merged-K slabs (K ordering = tap-major, channel-minor)
    w1 = jnp.transpose(params["conv1_w"], (0, 2, 3, 1))          # (16,3,3,cin)
    w1 = jnp.pad(w1, ((0, 0), (0, 0), (0, 0), (0, cin_pad - cin)))
    w1 = w1.reshape(16, 9 * cin_pad).astype(jnp.float32)
    w2 = jnp.transpose(params["conv2_w"], (0, 2, 3, 1)).reshape(32, 144)
    w2 = w2.astype(jnp.float32)

    def fold_bn(g, b, m, v, eps=1e-5):                           # eval-mode BN
        s = g / jnp.sqrt(v + eps)
        return s.reshape(-1, 1), (b - m * s).reshape(-1, 1)

    s1, t1 = fold_bn(params["bn1_gamma"], params["bn1_beta"],
                     params["bn1_mean"], params["bn1_var"])
    s2, t2 = fold_bn(params["bn2_gamma"], params["bn2_beta"],
                     params["bn2_mean"], params["bn2_var"])
    col = lambda v: v.reshape(-1, 1).astype(jnp.float32)

    operands = (x,
                w1, col(params["conv1_b"]), s1, t1,
                w2, col(params["conv2_b"]), s2, t2,
                params["fc1_w"].astype(jnp.float32), col(params["fc1_b"]),
                params["fc2_w"].astype(jnp.float32), col(params["fc2_b"]),
                params["fc3_w"].astype(jnp.float32), col(params["fc3_b"]))

    x_spec = pl.BlockSpec((cin_pad, B * HW), lambda i: (0, i))

    def full_spec(a):
        return pl.BlockSpec(a.shape, lambda i, _nd=a.ndim: (0,) * _nd)

    in_specs = [x_spec] + [full_spec(a) for a in operands[1:]]
    out_specs = pl.BlockSpec((1, 1, B), lambda i: (i, 0, 0))     # lane-dense row

    # advisory cost estimate from (8,128)-padded tiles actually DMA'd
    def padded_bytes(shape):
        s = list(shape)
        s[-1] = _round_up(s[-1], 128)
        if len(s) >= 2:
            s[-2] = _round_up(s[-2], 8)
        tot = 4
        for d in s:
            tot *= d
        return tot

    bytes_accessed = steps * (padded_bytes((cin_pad, B * HW))
                              + sum(padded_bytes(a.shape) for a in operands[1:])
                              + padded_bytes((1, B)))
    flops = 2 * steps * (16 * 9 * cin_pad * geo["Nc1"]
                         + 32 * 144 * geo["Nc2"]
                         + 32 * geo["Np2"] * B
                         + B * (16 * 32 + 8 * 16 + 8))

    out = pl.pallas_call(
        _make_kernel(geo, W, B),
        out_shape=jax.ShapeDtypeStruct((steps, 1, B), jnp.float32),
        grid=(steps,),
        in_specs=in_specs,
        out_specs=out_specs,
        compiler_params=pltpu.CompilerParams(
            dimension_semantics=("parallel",)),
        cost_estimate=pl.CostEstimate(flops=flops, transcendentals=n,
                                      bytes_accessed=bytes_accessed),
    )(*operands)
    return out.reshape(-1)                                       # .flatten()


# -----------------------------------------------------------------------------
# Pure-JAX reference (same eval-mode BN semantics) for a correctness check
# -----------------------------------------------------------------------------
def net_forward_reference(imgs, params):
    x = jnp.transpose(imgs, (0, 2, 3, 1)).astype(jnp.float32)    # NHWC

    def conv3x3(x, w, b):                                        # w: (co,ci,3,3)
        nb, hh, ww, _ = x.shape
        out = 0.0
        for dy in range(3):
            for dx in range(3):
                patch = x[:, dy:dy + hh - 2, dx:dx + ww - 2, :]
                out = out + jnp.einsum('nhwc,oc->nhwo', patch, w[:, :, dy, dx])
        return out + b.reshape(1, 1, 1, -1)

    def maxpool2(x):
        nb, hh, ww, c = x.shape
        hp, wp = hh // 2, ww // 2
        return x[:, :2 * hp, :2 * wp, :].reshape(nb, hp, 2, wp, 2, c).max(axis=(2, 4))

    def bn(x, g, b, m, v, eps=1e-5):
        s = g / jnp.sqrt(v + eps)
        return x * s + (b - m * s)

    y = jax.nn.relu(conv3x3(x, params["conv1_w"], params["conv1_b"]))
    y = bn(maxpool2(y), params["bn1_gamma"], params["bn1_beta"],
           params["bn1_mean"], params["bn1_var"])
    y = jax.nn.relu(conv3x3(y, params["conv2_w"], params["conv2_b"]))
    p = maxpool2(y).mean(axis=(1, 2))                            # AdaptiveAvgPool2d(1)
    p = bn(p, params["bn2_gamma"], params["bn2_beta"],
           params["bn2_mean"], params["bn2_var"])
    h = jax.nn.relu(p @ params["fc1_w"].T + params["fc1_b"])
    h = jax.nn.relu(h @ params["fc2_w"].T + params["fc2_b"])
    z = h @ params["fc3_w"].T + params["fc3_b"]
    return jax.nn.sigmoid(z).reshape(-1)


# -----------------------------------------------------------------------------
# Parameters (deterministic synthetic init; PyTorch layouts / semantics)
# -----------------------------------------------------------------------------
def init_params(cin, key):
    ks = jax.random.split(key, 18)
    rnd = lambda k, s, sc: sc * jax.random.normal(k, s, jnp.float32)
    return {
        "conv1_w": rnd(ks[0], (16, cin, 3, 3), 0.1),
        "conv1_b": rnd(ks[1], (16,), 0.1),
        "bn1_gamma": 1.0 + rnd(ks[2], (16,), 0.1),
        "bn1_beta": rnd(ks[3], (16,), 0.1),
        "bn1_mean": rnd(ks[4], (16,), 0.1),
        "bn1_var": 1.0 + jnp.abs(rnd(ks[5], (16,), 0.1)),
        "conv2_w": rnd(ks[6], (32, 16, 3, 3), 0.1),
        "conv2_b": rnd(ks[7], (32,), 0.1),
        "bn2_gamma": 1.0 + rnd(ks[8], (32,), 0.1),
        "bn2_beta": rnd(ks[9], (32,), 0.1),
        "bn2_mean": rnd(ks[10], (32,), 0.1),
        "bn2_var": 1.0 + jnp.abs(rnd(ks[11], (32,), 0.1)),
        "fc1_w": rnd(ks[12], (16, 32), 0.2),   # torch Linear layout (out, in)
        "fc1_b": rnd(ks[13], (16,), 0.1),
        "fc2_w": rnd(ks[14], (8, 16), 0.2),
        "fc2_b": rnd(ks[15], (8,), 0.1),
        "fc3_w": rnd(ks[16], (1, 8), 0.2),
        "fc3_b": rnd(ks[17], (1,), 0.1),
    }


# -----------------------------------------------------------------------------
if __name__ == "__main__":
    key = jax.random.PRNGKey(0)
    k_img, k_par = jax.random.split(key)

    N, CIN, H, W = 8, 3, 16, 16                 # img_dim = (3, 16, 16)
    imgs = jax.random.normal(k_img, (N, CIN, H, W), jnp.float32)   # NCHW
    params = init_params(CIN, k_par)

    out = jax.block_until_ready(net_forward(imgs, params))        # grid=(2,), B=4/step

    assert out.shape == (N,), out.shape
    assert bool(jnp.all(jnp.isfinite(out)))
    assert bool(jnp.all((out >= 0.0) & (out <= 1.0)))              # sigmoid range

    ref = jax.block_until_ready(net_forward_reference(imgs, params))
    assert bool(jnp.allclose(out, ref, atol=5e-3, rtol=0.0)), (out, ref)

    print("KERNEL_OK")
</pallas_src>

<mosaic_0001>
module attributes {stable_mosaic.version = 11 : i64} {
  func.func @kernel(%arg0: i32, %arg1: memref<8x1024xf32, #tpu.memory_space<vmem>>, %arg2: memref<16x72xf32, #tpu.memory_space<vmem>>, %arg3: memref<16x1xf32, #tpu.memory_space<vmem>>, %arg4: memref<16x1xf32, #tpu.memory_space<vmem>>, %arg5: memref<16x1xf32, #tpu.memory_space<vmem>>, %arg6: memref<32x144xf32, #tpu.memory_space<vmem>>, %arg7: memref<32x1xf32, #tpu.memory_space<vmem>>, %arg8: memref<32x1xf32, #tpu.memory_space<vmem>>, %arg9: memref<32x1xf32, #tpu.memory_space<vmem>>, %arg10: memref<16x32xf32, #tpu.memory_space<vmem>>, %arg11: memref<16x1xf32, #tpu.memory_space<vmem>>, %arg12: memref<8x16xf32, #tpu.memory_space<vmem>>, %arg13: memref<8x1xf32, #tpu.memory_space<vmem>>, %arg14: memref<1x8xf32, #tpu.memory_space<vmem>>, %arg15: memref<1x1xf32, #tpu.memory_space<vmem>>, %arg16: memref<1x1x4xf32, #tpu.memory_space<vmem>>) attributes {dimension_semantics = [#tpu.dimension_semantics<parallel>], iteration_bounds = array<i64: 2>, scalar_prefetch = 0 : i64, scratch_operands = 0 : i64, tpu.core_type = #tpu.core_type<tc>, window_params = [{transform_indices = @transform_0, window_bounds = array<i64: 8, 1024>}, {pipeline_mode = #tpu.pipeline_mode<synchronous>, transform_indices = @transform_1, window_bounds = array<i64: 16, 72>}, {pipeline_mode = #tpu.pipeline_mode<synchronous>, transform_indices = @transform_2, window_bounds = array<i64: 16, 1>}, {pipeline_mode = #tpu.pipeline_mode<synchronous>, transform_indices = @transform_3, window_bounds = array<i64: 16, 1>}, {pipeline_mode = #tpu.pipeline_mode<synchronous>, transform_indices = @transform_4, window_bounds = array<i64: 16, 1>}, {pipeline_mode = #tpu.pipeline_mode<synchronous>, transform_indices = @transform_5, window_bounds = array<i64: 32, 144>}, {pipeline_mode = #tpu.pipeline_mode<synchronous>, transform_indices = @transform_6, window_bounds = array<i64: 32, 1>}, {pipeline_mode = #tpu.pipeline_mode<synchronous>, transform_indices = @transform_7, window_bounds = array<i64: 32, 1>}, {pipeline_mode = #tpu.pipeline_mode<synchronous>, transform_indices = @transform_8, window_bounds = array<i64: 32, 1>}, {pipeline_mode = #tpu.pipeline_mode<synchronous>, transform_indices = @transform_9, window_bounds = array<i64: 16, 32>}, {pipeline_mode = #tpu.pipeline_mode<synchronous>, transform_indices = @transform_10, window_bounds = array<i64: 16, 1>}, {pipeline_mode = #tpu.pipeline_mode<synchronous>, transform_indices = @transform_11, window_bounds = array<i64: 8, 16>}, {pipeline_mode = #tpu.pipeline_mode<synchronous>, transform_indices = @transform_12, window_bounds = array<i64: 8, 1>}, {pipeline_mode = #tpu.pipeline_mode<synchronous>, transform_indices = @transform_13, window_bounds = array<i64: 1, 8>}, {pipeline_mode = #tpu.pipeline_mode<synchronous>, transform_indices = @transform_14, window_bounds = array<i64: 1, 1>}, {transform_indices = @transform_15, window_bounds = array<i64: 1, 1, 4>}]} {
    %c0 = arith.constant 0 : index
    %c0_0 = arith.constant 0 : index
    %0 = vector.load %arg1[%c0, %c0_0] : memref<8x1024xf32, #tpu.memory_space<vmem>>, vector<8x1024xf32>
    %1 = vector.extract_strided_slice %0 {offsets = [0, 0], sizes = [8, 990], strides = [1, 1]} : vector<8x1024xf32> to vector<8x990xf32>
    %2 = vector.extract_strided_slice %0 {offsets = [0, 1], sizes = [8, 990], strides = [1, 1]} : vector<8x1024xf32> to vector<8x990xf32>
    %3 = vector.extract_strided_slice %0 {offsets = [0, 2], sizes = [8, 990], strides = [1, 1]} : vector<8x1024xf32> to vector<8x990xf32>
    %4 = vector.extract_strided_slice %0 {offsets = [0, 16], sizes = [8, 990], strides = [1, 1]} : vector<8x1024xf32> to vector<8x990xf32>
    %5 = vector.extract_strided_slice %0 {offsets = [0, 17], sizes = [8, 990], strides = [1, 1]} : vector<8x1024xf32> to vector<8x990xf32>
    %6 = vector.extract_strided_slice %0 {offsets = [0, 18], sizes = [8, 990], strides = [1, 1]} : vector<8x1024xf32> to vector<8x990xf32>
    %7 = vector.extract_strided_slice %0 {offsets = [0, 32], sizes = [8, 990], strides = [1, 1]} : vector<8x1024xf32> to vector<8x990xf32>
    %8 = vector.extract_strided_slice %0 {offsets = [0, 33], sizes = [8, 990], strides = [1, 1]} : vector<8x1024xf32> to vector<8x990xf32>
    %9 = vector.extract_strided_slice %0 {offsets = [0, 34], sizes = [8, 990], strides = [1, 1]} : vector<8x1024xf32> to vector<8x990xf32>
    %10 = tpu.concatenate %1, %2, %3, %4, %5, %6, %7, %8, %9 in 0 : vector<8x990xf32>, vector<8x990xf32>, vector<8x990xf32>, vector<8x990xf32>, vector<8x990xf32>, vector<8x990xf32>, vector<8x990xf32>, vector<8x990xf32>, vector<8x990xf32> -> vector<72x990xf32>
    %c0_1 = arith.constant 0 : index
    %c0_2 = arith.constant 0 : index
    %11 = vector.load %arg2[%c0_1, %c0_2] : memref<16x72xf32, #tpu.memory_space<vmem>>, vector<16x72xf32>
    %cst = arith.constant dense<0.000000e+00> : vector<16x990xf32>
    %12 = tpu.matmul %11, %10, %cst {dimension_numbers = #tpu.dot_dimension_numbers<[1], [0], [0], [1], [0, 0, 1, 1], [], []>} : vector<16x72xf32>, vector<72x990xf32>, vector<16x990xf32> -> vector<16x990xf32>
    %c0_3 = arith.constant 0 : index
    %c0_4 = arith.constant 0 : index
    %13 = vector.load %arg3[%c0_3, %c0_4] : memref<16x1xf32, #tpu.memory_space<vmem>>, vector<16x1xf32>
    %14 = vector.broadcast %13 : vector<16x1xf32> to vector<16x990xf32>
    %15 = arith.addf %12, %14 : vector<16x990xf32>
    %cst_5 = arith.constant 0.000000e+00 : f32
    %16 = vector.broadcast %cst_5 : f32 to vector<16x990xf32>
    %17 = arith.maximumf %15, %16 : vector<16x990xf32>
    %18 = vector.extract_strided_slice %17 {offsets = [0, 0], sizes = [16, 989], strides = [1, 1]} : vector<16x990xf32> to vector<16x989xf32>
    %19 = vector.extract_strided_slice %17 {offsets = [0, 1], sizes = [16, 989], strides = [1, 1]} : vector<16x990xf32> to vector<16x989xf32>
    %20 = arith.maximumf %18, %19 : vector<16x989xf32>
    %21 = vector.extract_strided_slice %20 {offsets = [0, 0], sizes = [16, 973], strides = [1, 1]} : vector<16x989xf32> to vector<16x973xf32>
    %22 = vector.extract_strided_slice %20 {offsets = [0, 16], sizes = [16, 973], strides = [1, 1]} : vector<16x989xf32> to vector<16x973xf32>
    %23 = arith.maximumf %21, %22 : vector<16x973xf32>
    %c0_6 = arith.constant 0 : index
    %c0_7 = arith.constant 0 : index
    %24 = vector.load %arg4[%c0_6, %c0_7] : memref<16x1xf32, #tpu.memory_space<vmem>>, vector<16x1xf32>
    %25 = vector.broadcast %24 : vector<16x1xf32> to vector<16x973xf32>
    %26 = arith.mulf %23, %25 : vector<16x973xf32>
    %c0_8 = arith.constant 0 : index
    %c0_9 = arith.constant 0 : index
    %27 = vector.load %arg5[%c0_8, %c0_9] : memref<16x1xf32, #tpu.memory_space<vmem>>, vector<16x1xf32>
    %28 = vector.broadcast %27 : vector<16x1xf32> to vector<16x973xf32>
    %29 = arith.addf %26, %28 : vector<16x973xf32>
    %30 = vector.extract_strided_slice %29 {offsets = [0, 0], sizes = [16, 905], strides = [1, 1]} : vector<16x973xf32> to vector<16x905xf32>
    %31 = vector.extract_strided_slice %29 {offsets = [0, 2], sizes = [16, 905], strides = [1, 1]} : vector<16x973xf32> to vector<16x905xf32>
    %32 = vector.extract_strided_slice %29 {offsets = [0, 4], sizes = [16, 905], strides = [1, 1]} : vector<16x973xf32> to vector<16x905xf32>
    %33 = vector.extract_strided_slice %29 {offsets = [0, 32], sizes = [16, 905], strides = [1, 1]} : vector<16x973xf32> to vector<16x905xf32>
    %34 = vector.extract_strided_slice %29 {offsets = [0, 34], sizes = [16, 905], strides = [1, 1]} : vector<16x973xf32> to vector<16x905xf32>
    %35 = vector.extract_strided_slice %29 {offsets = [0, 36], sizes = [16, 905], strides = [1, 1]} : vector<16x973xf32> to vector<16x905xf32>
    %36 = vector.extract_strided_slice %29 {offsets = [0, 64], sizes = [16, 905], strides = [1, 1]} : vector<16x973xf32> to vector<16x905xf32>
    %37 = vector.extract_strided_slice %29 {offsets = [0, 66], sizes = [16, 905], strides = [1, 1]} : vector<16x973xf32> to vector<16x905xf32>
    %38 = vector.extract_strided_slice %29 {offsets = [0, 68], sizes = [16, 905], strides = [1, 1]} : vector<16x973xf32> to vector<16x905xf32>
    %39 = tpu.concatenate %30, %31, %32, %33, %34, %35, %36, %37, %38 in 0 : vector<16x905xf32>, vector<16x905xf32>, vector<16x905xf32>, vector<16x905xf32>, vector<16x905xf32>, vector<16x905xf32>, vector<16x905xf32>, vector<16x905xf32>, vector<16x905xf32> -> vector<144x905xf32>
    %c0_10 = arith.constant 0 : index
    %c0_11 = arith.constant 0 : index
    %40 = vector.load %arg6[%c0_10, %c0_11] : memref<32x144xf32, #tpu.memory_space<vmem>>, vector<32x144xf32>
    %cst_12 = arith.constant dense<0.000000e+00> : vector<32x905xf32>
    %41 = tpu.matmul %40, %39, %cst_12 {dimension_numbers = #tpu.dot_dimension_numbers<[1], [0], [0], [1], [0, 0, 1, 1], [], []>} : vector<32x144xf32>, vector<144x905xf32>, vector<32x905xf32> -> vector<32x905xf32>
    %c0_13 = arith.constant 0 : index
    %c0_14 = arith.constant 0 : index
    %42 = vector.load %arg7[%c0_13, %c0_14] : memref<32x1xf32, #tpu.memory_space<vmem>>, vector<32x1xf32>
    %43 = vector.broadcast %42 : vector<32x1xf32> to vector<32x905xf32>
    %44 = arith.addf %41, %43 : vector<32x905xf32>
    %cst_15 = arith.constant 0.000000e+00 : f32
    %45 = vector.broadcast %cst_15 : f32 to vector<32x905xf32>
    %46 = arith.maximumf %44, %45 : vector<32x905xf32>
    %47 = vector.extract_strided_slice %46 {offsets = [0, 0], sizes = [32, 903], strides = [1, 1]} : vector<32x905xf32> to vector<32x903xf32>
    %48 = vector.extract_strided_slice %46 {offsets = [0, 2], sizes = [32, 903], strides = [1, 1]} : vector<32x905xf32> to vector<32x903xf32>
    %49 = arith.maximumf %47, %48 : vector<32x903xf32>
    %50 = vector.extract_strided_slice %49 {offsets = [0, 0], sizes = [32, 871], strides = [1, 1]} : vector<32x903xf32> to vector<32x871xf32>
    %51 = vector.extract_strided_slice %49 {offsets = [0, 32], sizes = [32, 871], strides = [1, 1]} : vector<32x903xf32> to vector<32x871xf32>
    %52 = arith.maximumf %50, %51 : vector<32x871xf32>
    %53 = tpu.iota {dimensions = array<i32: 0>} : vector<871x4xi32>
    %54 = tpu.iota {dimensions = array<i32: 1>} : vector<871x4xi32>
    %c256_i32 = arith.constant 256 : i32
    %55 = vector.broadcast %c256_i32 : i32 to vector<871x4xi32>
    %56 = arith.muli %54, %55 : vector<871x4xi32>
    %57 = arith.subi %53, %56 : vector<871x4xi32>
    %c0_i32 = arith.constant 0 : i32
    %58 = vector.broadcast %c0_i32 : i32 to vector<871x4xi32>
    %59 = arith.cmpi eq, %57, %58 : vector<871x4xi32>
    %c4_i32 = arith.constant 4 : i32
    %60 = vector.broadcast %c4_i32 : i32 to vector<871x4xi32>
    %61 = arith.cmpi eq, %57, %60 : vector<871x4xi32>
    %c64_i32 = arith.constant 64 : i32
    %62 = vector.broadcast %c64_i32 : i32 to vector<871x4xi32>
    %63 = arith.cmpi eq, %57, %62 : vector<871x4xi32>
    %c68_i32 = arith.constant 68 : i32
    %64 = vector.broadcast %c68_i32 : i32 to vector<871x4xi32>
    %65 = arith.cmpi eq, %57, %64 : vector<871x4xi32>
    %66 = arith.ori %59, %61 : vector<871x4xi1>
    %67 = arith.ori %66, %63 : vector<871x4xi1>
    %68 = arith.ori %67, %65 : vector<871x4xi1>
    %cst_16 = arith.constant 2.500000e-01 : f32
    %cst_17 = arith.constant 0.000000e+00 : f32
    %69 = vector.broadcast %cst_16 : f32 to vector<871x4xf32>
    %70 = vector.broadcast %cst_17 : f32 to vector<871x4xf32>
    %71 = arith.select %68, %69, %70 : vector<871x4xi1>, vector<871x4xf32>
    %cst_18 = arith.constant dense<0.000000e+00> : vector<32x4xf32>
    %72 = tpu.matmul %52, %71, %cst_18 {dimension_numbers = #tpu.dot_dimension_numbers<[1], [0], [0], [1], [0, 0, 1, 1], [], []>} : vector<32x871xf32>, vector<871x4xf32>, vector<32x4xf32> -> vector<32x4xf32>
    %c0_19 = arith.constant 0 : index
    %c0_20 = arith.constant 0 : index
    %73 = vector.load %arg8[%c0_19, %c0_20] : memref<32x1xf32, #tpu.memory_space<vmem>>, vector<32x1xf32>
    %74 = vector.broadcast %73 : vector<32x1xf32> to vector<32x4xf32>
    %75 = arith.mulf %72, %74 : vector<32x4xf32>
    %c0_21 = arith.constant 0 : index
    %c0_22 = arith.constant 0 : index
    %76 = vector.load %arg9[%c0_21, %c0_22] : memref<32x1xf32, #tpu.memory_space<vmem>>, vector<32x1xf32>
    %77 = vector.broadcast %76 : vector<32x1xf32> to vector<32x4xf32>
    %78 = arith.addf %75, %77 : vector<32x4xf32>
    %c0_23 = arith.constant 0 : index
    %c0_24 = arith.constant 0 : index
    %79 = vector.load %arg10[%c0_23, %c0_24] : memref<16x32xf32, #tpu.memory_space<vmem>>, vector<16x32xf32>
    %cst_25 = arith.constant dense<0.000000e+00> : vector<16x4xf32>
    %80 = tpu.matmul %79, %78, %cst_25 {dimension_numbers = #tpu.dot_dimension_numbers<[1], [0], [0], [1], [0, 0, 1, 1], [], []>} : vector<16x32xf32>, vector<32x4xf32>, vector<16x4xf32> -> vector<16x4xf32>
    %c0_26 = arith.constant 0 : index
    %c0_27 = arith.constant 0 : index
    %81 = vector.load %arg11[%c0_26, %c0_27] : memref<16x1xf32, #tpu.memory_space<vmem>>, vector<16x1xf32>
    %82 = vector.broadcast %81 : vector<16x1xf32> to vector<16x4xf32>
    %83 = arith.addf %80, %82 : vector<16x4xf32>
    %cst_28 = arith.constant 0.000000e+00 : f32
    %84 = vector.broadcast %cst_28 : f32 to vector<16x4xf32>
    %85 = arith.maximumf %83, %84 : vector<16x4xf32>
    %c0_29 = arith.constant 0 : index
    %c0_30 = arith.constant 0 : index
    %86 = vector.load %arg12[%c0_29, %c0_30] : memref<8x16xf32, #tpu.memory_space<vmem>>, vector<8x16xf32>
    %cst_31 = arith.constant dense<0.000000e+00> : vector<8x4xf32>
    %87 = tpu.matmul %86, %85, %cst_31 {dimension_numbers = #tpu.dot_dimension_numbers<[1], [0], [0], [1], [0, 0, 1, 1], [], []>} : vector<8x16xf32>, vector<16x4xf32>, vector<8x4xf32> -> vector<8x4xf32>
    %c0_32 = arith.constant 0 : index
    %c0_33 = arith.constant 0 : index
    %88 = vector.load %arg13[%c0_32, %c0_33] : memref<8x1xf32, #tpu.memory_space<vmem>>, vector<8x1xf32>
    %89 = vector.broadcast %88 : vector<8x1xf32> to vector<8x4xf32>
    %90 = arith.addf %87, %89 : vector<8x4xf32>
    %cst_34 = arith.constant 0.000000e+00 : f32
    %91 = vector.broadcast %cst_34 : f32 to vector<8x4xf32>
    %92 = arith.maximumf %90, %91 : vector<8x4xf32>
    %c0_35 = arith.constant 0 : index
    %c0_36 = arith.constant 0 : index
    %93 = vector.load %arg14[%c0_35, %c0_36] : memref<1x8xf32, #tpu.memory_space<vmem>>, vector<1x8xf32>
    %cst_37 = arith.constant dense<0.000000e+00> : vector<1x4xf32>
    %94 = tpu.matmul %93, %92, %cst_37 {dimension_numbers = #tpu.dot_dimension_numbers<[1], [0], [0], [1], [0, 0, 1, 1], [], []>} : vector<1x8xf32>, vector<8x4xf32>, vector<1x4xf32> -> vector<1x4xf32>
    %c0_38 = arith.constant 0 : index
    %c0_39 = arith.constant 0 : index
    %95 = vector.load %arg15[%c0_38, %c0_39] : memref<1x1xf32, #tpu.memory_space<vmem>>, vector<1x1xf32>
    %96 = vector.broadcast %95 : vector<1x1xf32> to vector<1x4xf32>
    %97 = arith.addf %94, %96 : vector<1x4xf32>
    %cst_40 = arith.constant 0.000000e+00 : f32
    %98 = vector.broadcast %cst_40 : f32 to vector<1x4xf32>
    %99 = arith.subf %98, %97 : vector<1x4xf32>
    %100 = math.exp %99 : vector<1x4xf32>
    %cst_41 = arith.constant 1.000000e+00 : f32
    %101 = vector.broadcast %cst_41 : f32 to vector<1x4xf32>
    %102 = arith.addf %101, %100 : vector<1x4xf32>
    %cst_42 = arith.constant 1.000000e+00 : f32
    %103 = vector.broadcast %cst_42 : f32 to vector<1x4xf32>
    %104 = arith.divf %103, %102 : vector<1x4xf32>
    %c0_43 = arith.constant 0 : index
    %c0_44 = arith.constant 0 : index
    %c0_45 = arith.constant 0 : index
    %105 = vector.load %arg16[%c0_43, %c0_44, %c0_45] : memref<1x1x4xf32, #tpu.memory_space<vmem>>, vector<1x1x4xf32>
    %106 = vector.shape_cast %105 : vector<1x1x4xf32> to vector<1x4xf32>
    %107 = vector.shape_cast %104 : vector<1x4xf32> to vector<1x1x4xf32>
    tpu.vector_store %arg16[%c0_43, %c0_44, %c0_45], %107 {strides = array<i32>} : memref<1x1x4xf32, #tpu.memory_space<vmem>>, vector<1x1x4xf32>,
    return
  }
  func.func @transform_0(%arg0: i32) -> (i32, i32) {
    %c0_i32 = arith.constant 0 : i32
    %c0_i32_0 = arith.constant 0 : i32
    return %c0_i32, %arg0 : i32, i32
  }
  func.func @transform_1(%arg0: i32) -> (i32, i32) {
    %c0_i32 = arith.constant 0 : i32
    %c0_i32_0 = arith.constant 0 : i32
    %c0_i32_1 = arith.constant 0 : i32
    return %c0_i32, %c0_i32_0 : i32, i32
  }
  func.func @transform_2(%arg0: i32) -> (i32, i32) {
    %c0_i32 = arith.constant 0 : i32
    %c0_i32_0 = arith.constant 0 : i32
    %c0_i32_1 = arith.constant 0 : i32
    return %c0_i32, %c0_i32_0 : i32, i32
  }
  func.func @transform_3(%arg0: i32) -> (i32, i32) {
    %c0_i32 = arith.constant 0 : i32
    %c0_i32_0 = arith.constant 0 : i32
    %c0_i32_1 = arith.constant 0 : i32
    return %c0_i32, %c0_i32_0 : i32, i32
  }
  func.func @transform_4(%arg0: i32) -> (i32, i32) {
    %c0_i32 = arith.constant 0 : i32
    %c0_i32_0 = arith.constant 0 : i32
    %c0_i32_1 = arith.constant 0 : i32
    return %c0_i32, %c0_i32_0 : i32, i32
  }
  func.func @transform_5(%arg0: i32) -> (i32, i32) {
    %c0_i32 = arith.constant 0 : i32
    %c0_i32_0 = arith.constant 0 : i32
    %c0_i32_1 = arith.constant 0 : i32
    return %c0_i32, %c0_i32_0 : i32, i32
  }
  func.func @transform_6(%arg0: i32) -> (i32, i32) {
    %c0_i32 = arith.constant 0 : i32
    %c0_i32_0 = arith.constant 0 : i32
    %c0_i32_1 = arith.constant 0 : i32
    return %c0_i32, %c0_i32_0 : i32, i32
  }
  func.func @transform_7(%arg0: i32) -> (i32, i32) {
    %c0_i32 = arith.constant 0 : i32
    %c0_i32_0 = arith.constant 0 : i32
    %c0_i32_1 = arith.constant 0 : i32
    return %c0_i32, %c0_i32_0 : i32, i32
  }
  func.func @transform_8(%arg0: i32) -> (i32, i32) {
    %c0_i32 = arith.constant 0 : i32
    %c0_i32_0 = arith.constant 0 : i32
    %c0_i32_1 = arith.constant 0 : i32
    return %c0_i32, %c0_i32_0 : i32, i32
  }
  func.func @transform_9(%arg0: i32) -> (i32, i32) {
    %c0_i32 = arith.constant 0 : i32
    %c0_i32_0 = arith.constant 0 : i32
    %c0_i32_1 = arith.constant 0 : i32
    return %c0_i32, %c0_i32_0 : i32, i32
  }
  func.func @transform_10(%arg0: i32) -> (i32, i32) {
    %c0_i32 = arith.constant 0 : i32
    %c0_i32_0 = arith.constant 0 : i32
    %c0_i32_1 = arith.constant 0 : i32
    return %c0_i32, %c0_i32_0 : i32, i32
  }
  func.func @transform_11(%arg0: i32) -> (i32, i32) {
    %c0_i32 = arith.constant 0 : i32
    %c0_i32_0 = arith.constant 0 : i32
    %c0_i32_1 = arith.constant 0 : i32
    return %c0_i32, %c0_i32_0 : i32, i32
  }
  func.func @transform_12(%arg0: i32) -> (i32, i32) {
    %c0_i32 = arith.constant 0 : i32
    %c0_i32_0 = arith.constant 0 : i32
    %c0_i32_1 = arith.constant 0 : i32
    return %c0_i32, %c0_i32_0 : i32, i32
  }
  func.func @transform_13(%arg0: i32) -> (i32, i32) {
    %c0_i32 = arith.constant 0 : i32
    %c0_i32_0 = arith.constant 0 : i32
    %c0_i32_1 = arith.constant 0 : i32
    return %c0_i32, %c0_i32_0 : i32, i32
  }
  func.func @transform_14(%arg0: i32) -> (i32, i32) {
    %c0_i32 = arith.constant 0 : i32
    %c0_i32_0 = arith.constant 0 : i32
    %c0_i32_1 = arith.constant 0 : i32
    return %c0_i32, %c0_i32_0 : i32, i32
  }
  func.func @transform_15(%arg0: i32) -> (i32, i32, i32) {
    %c0_i32 = arith.constant 0 : i32
    %c0_i32_0 = arith.constant 0 : i32
    %c0_i32_1 = arith.constant 0 : i32
    return %arg0, %c0_i32, %c0_i32_0 : i32, i32, i32
  }
}

</mosaic_0001>

<llo_original>
// kernel: net_forward.1
$region0: #{net_forward.1}
  #allocation0 [shape = 'u32[]', space=smem, size = 0x4, offset = 0x4, fixed_abs, tag = 'smem constant byte address 0x4 - core index']
  #allocation1 [shape = 'u32[72,128]{1,0:T(1,128)}', space=vmem, size = 0x9000, scoped, tag = 'internal scratch']
  #allocation2 [shape = 'f32[1,1]{1,0:T(1,128)S(1)}', space=vmem, size = 0x200, scoped, tag = 'scoped memory for net_forward.1']
  %s0 = inlined_call_operand.vmem [shape: f32[8,2048], index: 0, kind: input, shape index: {}]
  %s1 = inlined_call_operand.vmem [shape: f32[16,72], index: 1, kind: input, shape index: {}]
  %s2 = inlined_call_operand.vmem [shape: f32[16,1], index: 2, kind: input, shape index: {}]
  %s3 = inlined_call_operand.vmem [shape: f32[16,1], index: 3, kind: input, shape index: {}]
  %s4 = inlined_call_operand.vmem [shape: f32[16,1], index: 4, kind: input, shape index: {}]
  %s5 = inlined_call_operand.vmem [shape: f32[32,144], index: 5, kind: input, shape index: {}]
  %s6 = inlined_call_operand.vmem [shape: f32[32,1], index: 6, kind: input, shape index: {}]
  %s7 = inlined_call_operand.vmem [shape: f32[32,1], index: 7, kind: input, shape index: {}]
  %s8 = inlined_call_operand.vmem [shape: f32[32,1], index: 8, kind: input, shape index: {}]
  %s9 = inlined_call_operand.vmem [shape: f32[16,32], index: 9, kind: input, shape index: {}]
  %s10 = inlined_call_operand.vmem [shape: f32[16,1], index: 10, kind: input, shape index: {}]
  %s11 = inlined_call_operand.vmem [shape: f32[8,16], index: 11, kind: input, shape index: {}]
  %s12 = inlined_call_operand.vmem [shape: f32[8,1], index: 12, kind: input, shape index: {}]
  %s13 = inlined_call_operand.vmem [shape: f32[1,8], index: 13, kind: input, shape index: {}]
  %s14 = inlined_call_operand.<no memory space> [shape: f32[1,1], index: 14, kind: input, shape index: {}]
  %s15 = inlined_call_operand.vmem [shape: f32[2,1,4], index: 15, kind: output, shape index: {}]
  %s16 = sld [smem:[#allocation0]]
  $region93: #{net_forward.1} parent=0
    _
  %s18 = ssub.s32 1, %s16
  %s19 = scalar_select 0, %s18, %s16
  %v20 = vstv %s14
  %21 = vst [vmem:[#allocation2] sm:$0x1] %v20
  loop: start=0, step=1, limit=4
  $region2: #{net_forward.1} parent=0 // loop_pre_header
    _
  $region3: #{net_forward.1} parent=0 // loop_header
    %s23 = sphi 0, %s27
    %p24 = scmp.ge.s32.totalorder %s23, 4
    %s33 = sphi 0, %s35
    %s36 = sphi 0, %s33
    %s37 = sphi 0, %s36
    %s53 = sphi 0, %s37
    %s57 = sphi 0, %s57
    %s59 = sphi 0, %s57
    %s60 = sphi 0, %s59
    %s74 = sphi 0, %s60
    %s78 = sphi 0, %s78
    %s80 = sphi 0, %s78
    %s81 = sphi 0, %s80
    %s95 = sphi 0, %s81
    %s99 = sphi 0, %s99
    %s101 = sphi 0, %s99
    %s102 = sphi 0, %s101
    %s116 = sphi 0, %s102
    %s120 = sphi 0, %s120
    %s122 = sphi 0, %s120
    %s123 = sphi 0, %s122
    %s137 = sphi 0, %s123
    %s141 = sphi 0, %s141
    %s143 = sphi 0, %s141
    %s144 = sphi 0, %s143
    %s158 = sphi 0, %s144
    %s162 = sphi 0, %s162
    %s164 = sphi 0, %s162
    %s165 = sphi 0, %s164
    %s179 = sphi 0, %s165
    %s183 = sphi 0, %s183
    %s185 = sphi 0, %s183
    %s186 = sphi 0, %s185
    %s200 = sphi 0, %s186
    %s204 = sphi 0, %s204
    %s206 = sphi 0, %s204
    %s207 = sphi 0, %s206
    %s221 = sphi 0, %s207
    %s225 = sphi 0, %s225
    %s227 = sphi 0, %s225
    %s228 = sphi 0, %s227
    %s242 = sphi 0, %s228
    %s246 = sphi 0, %s246
    %s248 = sphi 0, %s246
    %s249 = sphi 0, %s248
    %s263 = sphi 0, %s249
    %s267 = sphi 0, %s267
    %s269 = sphi 0, %s267
    %s270 = sphi 0, %s269
    %s284 = sphi 0, %s270
    %s288 = sphi 0, %s288
    %s290 = sphi 0, %s288
    %s291 = sphi 0, %s290
    %s305 = sphi 0, %s291
    %s309 = sphi 0, %s309
    %s311 = sphi 0, %s309
    %s312 = sphi 0, %s311
    %s326 = sphi 0, %s312
    %s330 = sphi 0, %s330
    %s332 = sphi 0, %s330
    %s333 = sphi 0, %s332
    %s347 = sphi 0, %s333
    %s353 = sphi 0, %s355
    %s356 = sphi 0, %s353
    %s357 = sphi 0, %s356
    %s373 = sphi 0, %s357
  $region4: #{net_forward.1} parent=0 // loop_header_branch
    %26 = sbr.rel (%p24) target = $region8
  $region5: #{net_forward.1} parent=0 // loop_body
    %s28 = ssub.s32 %s23, 1
    %s29 = ssub.s32 %s23, 2
    %s30 = sadd.s32 %s23, 1
    %s31 = ssub.s32 %s23, %s30
    %p32 = scmp.eq.s32.totalorder %s31, 0
    %s34 = sadd.s32 %s33, 1
    %s35 = scalar_select %p32, %s33, %s34
    %p38 = pneg %p32
    %p39 = scmp.eq.s32.totalorder %s23, 1
    %p40 = por %p38, %p39
    %p41 = scmp.ne.s32.totalorder %s33, %s36
    %p42 = scmp.eq.s32.totalorder %s23, 0
    %p43 = por %p41, %p42
    %p44 = scmp.ne.s32.totalorder %s33, %s36
    %p45 = scmp.eq.s32.totalorder %s28, 1
    %p46 = por %p44, %p45
    %p47 = scmp.ne.s32.totalorder %s36, %s37
    %p48 = scmp.eq.s32.totalorder %s28, 0
    %p49 = por %p47, %p48
    %p50 = scmp.ne.s32.totalorder %s36, %s37
    %p51 = scmp.eq.s32.totalorder %s29, 1
    %p52 = por %p50, %p51
    %p54 = scmp.ne.s32.totalorder %s37, %s53
    %p55 = scmp.eq.s32.totalorder %s29, 0
    %p56 = por %p54, %p55
    %s58 = sadd.s32 %s57, 1
    %p61 = scmp.eq.s32.totalorder %s23, 1
    %p62 = scmp.ne.s32.totalorder %s57, %s59
    %p63 = scmp.eq.s32.totalorder %s23, 0
    %p64 = por %p62, %p63
    %p65 = scmp.ne.s32.totalorder %s57, %s59
    %p66 = scmp.eq.s32.totalorder %s28, 1
    %p67 = por %p65, %p66
    %p68 = scmp.ne.s32.totalorder %s59, %s60
    %p69 = scmp.eq.s32.totalorder %s28, 0
    %p70 = por %p68, %p69
    %p71 = scmp.ne.s32.totalorder %s59, %s60
    %p72 = scmp.eq.s32.totalorder %s29, 1
    %p73 = por %p71, %p72
    %p75 = scmp.ne.s32.totalorder %s60, %s74
    %p76 = scmp.eq.s32.totalorder %s29, 0
    %p77 = por %p75, %p76
    %s79 = sadd.s32 %s78, 1
    %p82 = scmp.eq.s32.totalorder %s23, 1
    %p83 = scmp.ne.s32.totalorder %s78, %s80
    %p84 = scmp.eq.s32.totalorder %s23, 0
    %p85 = por %p83, %p84
    %p86 = scmp.ne.s32.totalorder %s78, %s80
    %p87 = scmp.eq.s32.totalorder %s28, 1
    %p88 = por %p86, %p87
    %p89 = scmp.ne.s32.totalorder %s80, %s81
    %p90 = scmp.eq.s32.totalorder %s28, 0
    %p91 = por %p89, %p90
    %p92 = scmp.ne.s32.totalorder %s80, %s81
    %p93 = scmp.eq.s32.totalorder %s29, 1
    %p94 = por %p92, %p93
    %p96 = scmp.ne.s32.totalorder %s81, %s95
    %p97 = scmp.eq.s32.totalorder %s29, 0
    %p98 = por %p96, %p97
    %s100 = sadd.s32 %s99, 1
    %p103 = scmp.eq.s32.totalorder %s23, 1
    %p104 = scmp.ne.s32.totalorder %s99, %s101
    %p105 = scmp.eq.s32.totalorder %s23, 0
    %p106 = por %p104, %p105
    %p107 = scmp.ne.s32.totalorder %s99, %s101
    %p108 = scmp.eq.s32.totalorder %s28, 1
    %p109 = por %p107, %p108
    %p110 = scmp.ne.s32.totalorder %s101, %s102
    %p111 = scmp.eq.s32.totalorder %s28, 0
    %p112 = por %p110, %p111
    %p113 = scmp.ne.s32.totalorder %s101, %s102
    %p114 = scmp.eq.s32.totalorder %s29, 1
    %p115 = por %p113, %p114
    %p117 = scmp.ne.s32.totalorder %s102, %s116
    %p118 = scmp.eq.s32.totalorder %s29, 0
    %p119 = por %p117, %p118
    %s121 = sadd.s32 %s120, 1
    %p124 = scmp.eq.s32.totalorder %s23, 1
    %p125 = scmp.ne.s32.totalorder %s120, %s122
    %p126 = scmp.eq.s32.totalorder %s23, 0
    %p127 = por %p125, %p126
    %p128 = scmp.ne.s32.totalorder %s120, %s122
    %p129 = scmp.eq.s32.totalorder %s28, 1
    %p130 = por %p128, %p129
    %p131 = scmp.ne.s32.totalorder %s122, %s123
    %p132 = scmp.eq.s32.totalorder %s28, 0
    %p133 = por %p131, %p132
    %p134 = scmp.ne.s32.totalorder %s122, %s123
    %p135 = scmp.eq.s32.totalorder %s29, 1
    %p136 = por %p134, %p135
    %p138 = scmp.ne.s32.totalorder %s123, %s137
    %p139 = scmp.eq.s32.totalorder %s29, 0
    %p140 = por %p138, %p139
    %s142 = sadd.s32 %s141, 1
    %p145 = scmp.eq.s32.totalorder %s23, 1
    %p146 = scmp.ne.s32.totalorder %s141, %s143
    %p147 = scmp.eq.s32.totalorder %s23, 0
    %p148 = por %p146, %p147
    %p149 = scmp.ne.s32.totalorder %s141, %s143
    %p150 = scmp.eq.s32.totalorder %s28, 1
    %p151 = por %p149, %p150
    %p152 = scmp.ne.s32.totalorder %s143, %s144
    %p153 = scmp.eq.s32.totalorder %s28, 0
    %p154 = por %p152, %p153
    %p155 = scmp.ne.s32.totalorder %s143, %s144
    %p156 = scmp.eq.s32.totalorder %s29, 1
    %p157 = por %p155, %p156
    %p159 = scmp.ne.s32.totalorder %s144, %s158
    %p160 = scmp.eq.s32.totalorder %s29, 0
    %p161 = por %p159, %p160
    %s163 = sadd.s32 %s162, 1
    %p166 = scmp.eq.s32.totalorder %s23, 1
    %p167 = scmp.ne.s32.totalorder %s162, %s164
    %p168 = scmp.eq.s32.totalorder %s23, 0
    %p169 = por %p167, %p168
    %p170 = scmp.ne.s32.totalorder %s162, %s164
    %p171 = scmp.eq.s32.totalorder %s28, 1
    %p172 = por %p170, %p171
    %p173 = scmp.ne.s32.totalorder %s164, %s165
    %p174 = scmp.eq.s32.totalorder %s28, 0
    %p175 = por %p173, %p174
    %p176 = scmp.ne.s32.totalorder %s164, %s165
    %p177 = scmp.eq.s32.totalorder %s29, 1
    %p178 = por %p176, %p177
    %p180 = scmp.ne.s32.totalorder %s165, %s179
    %p181 = scmp.eq.s32.totalorder %s29, 0
    %p182 = por %p180, %p181
    %s184 = sadd.s32 %s183, 1
    %p187 = scmp.eq.s32.totalorder %s23, 1
    %p188 = scmp.ne.s32.totalorder %s183, %s185
    %p189 = scmp.eq.s32.totalorder %s23, 0
    %p190 = por %p188, %p189
    %p191 = scmp.ne.s32.totalorder %s183, %s185
    %p192 = scmp.eq.s32.totalorder %s28, 1
    %p193 = por %p191, %p192
    %p194 = scmp.ne.s32.totalorder %s185, %s186
    %p195 = scmp.eq.s32.totalorder %s28, 0
    %p196 = por %p194, %p195
    %p197 = scmp.ne.s32.totalorder %s185, %s186
    %p198 = scmp.eq.s32.totalorder %s29, 1
    %p199 = por %p197, %p198
    %p201 = scmp.ne.s32.totalorder %s186, %s200
    %p202 = scmp.eq.s32.totalorder %s29, 0
    %p203 = por %p201, %p202
    %s205 = sadd.s32 %s204, 1
    %p208 = scmp.eq.s32.totalorder %s23, 1
    %p209 = scmp.ne.s32.totalorder %s204, %s206
    %p210 = scmp.eq.s32.totalorder %s23, 0
    %p211 = por %p209, %p210
    %p212 = scmp.ne.s32.totalorder %s204, %s206
    %p213 = scmp.eq.s32.totalorder %s28, 1
    %p214 = por %p212, %p213
    %p215 = scmp.ne.s32.totalorder %s206, %s207
    %p216 = scmp.eq.s32.totalorder %s28, 0
    %p217 = por %p215, %p216
    %p218 = scmp.ne.s32.totalorder %s206, %s207
    %p219 = scmp.eq.s32.totalorder %s29, 1
    %p220 = por %p218, %p219
    %p222 = scmp.ne.s32.totalorder %s207, %s221
    %p223 = scmp.eq.s32.totalorder %s29, 0
    %p224 = por %p222, %p223
    %s226 = sadd.s32 %s225, 1
    %p229 = scmp.eq.s32.totalorder %s23, 1
    %p230 = scmp.ne.s32.totalorder %s225, %s227
    %p231 = scmp.eq.s32.totalorder %s23, 0
    %p232 = por %p230, %p231
    %p233 = scmp.ne.s32.totalorder %s225, %s227
    %p234 = scmp.eq.s32.totalorder %s28, 1
    %p235 = por %p233, %p234
    %p236 = scmp.ne.s32.totalorder %s227, %s228
    %p237 = scmp.eq.s32.totalorder %s28, 0
    %p238 = por %p236, %p237
    %p239 = scmp.ne.s32.totalorder %s227, %s228
    %p240 = scmp.eq.s32.totalorder %s29, 1
    %p241 = por %p239, %p240
    %p243 = scmp.ne.s32.totalorder %s228, %s242
    %p244 = scmp.eq.s32.totalorder %s29, 0
    %p245 = por %p243, %p244
    %s247 = sadd.s32 %s246, 1
    %p250 = scmp.eq.s32.totalorder %s23, 1
    %p251 = scmp.ne.s32.totalorder %s246, %s248
    %p252 = scmp.eq.s32.totalorder %s23, 0
    %p253 = por %p251, %p252
    %p254 = scmp.ne.s32.totalorder %s246, %s248
    %p255 = scmp.eq.s32.totalorder %s28, 1
    %p256 = por %p254, %p255
    %p257 = scmp.ne.s32.totalorder %s248, %s249
    %p258 = scmp.eq.s32.totalorder %s28, 0
    %p259 = por %p257, %p258
    %p260 = scmp.ne.s32.totalorder %s248, %s249
    %p261 = scmp.eq.s32.totalorder %s29, 1
    %p262 = por %p260, %p261
    %p264 = scmp.ne.s32.totalorder %s249, %s263
    %p265 = scmp.eq.s32.totalorder %s29, 0
    %p266 = por %p264, %p265
    %s268 = sadd.s32 %s267, 1
    %p271 = scmp.eq.s32.totalorder %s23, 1
    %p272 = scmp.ne.s32.totalorder %s267, %s269
    %p273 = scmp.eq.s32.totalorder %s23, 0
    %p274 = por %p272, %p273
    %p275 = scmp.ne.s32.totalorder %s267, %s269
    %p276 = scmp.eq.s32.totalorder %s28, 1
    %p277 = por %p275, %p276
    %p278 = scmp.ne.s32.totalorder %s269, %s270
    %p279 = scmp.eq.s32.totalorder %s28, 0
    %p280 = por %p278, %p279
    %p281 = scmp.ne.s32.totalorder %s269, %s270
    %p282 = scmp.eq.s32.totalorder %s29, 1
    %p283 = por %p281, %p282
    %p285 = scmp.ne.s32.totalorder %s270, %s284
    %p286 = scmp.eq.s32.totalorder %s29, 0
    %p287 = por %p285, %p286
    %s289 = sadd.s32 %s288, 1
    %p292 = scmp.eq.s32.totalorder %s23, 1
    %p293 = scmp.ne.s32.totalorder %s288, %s290
    %p294 = scmp.eq.s32.totalorder %s23, 0
    %p295 = por %p293, %p294
    %p296 = scmp.ne.s32.totalorder %s288, %s290
    %p297 = scmp.eq.s32.totalorder %s28, 1
    %p298 = por %p296, %p297
    %p299 = scmp.ne.s32.totalorder %s290, %s291
    %p300 = scmp.eq.s32.totalorder %s28, 0
    %p301 = por %p299, %p300
    %p302 = scmp.ne.s32.totalorder %s290, %s291
    %p303 = scmp.eq.s32.totalorder %s29, 1
    %p304 = por %p302, %p303
    %p306 = scmp.ne.s32.totalorder %s291, %s305
    %p307 = scmp.eq.s32.totalorder %s29, 0
    %p308 = por %p306, %p307
    %s310 = sadd.s32 %s309, 1
    %p313 = scmp.eq.s32.totalorder %s23, 1
    %p314 = scmp.ne.s32.totalorder %s309, %s311
    %p315 = scmp.eq.s32.totalorder %s23, 0
    %p316 = por %p314, %p315
    %p317 = scmp.ne.s32.totalorder %s309, %s311
    %p318 = scmp.eq.s32.totalorder %s28, 1
    %p319 = por %p317, %p318
    %p320 = scmp.ne.s32.totalorder %s311, %s312
    %p321 = scmp.eq.s32.totalorder %s28, 0
    %p322 = por %p320, %p321
    %p323 = scmp.ne.s32.totalorder %s311, %s312
    %p324 = scmp.eq.s32.totalorder %s29, 1
    %p325 = por %p323, %p324
    %p327 = scmp.ne.s32.totalorder %s312, %s326
    %p328 = scmp.eq.s32.totalorder %s29, 0
    %p329 = por %p327, %p328
    %s331 = sadd.s32 %s330, 1
    %p334 = scmp.eq.s32.totalorder %s23, 1
    %p335 = scmp.ne.s32.totalorder %s330, %s332
    %p336 = scmp.eq.s32.totalorder %s23, 0
    %p337 = por %p335, %p336
    %p338 = scmp.ne.s32.totalorder %s330, %s332
    %p339 = scmp.eq.s32.totalorder %s28, 1
    %p340 = por %p338, %p339
    %p341 = scmp.ne.s32.totalorder %s332, %s333
    %p342 = scmp.eq.s32.totalorder %s28, 0
    %p343 = por %p341, %p342
    %p344 = scmp.ne.s32.totalorder %s332, %s333
    %p345 = scmp.eq.s32.totalorder %s29, 1
    %p346 = por %p344, %p345
    %p348 = scmp.ne.s32.totalorder %s333, %s347
    %p349 = scmp.eq.s32.totalorder %s29, 0
    %p350 = por %p348, %p349
    %s351 = ssub.s32 %s23, %s30
    %p352 = scmp.eq.s32.totalorder %s351, 0
    %s354 = sadd.s32 %s353, 1
    %s355 = scalar_select %p352, %s353, %s354
    %p358 = pneg %p352
    %p359 = scmp.eq.s32.totalorder %s23, 1
    %p360 = por %p358, %p359
    %p361 = scmp.ne.s32.totalorder %s353, %s356
    %p362 = scmp.eq.s32.totalorder %s23, 0
    %p363 = por %p361, %p362
    %p364 = scmp.ne.s32.totalorder %s353, %s356
    %p365 = scmp.eq.s32.totalorder %s28, 1
    %p366 = por %p364, %p365
    %p367 = scmp.ne.s32.totalorder %s356, %s357
    %p368 = scmp.eq.s32.totalorder %s28, 0
    %p369 = por %p367, %p368
    %p370 = scmp.ne.s32.totalorder %s356, %s357
    %p371 = scmp.eq.s32.totalorder %s29, 1
    %p372 = por %p370, %p371
    %p374 = scmp.ne.s32.totalorder %s357, %s373
    %p375 = scmp.eq.s32.totalorder %s29, 0
    %p376 = por %p374, %p375
    %p377 = scmp.le.s32.totalorder 1, %s23
    %p378 = scmp.lt.s32.totalorder %s23, 3
    %p379 = pnand %p377, %p378
    %p380 = pneg %p379
    // Predicated region
    $region9: #{net_forward.1} parent=5 // pred_check
      _
    $region10: #{net_forward.1} parent=5 // pred_check_branch
      %382 = sbr.rel (%p379) target = $region12
    $region11: #{net_forward.1} parent=5 // pred_region
      %s383 = ssub.s32 %s23, 1
      // Predicated region
      $region13: #{net_forward.1} parent=11 // pred_check
        %p384 = pneg %p70
      $region14: #{net_forward.1} parent=11 // pred_check_branch
        %386 = sbr.rel (%p384) target = $region16
      $region15: #{net_forward.1} parent=11 // pred_region
        _
      $region16: #{net_forward.1} parent=11 // pred_fallthru
        _
      // Predicated region
      $region17: #{net_forward.1} parent=11 // pred_check
        %p387 = pneg %p91
      $region18: #{net_forward.1} parent=11 // pred_check_branch
        %389 = sbr.rel (%p387) target = $region20
      $region19: #{net_forward.1} parent=11 // pred_region
        _
      $region20: #{net_forward.1} parent=11 // pred_fallthru
        _
      // Predicated region
      $region21: #{net_forward.1} parent=11 // pred_check
        %p390 = pneg %p112
      $region22: #{net_forward.1} parent=11 // pred_check_branch
        %392 = sbr.rel (%p390) target = $region24
      $region23: #{net_forward.1} parent=11 // pred_region
        _
      $region24: #{net_forward.1} parent=11 // pred_fallthru
        _
      // Predicated region
      $region25: #{net_forward.1} parent=11 // pred_check
        %p393 = pneg %p133
      $region26: #{net_forward.1} parent=11 // pred_check_branch
        %395 = sbr.rel (%p393) target = $region28
      $region27: #{net_forward.1} parent=11 // pred_region
        _
      $region28: #{net_forward.1} parent=11 // pred_fallthru
        _
      // Predicated region
      $region29: #{net_forward.1} parent=11 // pred_check
        %p396 = pneg %p154
      $region30: #{net_forward.1} parent=11 // pred_check_branch
        %398 = sbr.rel (%p396) target = $region32
      $region31: #{net_forward.1} parent=11 // pred_region
        _
      $region32: #{net_forward.1} parent=11 // pred_fallthru
        _
      // Predicated region
      $region33: #{net_forward.1} parent=11 // pred_check
        %p399 = pneg %p175
      $region34: #{net_forward.1} parent=11 // pred_check_branch
        %401 = sbr.rel (%p399) target = $region36
      $region35: #{net_forward.1} parent=11 // pred_region
        _
      $region36: #{net_forward.1} parent=11 // pred_fallthru
        _
      // Predicated region
      $region37: #{net_forward.1} parent=11 // pred_check
        %p402 = pneg %p196
      $region38: #{net_forward.1} parent=11 // pred_check_branch
        %404 = sbr.rel (%p402) target = $region40
      $region39: #{net_forward.1} parent=11 // pred_region
        _
      $region40: #{net_forward.1} parent=11 // pred_fallthru
        _
      // Predicated region
      $region41: #{net_forward.1} parent=11 // pred_check
        %p405 = pneg %p217
      $region42: #{net_forward.1} parent=11 // pred_check_branch
        %407 = sbr.rel (%p405) target = $region44
      $region43: #{net_forward.1} parent=11 // pred_region
        _
      $region44: #{net_forward.1} parent=11 // pred_fallthru
        _
      // Predicated region
      $region45: #{net_forward.1} parent=11 // pred_check
        %p408 = pneg %p238
      $region46: #{net_forward.1} parent=11 // pred_check_branch
        %410 = sbr.rel (%p408) target = $region48
      $region47: #{net_forward.1} parent=11 // pred_region
        _
      $region48: #{net_forward.1} parent=11 // pred_fallthru
        _
      // Predicated region
      $region49: #{net_forward.1} parent=11 // pred_check
        %p411 = pneg %p259
      $region50: #{net_forward.1} parent=11 // pred_check_branch
        %413 = sbr.rel (%p411) target = $region52
      $region51: #{net_forward.1} parent=11 // pred_region
        _
      $region52: #{net_forward.1} parent=11 // pred_fallthru
        _
      // Predicated region
      $region53: #{net_forward.1} parent=11 // pred_check
        %p414 = pneg %p280
      $region54: #{net_forward.1} parent=11 // pred_check_branch
        %416 = sbr.rel (%p414) target = $region56
      $region55: #{net_forward.1} parent=11 // pred_region
        _
      $region56: #{net_forward.1} parent=11 // pred_fallthru
        _
      // Predicated region
      $region57: #{net_forward.1} parent=11 // pred_check
        %p417 = pneg %p301
      $region58: #{net_forward.1} parent=11 // pred_check_branch
        %419 = sbr.rel (%p417) target = $region60
      $region59: #{net_forward.1} parent=11 // pred_region
        _
      $region60: #{net_forward.1} parent=11 // pred_fallthru
        _
      // Predicated region
      $region61: #{net_forward.1} parent=11 // pred_check
        %p420 = pneg %p322
      $region62: #{net_forward.1} parent=11 // pred_check_branch
        %422 = sbr.rel (%p420) target = $region64
      $region63: #{net_forward.1} parent=11 // pred_region
        _
      $region64: #{net_forward.1} parent=11 // pred_fallthru
        _
      // Predicated region
      $region65: #{net_forward.1} parent=11 // pred_check
        %p423 = pneg %p343
      $region66: #{net_forward.1} parent=11 // pred_check_branch
        %425 = sbr.rel (%p423) target = $region68
      $region67: #{net_forward.1} parent=11 // pred_region
        _
      $region68: #{net_forward.1} parent=11 // pred_fallthru
        _
    $region12: #{net_forward.1} parent=5 // pred_fallthru
      _
    %p426 = scmp.lt.s32.totalorder %s23, 2
    // Predicated region
    $region69: #{net_forward.1} parent=5 // pred_check
      %p427 = pneg %p426
    $region70: #{net_forward.1} parent=5 // pred_check_branch
      %429 = sbr.rel (%p427) target = $region72
    $region71: #{net_forward.1} parent=5 // pred_region
      // Predicated region
      $region73: #{net_forward.1} parent=71 // pred_check
        %p430 = pneg %p43
      $region74: #{net_forward.1} parent=71 // pred_check_branch
        %432 = sbr.rel (%p430) target = $region76
      $region75: #{net_forward.1} parent=71 // pred_region
        %s433 = smul.u32 8, %s23
        %p434 = scmp.lt.s32.totalorder %s433, 15
        %s435 = scalar_select %p434, %s433, 15
        %s436 = smul.addr %s435, 8
        %s437 = scalar_lea.vmem %s0, %s436
        %s438 = smul.u32 8, %s23
      $region76: #{net_forward.1} parent=71 // pred_fallthru
        _
    $region72: #{net_forward.1} parent=5 // pred_fallthru
      _
    %p439 = scmp.le.s32.totalorder 1, %s23
    %p440 = scmp.lt.s32.totalorder %s23, 3
    %p441 = pnand %p439, %p440
    %p442 = pneg %p441
    // Predicated region
    $region77: #{net_forward.1} parent=5 // pred_check
      _
    $region78: #{net_forward.1} parent=5 // pred_check_branch
      %444 = sbr.rel (%p441) target = $region80
    $region79: #{net_forward.1} parent=5 // pred_region
      %s445 = ssub.s32 %s23, 1
      %s446 = smul.u32 8, %s28
      %p447 = scmp.lt.s32.totalorder %s446, 15
      %s448 = scalar_select %p447, %s446, 15
      %s449 = smul.addr %s448, 8
      %s450 = scalar_lea.vmem %s0, %s449
      %p451 = pneg %p49
      %p452 = pneg %p46
      %p453 = pneg %p70
      %p454 = pneg %p67
      %p455 = pneg %p91
      %p456 = pneg %p88
      %p457 = pneg %p112
      %p458 = pneg %p109
      %p459 = pneg %p133
      %p460 = pneg %p130
      %p461 = pneg %p154
      %p462 = pneg %p151
      %p463 = pneg %p175
      %p464 = pneg %p172
      %p465 = pneg %p196
      %p466 = pneg %p193
      %p467 = pneg %p217
      %p468 = pneg %p214
      %p469 = pneg %p238
      %p470 = pneg %p235
      %p471 = pneg %p259
      %p472 = pneg %p256
      %p473 = pneg %p280
      %p474 = pneg %p277
      %p475 = pneg %p301
      %p476 = pneg %p298
      %p477 = pneg %p322
      %p478 = pneg %p319
      %p479 = pneg %p343
      %p480 = pneg %p340
      %p481 = pneg %p369
      %p482 = pneg %p366
      %p483 = scmp.lt.s32.totalorder %s28, 1
      %s484 = scalar_select %p483, %s28, 1
      %s485 = scalar_lea.vmem %s15, %s484
      %s486 = smul.u32 8, %s28
      %p487 = scmp.lt.s32.totalorder %s486, 15
      %s488 = scalar_select %p487, %s486, 15
      %s489 = smul.addr %s488, 8
      %s490 = scalar_lea.vmem %s0, %s489
      %s491 = smul.u32 8, %s28
      %p492 = scmp.lt.s32.totalorder %s28, 1
      %s493 = scalar_select %p492, %s28, 1
      %s494 = scalar_lea.vmem %s15, %s493
      %v495 = vld [vmem:[%s490] sm:$0xff]
      %v496 = vld [vmem:[%s490 + $0x8] sm:$0xff]
      %v497 = vld [vmem:[%s490 + $0x10] sm:$0xff]
      %v498 = vld [vmem:[%s490 + $0x18] sm:$0xff]
      %v499 = vld [vmem:[%s490 + $0x20] sm:$0xff]
      %v500 = vld [vmem:[%s490 + $0x28] sm:$0xff]
      %v501 = vld [vmem:[%s490 + $0x30] sm:$0xff]
      %v502 = vld [vmem:[%s490 + $0x38] sm:$0xff]
      %511 = vrot.lane.b32.xlu0 %v495, 127
      %v512 = vpop.permute.xlu0 %511
      %513 = vrot.lane.b32.xlu0 %v496, 127
      %v514 = vpop.permute.xlu0 %513
      %515 = vrot.lane.b32.xlu0 %v497, 127
      %v516 = vpop.permute.xlu0 %515
      %517 = vrot.lane.b32.xlu0 %v498, 127
      %v518 = vpop.permute.xlu0 %517
      %519 = vrot.lane.b32.xlu0 %v499, 127
      %v520 = vpop.permute.xlu0 %519
      %521 = vrot.lane.b32.xlu0 %v500, 127
      %v522 = vpop.permute.xlu0 %521
      %523 = vrot.lane.b32.xlu0 %v501, 127
      %v524 = vpop.permute.xlu0 %523
      %525 = vrot.lane.b32.xlu0 %v502, 127
      %v526 = vpop.permute.xlu0 %525
      %vm527 = vcmask 1039360
      %v528 = vsel %vm527, %v512, %v514
      %v529 = vsel %vm527, %v514, %v516
      %v530 = vsel %vm527, %v516, %v518
      %v531 = vsel %vm527, %v518, %v520
      %v532 = vsel %vm527, %v520, %v522
      %v533 = vsel %vm527, %v522, %v524
      %v534 = vsel %vm527, %v524, %v526
      %543 = vrot.lane.b32.xlu0 %v495, 126
      %v544 = vpop.permute.xlu0 %543
      %545 = vrot.lane.b32.xlu0 %v496, 126
      %v546 = vpop.permute.xlu0 %545
      %547 = vrot.lane.b32.xlu0 %v497, 126
      %v548 = vpop.permute.xlu0 %547
      %549 = vrot.lane.b32.xlu0 %v498, 126
      %v550 = vpop.permute.xlu0 %549
      %551 = vrot.lane.b32.xlu0 %v499, 126
      %v552 = vpop.permute.xlu0 %551
      %553 = vrot.lane.b32.xlu0 %v500, 126
      %v554 = vpop.permute.xlu0 %553
      %555 = vrot.lane.b32.xlu0 %v501, 126
      %v556 = vpop.permute.xlu0 %555
      %557 = vrot.lane.b32.xlu0 %v502, 126
      %v558 = vpop.permute.xlu0 %557
      %vm559 = vcmask 1031168
      %v560 = vsel %vm559, %v544, %v546
      %v561 = vsel %vm559, %v546, %v548
      %v562 = vsel %vm559, %v548, %v550
      %v563 = vsel %vm559, %v550, %v552
      %v564 = vsel %vm559, %v552, %v554
      %v565 = vsel %vm559, %v554, %v556
      %v566 = vsel %vm559, %v556, %v558
      %575 = vrot.lane.b32.xlu0 %v495, 112
      %v576 = vpop.permute.xlu0 %575
      %577 = vrot.lane.b32.xlu0 %v496, 112
      %v578 = vpop.permute.xlu0 %577
      %579 = vrot.lane.b32.xlu0 %v497, 112
      %v580 = vpop.permute.xlu0 %579
      %581 = vrot.lane.b32.xlu0 %v498, 112
      %v582 = vpop.permute.xlu0 %581
      %583 = vrot.lane.b32.xlu0 %v499, 112
      %v584 = vpop.permute.xlu0 %583
      %585 = vrot.lane.b32.xlu0 %v500, 112
      %v586 = vpop.permute.xlu0 %585
      %587 = vrot.lane.b32.xlu0 %v501, 112
      %v588 = vpop.permute.xlu0 %587
      %589 = vrot.lane.b32.xlu0 %v502, 112
      %v590 = vpop.permute.xlu0 %589
      %vm591 = vcmask 916480
      %v592 = vsel %vm591, %v576, %v578
      %v593 = vsel %vm591, %v578, %v580
      %v594 = vsel %vm591, %v580, %v582
      %v595 = vsel %vm591, %v582, %v584
      %v596 = vsel %vm591, %v584, %v586
      %v597 = vsel %vm591, %v586, %v588
      %v598 = vsel %vm591, %v588, %v590
      %607 = vrot.lane.b32.xlu0 %v495, 111
      %v608 = vpop.permute.xlu0 %607
      %609 = vrot.lane.b32.xlu0 %v496, 111
      %v610 = vpop.permute.xlu0 %609
      %611 = vrot.lane.b32.xlu0 %v497, 111
      %v612 = vpop.permute.xlu0 %611
      %613 = vrot.lane.b32.xlu0 %v498, 111
      %v614 = vpop.permute.xlu0 %613
      %615 = vrot.lane.b32.xlu0 %v499, 111
      %v616 = vpop.permute.xlu0 %615
      %617 = vrot.lane.b32.xlu0 %v500, 111
      %v618 = vpop.permute.xlu0 %617
      %619 = vrot.lane.b32.xlu0 %v501, 111
      %v620 = vpop.permute.xlu0 %619
      %621 = vrot.lane.b32.xlu0 %v502, 111
      %v622 = vpop.permute.xlu0 %621
      %vm623 = vcmask 908288
      %v624 = vsel %vm623, %v608, %v610
      %v625 = vsel %vm623, %v610, %v612
      %v626 = vsel %vm623, %v612, %v614
      %v627 = vsel %vm623, %v614, %v616
      %v628 = vsel %vm623, %v616, %v618
      %v629 = vsel %vm623, %v618, %v620
      %v630 = vsel %vm623, %v620, %v622
      %639 = vrot.lane.b32.xlu0 %v495, 110
      %v640 = vpop.permute.xlu0 %639
      %641 = vrot.lane.b32.xlu0 %v496, 110
      %v642 = vpop.permute.xlu0 %641
      %643 = vrot.lane.b32.xlu0 %v497, 110
      %v644 = vpop.permute.xlu0 %643
      %645 = vrot.lane.b32.xlu0 %v498, 110
      %v646 = vpop.permute.xlu0 %645
      %647 = vrot.lane.b32.xlu0 %v499, 110
      %v648 = vpop.permute.xlu0 %647
      %649 = vrot.lane.b32.xlu0 %v500, 110
      %v650 = vpop.permute.xlu0 %649
      %651 = vrot.lane.b32.xlu0 %v501, 110
      %v652 = vpop.permute.xlu0 %651
      %653 = vrot.lane.b32.xlu0 %v502, 110
      %v654 = vpop.permute.xlu0 %653
      %vm655 = vcmask 900096
      %v656 = vsel %vm655, %v640, %v642
      %v657 = vsel %vm655, %v642, %v644
      %v658 = vsel %vm655, %v644, %v646
      %v659 = vsel %vm655, %v646, %v648
      %v660 = vsel %vm655, %v648, %v650
      %v661 = vsel %vm655, %v650, %v652
      %v662 = vsel %vm655, %v652, %v654
      %671 = vrot.lane.b32.xlu0 %v495, 96
      %v672 = vpop.permute.xlu0 %671
      %673 = vrot.lane.b32.xlu0 %v496, 96
      %v674 = vpop.permute.xlu0 %673
      %675 = vrot.lane.b32.xlu0 %v497, 96
      %v676 = vpop.permute.xlu0 %675
      %677 = vrot.lane.b32.xlu0 %v498, 96
      %v678 = vpop.permute.xlu0 %677
      %679 = vrot.lane.b32.xlu0 %v499, 96
      %v680 = vpop.permute.xlu0 %679
      %681 = vrot.lane.b32.xlu0 %v500, 96
      %v682 = vpop.permute.xlu0 %681
      %683 = vrot.lane.b32.xlu0 %v501, 96
      %v684 = vpop.permute.xlu0 %683
      %685 = vrot.lane.b32.xlu0 %v502, 96
      %v686 = vpop.permute.xlu0 %685
      %vm687 = vcmask 785408
      %v688 = vsel %vm687, %v672, %v674
      %v689 = vsel %vm687, %v674, %v676
      %v690 = vsel %vm687, %v676, %v678
      %v691 = vsel %vm687, %v678, %v680
      %v692 = vsel %vm687, %v680, %v682
      %v693 = vsel %vm687, %v682, %v684
      %v694 = vsel %vm687, %v684, %v686
      %703 = vrot.lane.b32.xlu0 %v495, 95
      %v704 = vpop.permute.xlu0 %703
      %705 = vrot.lane.b32.xlu0 %v496, 95
      %v706 = vpop.permute.xlu0 %705
      %707 = vrot.lane.b32.xlu0 %v497, 95
      %v708 = vpop.permute.xlu0 %707
      %709 = vrot.lane.b32.xlu0 %v498, 95
      %v710 = vpop.permute.xlu0 %709
      %711 = vrot.lane.b32.xlu0 %v499, 95
      %v712 = vpop.permute.xlu0 %711
      %713 = vrot.lane.b32.xlu0 %v500, 95
      %v714 = vpop.permute.xlu0 %713
      %715 = vrot.lane.b32.xlu0 %v501, 95
      %v716 = vpop.permute.xlu0 %715
      %717 = vrot.lane.b32.xlu0 %v502, 95
      %v718 = vpop.permute.xlu0 %717
      %vm719 = vcmask 777216
      %v720 = vsel %vm719, %v704, %v706
      %v721 = vsel %vm719, %v706, %v708
      %v722 = vsel %vm719, %v708, %v710
      %v723 = vsel %vm719, %v710, %v712
      %v724 = vsel %vm719, %v712, %v714
      %v725 = vsel %vm719, %v714, %v716
      %v726 = vsel %vm719, %v716, %v718
      %735 = vrot.lane.b32.xlu0 %v495, 94
      %v736 = vpop.permute.xlu0 %735
      %737 = vrot.lane.b32.xlu0 %v496, 94
      %v738 = vpop.permute.xlu0 %737
      %739 = vrot.lane.b32.xlu0 %v497, 94
      %v740 = vpop.permute.xlu0 %739
      %741 = vrot.lane.b32.xlu0 %v498, 94
      %v742 = vpop.permute.xlu0 %741
      %743 = vrot.lane.b32.xlu0 %v499, 94
      %v744 = vpop.permute.xlu0 %743
      %745 = vrot.lane.b32.xlu0 %v500, 94
      %v746 = vpop.permute.xlu0 %745
      %747 = vrot.lane.b32.xlu0 %v501, 94
      %v748 = vpop.permute.xlu0 %747
      %749 = vrot.lane.b32.xlu0 %v502, 94
      %v750 = vpop.permute.xlu0 %749
      %vm751 = vcmask 769024
      %v752 = vsel %vm751, %v736, %v738
      %v753 = vsel %vm751, %v738, %v740
      %v754 = vsel %vm751, %v740, %v742
      %v755 = vsel %vm751, %v742, %v744
      %v756 = vsel %vm751, %v744, %v746
      %v757 = vsel %vm751, %v746, %v748
      %v758 = vsel %vm751, %v748, %v750
      %v767 = vld [vmem:[%s1] sm:$0xff]
      %v768 = vld [vmem:[%s1 + $0x8] sm:$0xff]
      %v769 = vld [vmem:[%s2] sm:$0xff]
      %v770 = vld [vmem:[%s2 + $0x8] sm:$0xff]
      %772 = vset.pattern.permute.xlu0 0
      %773 = vperm.xlu0 %772, %v769
      %v774 = vpop.permute.xlu0 %773
      %777 = vset.pattern.permute.xlu0 0
      %778 = vperm.xlu0 %777, %v770
      %v779 = vpop.permute.xlu0 %778
      %vm781 = vcmask 588800
      %v783 = vsel %vm781, %v767, 0
      %v786 = vsel %vm781, %v768, 0
      %788 = vmatpush.msra.mxu0 0.0
      %789 = vmatpush.msra.mxu0 0.0
      %790 = vmatpush.msra.mxu0 0.0
      %791 = vmatpush.msra.mxu0 0.0
      %792 = vmatpush.msra.mxu0 0.0
      %793 = vmatpush.msra.mxu0 0.0
      %794 = vmatpush.msra.mxu0 0.0
      %795 = vmatpush.msra.mxu0 %v752
      %796 = vmatpush.msra.mxu0 %v720
      %797 = vmatpush.msra.mxu0 %v688
      %798 = vmatpush.msra.mxu0 %v656
      %799 = vmatpush.msra.mxu0 %v624
      %800 = vmatpush.msra.mxu0 %v592
      %801 = vmatpush.msra.mxu0 %v560
      %802 = vmatpush.msra.mxu0 %v528
      %803 = vmatpush.msra.mxu0 %v495
      %804 = vmatmul.f32.gmra.mxu0 %v783
      %v805 = vpop.f32.mrf.mxu0
      %v806 = vadd.f32 %v774, %v805
      %807 = vmatmul.f32.gmra.mxu0 %v786
      %v808 = vpop.f32.mrf.mxu0
      %v809 = vadd.f32 %v779, %v808
      %810 = vdwg.mxu0
      %811 = vmatpush.msra.mxu0 0.0
      %812 = vmatpush.msra.mxu0 0.0
      %813 = vmatpush.msra.mxu0 0.0
      %814 = vmatpush.msra.mxu0 0.0
      %815 = vmatpush.msra.mxu0 0.0
      %816 = vmatpush.msra.mxu0 0.0
      %817 = vmatpush.msra.mxu0 0.0
      %818 = vmatpush.msra.mxu0 %v753
      %819 = vmatpush.msra.mxu0 %v721
      %820 = vmatpush.msra.mxu0 %v689
      %821 = vmatpush.msra.mxu0 %v657
      %822 = vmatpush.msra.mxu0 %v625
      %823 = vmatpush.msra.mxu0 %v593
      %824 = vmatpush.msra.mxu0 %v561
      %825 = vmatpush.msra.mxu0 %v529
      %826 = vmatpush.msra.mxu0 %v496
      %827 = vmatmul.f32.gmra.mxu0 %v783
      %v828 = vpop.f32.mrf.mxu0
      %v829 = vadd.f32 %v774, %v828
      %830 = vmatmul.f32.gmra.mxu0 %v786
      %v831 = vpop.f32.mrf.mxu0
      %v832 = vadd.f32 %v779, %v831
      %833 = vdwg.mxu0
      %834 = vmatpush.msra.mxu0 0.0
      %835 = vmatpush.msra.mxu0 0.0
      %836 = vmatpush.msra.mxu0 0.0
      %837 = vmatpush.msra.mxu0 0.0
      %838 = vmatpush.msra.mxu0 0.0
      %839 = vmatpush.msra.mxu0 0.0
      %840 = vmatpush.msra.mxu0 0.0
      %841 = vmatpush.msra.mxu0 %v754
      %842 = vmatpush.msra.mxu0 %v722
      %843 = vmatpush.msra.mxu0 %v690
      %844 = vmatpush.msra.mxu0 %v658
      %845 = vmatpush.msra.mxu0 %v626
      %846 = vmatpush.msra.mxu0 %v594
      %847 = vmatpush.msra.mxu0 %v562
      %848 = vmatpush.msra.mxu0 %v530
      %849 = vmatpush.msra.mxu0 %v497
      %850 = vmatmul.f32.gmra.mxu0 %v783
      %v851 = vpop.f32.mrf.mxu0
      %v852 = vadd.f32 %v774, %v851
      %853 = vmatmul.f32.gmra.mxu0 %v786
      %v854 = vpop.f32.mrf.mxu0
      %v855 = vadd.f32 %v779, %v854
      %856 = vdwg.mxu0
      %857 = vmatpush.msra.mxu0 0.0
      %858 = vmatpush.msra.mxu0 0.0
      %859 = vmatpush.msra.mxu0 0.0
      %860 = vmatpush.msra.mxu0 0.0
      %861 = vmatpush.msra.mxu0 0.0
      %862 = vmatpush.msra.mxu0 0.0
      %863 = vmatpush.msra.mxu0 0.0
      %864 = vmatpush.msra.mxu0 %v755
      %865 = vmatpush.msra.mxu0 %v723
      %866 = vmatpush.msra.mxu0 %v691
      %867 = vmatpush.msra.mxu0 %v659
      %868 = vmatpush.msra.mxu0 %v627
      %869 = vmatpush.msra.mxu0 %v595
      %870 = vmatpush.msra.mxu0 %v563
      %871 = vmatpush.msra.mxu0 %v531
      %872 = vmatpush.msra.mxu0 %v498
      %873 = vmatmul.f32.gmra.mxu0 %v783
      %v874 = vpop.f32.mrf.mxu0
      %v875 = vadd.f32 %v774, %v874
      %876 = vmatmul.f32.gmra.mxu0 %v786
      %v877 = vpop.f32.mrf.mxu0
      %v878 = vadd.f32 %v779, %v877
      %879 = vdwg.mxu0
      %880 = vmatpush.msra.mxu0 0.0
      %881 = vmatpush.msra.mxu0 0.0
      %882 = vmatpush.msra.mxu0 0.0
      %883 = vmatpush.msra.mxu0 0.0
      %884 = vmatpush.msra.mxu0 0.0
      %885 = vmatpush.msra.mxu0 0.0
      %886 = vmatpush.msra.mxu0 0.0
      %887 = vmatpush.msra.mxu0 %v756
      %888 = vmatpush.msra.mxu0 %v724
      %889 = vmatpush.msra.mxu0 %v692
      %890 = vmatpush.msra.mxu0 %v660
      %891 = vmatpush.msra.mxu0 %v628
      %892 = vmatpush.msra.mxu0 %v596
      %893 = vmatpush.msra.mxu0 %v564
      %894 = vmatpush.msra.mxu0 %v532
      %895 = vmatpush.msra.mxu0 %v499
      %896 = vmatmul.f32.gmra.mxu0 %v783
      %v897 = vpop.f32.mrf.mxu0
      %v898 = vadd.f32 %v774, %v897
      %899 = vmatmul.f32.gmra.mxu0 %v786
      %v900 = vpop.f32.mrf.mxu0
      %v901 = vadd.f32 %v779, %v900
      %902 = vdwg.mxu0
      %903 = vmatpush.msra.mxu0 0.0
      %904 = vmatpush.msra.mxu0 0.0
      %905 = vmatpush.msra.mxu0 0.0
      %906 = vmatpush.msra.mxu0 0.0
      %907 = vmatpush.msra.mxu0 0.0
      %908 = vmatpush.msra.mxu0 0.0
      %909 = vmatpush.msra.mxu0 0.0
      %910 = vmatpush.msra.mxu0 %v757
      %911 = vmatpush.msra.mxu0 %v725
      %912 = vmatpush.msra.mxu0 %v693
      %913 = vmatpush.msra.mxu0 %v661
      %914 = vmatpush.msra.mxu0 %v629
      %915 = vmatpush.msra.mxu0 %v597
      %916 = vmatpush.msra.mxu0 %v565
      %917 = vmatpush.msra.mxu0 %v533
      %918 = vmatpush.msra.mxu0 %v500
      %919 = vmatmul.f32.gmra.mxu0 %v783
      %v920 = vpop.f32.mrf.mxu0
      %v921 = vadd.f32 %v774, %v920
      %922 = vmatmul.f32.gmra.mxu0 %v786
      %v923 = vpop.f32.mrf.mxu0
      %v924 = vadd.f32 %v779, %v923
      %925 = vdwg.mxu0
      %926 = vmatpush.msra.mxu0 0.0
      %927 = vmatpush.msra.mxu0 0.0
      %928 = vmatpush.msra.mxu0 0.0
      %929 = vmatpush.msra.mxu0 0.0
      %930 = vmatpush.msra.mxu0 0.0
      %931 = vmatpush.msra.mxu0 0.0
      %932 = vmatpush.msra.mxu0 0.0
      %933 = vmatpush.msra.mxu0 %v758
      %934 = vmatpush.msra.mxu0 %v726
      %935 = vmatpush.msra.mxu0 %v694
      %936 = vmatpush.msra.mxu0 %v662
      %937 = vmatpush.msra.mxu0 %v630
      %938 = vmatpush.msra.mxu0 %v598
      %939 = vmatpush.msra.mxu0 %v566
      %940 = vmatpush.msra.mxu0 %v534
      %941 = vmatpush.msra.mxu0 %v501
      %942 = vmatmul.f32.gmra.mxu0 %v783
      %v943 = vpop.f32.mrf.mxu0
      %v944 = vadd.f32 %v774, %v943
      %945 = vmatmul.f32.gmra.mxu0 %v786
      %v946 = vpop.f32.mrf.mxu0
      %v947 = vadd.f32 %v779, %v946
      %948 = vdwg.mxu0
      %949 = vmatpush.msra.mxu0 0.0
      %950 = vmatpush.msra.mxu0 0.0
      %951 = vmatpush.msra.mxu0 0.0
      %952 = vmatpush.msra.mxu0 0.0
      %953 = vmatpush.msra.mxu0 0.0
      %954 = vmatpush.msra.mxu0 0.0
      %955 = vmatpush.msra.mxu0 0.0
      %956 = vmatpush.msra.mxu0 %v750
      %957 = vmatpush.msra.mxu0 %v718
      %958 = vmatpush.msra.mxu0 %v686
      %959 = vmatpush.msra.mxu0 %v654
      %960 = vmatpush.msra.mxu0 %v622
      %961 = vmatpush.msra.mxu0 %v590
      %962 = vmatpush.msra.mxu0 %v558
      %963 = vmatpush.msra.mxu0 %v526
      %964 = vmatpush.msra.mxu0 %v502
      %965 = vmatmul.f32.gmra.mxu0 %v783
      %v966 = vpop.f32.mrf.mxu0
      %v967 = vadd.f32 %v774, %v966
      %968 = vmatmul.f32.gmra.mxu0 %v786
      %v969 = vpop.f32.mrf.mxu0
      %v970 = vadd.f32 %v779, %v969
      %971 = vdwg.mxu0
      %v972 = vmax.f32 %v806, 0.0
      %v973 = vmax.f32 %v829, 0.0
      %v974 = vmax.f32 %v852, 0.0
      %v975 = vmax.f32 %v875, 0.0
      %v976 = vmax.f32 %v898, 0.0
      %v977 = vmax.f32 %v921, 0.0
      %v978 = vmax.f32 %v944, 0.0
      %v979 = vmax.f32 %v967, 0.0
      %v980 = vmax.f32 %v809, 0.0
      %v981 = vmax.f32 %v832, 0.0
      %v982 = vmax.f32 %v855, 0.0
      %v983 = vmax.f32 %v878, 0.0
      %v984 = vmax.f32 %v901, 0.0
      %v985 = vmax.f32 %v924, 0.0
      %v986 = vmax.f32 %v947, 0.0
      %v987 = vmax.f32 %v970, 0.0
      %1004 = vrot.lane.b32.xlu0 %v972, 127
      %v1005 = vpop.permute.xlu0 %1004
      %1006 = vrot.lane.b32.xlu0 %v973, 127
      %v1007 = vpop.permute.xlu0 %1006
      %1008 = vrot.lane.b32.xlu0 %v974, 127
      %v1009 = vpop.permute.xlu0 %1008
      %1010 = vrot.lane.b32.xlu0 %v975, 127
      %v1011 = vpop.permute.xlu0 %1010
      %1012 = vrot.lane.b32.xlu0 %v976, 127
      %v1013 = vpop.permute.xlu0 %1012
      %1014 = vrot.lane.b32.xlu0 %v977, 127
      %v1015 = vpop.permute.xlu0 %1014
      %1016 = vrot.lane.b32.xlu0 %v978, 127
      %v1017 = vpop.permute.xlu0 %1016
      %1018 = vrot.lane.b32.xlu0 %v979, 127
      %v1019 = vpop.permute.xlu0 %1018
      %1020 = vrot.lane.b32.xlu0 %v980, 127
      %v1021 = vpop.permute.xlu0 %1020
      %1022 = vrot.lane.b32.xlu0 %v981, 127
      %v1023 = vpop.permute.xlu0 %1022
      %1024 = vrot.lane.b32.xlu0 %v982, 127
      %v1025 = vpop.permute.xlu0 %1024
      %1026 = vrot.lane.b32.xlu0 %v983, 127
      %v1027 = vpop.permute.xlu0 %1026
      %1028 = vrot.lane.b32.xlu0 %v984, 127
      %v1029 = vpop.permute.xlu0 %1028
      %1030 = vrot.lane.b32.xlu0 %v985, 127
      %v1031 = vpop.permute.xlu0 %1030
      %1032 = vrot.lane.b32.xlu0 %v986, 127
      %v1033 = vpop.permute.xlu0 %1032
      %1034 = vrot.lane.b32.xlu0 %v987, 127
      %v1035 = vpop.permute.xlu0 %1034
      %v1036 = vsel %vm527, %v1005, %v1007
      %v1037 = vsel %vm527, %v1007, %v1009
      %v1038 = vsel %vm527, %v1009, %v1011
      %v1039 = vsel %vm527, %v1011, %v1013
      %v1040 = vsel %vm527, %v1013, %v1015
      %v1041 = vsel %vm527, %v1015, %v1017
      %v1042 = vsel %vm527, %v1017, %v1019
      %v1043 = vsel %vm527, %v1021, %v1023
      %v1044 = vsel %vm527, %v1023, %v1025
      %v1045 = vsel %vm527, %v1025, %v1027
      %v1046 = vsel %vm527, %v1027, %v1029
      %v1047 = vsel %vm527, %v1029, %v1031
      %v1048 = vsel %vm527, %v1031, %v1033
      %v1049 = vsel %vm527, %v1033, %v1035
      %v1066 = vmax.f32 %v972, %v1036
      %v1067 = vmax.f32 %v973, %v1037
      %v1068 = vmax.f32 %v974, %v1038
      %v1069 = vmax.f32 %v975, %v1039
      %v1070 = vmax.f32 %v976, %v1040
      %v1071 = vmax.f32 %v977, %v1041
      %v1072 = vmax.f32 %v978, %v1042
      %v1073 = vmax.f32 %v979, %v1019
      %v1074 = vmax.f32 %v980, %v1043
      %v1075 = vmax.f32 %v981, %v1044
      %v1076 = vmax.f32 %v982, %v1045
      %v1077 = vmax.f32 %v983, %v1046
      %v1078 = vmax.f32 %v984, %v1047
      %v1079 = vmax.f32 %v985, %v1048
      %v1080 = vmax.f32 %v986, %v1049
      %v1081 = vmax.f32 %v987, %v1035
      %1098 = vrot.lane.b32.xlu0 %v1066, 112
      %v1099 = vpop.permute.xlu0 %1098
      %1100 = vrot.lane.b32.xlu0 %v1067, 112
      %v1101 = vpop.permute.xlu0 %1100
      %1102 = vrot.lane.b32.xlu0 %v1068, 112
      %v1103 = vpop.permute.xlu0 %1102
      %1104 = vrot.lane.b32.xlu0 %v1069, 112
      %v1105 = vpop.permute.xlu0 %1104
      %1106 = vrot.lane.b32.xlu0 %v1070, 112
      %v1107 = vpop.permute.xlu0 %1106
      %1108 = vrot.lane.b32.xlu0 %v1071, 112
      %v1109 = vpop.permute.xlu0 %1108
      %1110 = vrot.lane.b32.xlu0 %v1072, 112
      %v1111 = vpop.permute.xlu0 %1110
      %1112 = vrot.lane.b32.xlu0 %v1073, 112
      %v1113 = vpop.permute.xlu0 %1112
      %1114 = vrot.lane.b32.xlu0 %v1074, 112
      %v1115 = vpop.permute.xlu0 %1114
      %1116 = vrot.lane.b32.xlu0 %v1075, 112
      %v1117 = vpop.permute.xlu0 %1116
      %1118 = vrot.lane.b32.xlu0 %v1076, 112
      %v1119 = vpop.permute.xlu0 %1118
      %1120 = vrot.lane.b32.xlu0 %v1077, 112
      %v1121 = vpop.permute.xlu0 %1120
      %1122 = vrot.lane.b32.xlu0 %v1078, 112
      %v1123 = vpop.permute.xlu0 %1122
      %1124 = vrot.lane.b32.xlu0 %v1079, 112
      %v1125 = vpop.permute.xlu0 %1124
      %1126 = vrot.lane.b32.xlu0 %v1080, 112
      %v1127 = vpop.permute.xlu0 %1126
      %1128 = vrot.lane.b32.xlu0 %v1081, 112
      %v1129 = vpop.permute.xlu0 %1128
      %v1130 = vsel %vm591, %v1099, %v1101
      %v1131 = vsel %vm591, %v1101, %v1103
      %v1132 = vsel %vm591, %v1103, %v1105
      %v1133 = vsel %vm591, %v1105, %v1107
      %v1134 = vsel %vm591, %v1107, %v1109
      %v1135 = vsel %vm591, %v1109, %v1111
      %v1136 = vsel %vm591, %v1111, %v1113
      %v1137 = vsel %vm591, %v1115, %v1117
      %v1138 = vsel %vm591, %v1117, %v1119
      %v1139 = vsel %vm591, %v1119, %v1121
      %v1140 = vsel %vm591, %v1121, %v1123
      %v1141 = vsel %vm591, %v1123, %v1125
      %v1142 = vsel %vm591, %v1125, %v1127
      %v1143 = vsel %vm591, %v1127, %v1129
      %v1160 = vmax.f32 %v1066, %v1130
      %v1161 = vmax.f32 %v1067, %v1131
      %v1162 = vmax.f32 %v1068, %v1132
      %v1163 = vmax.f32 %v1069, %v1133
      %v1164 = vmax.f32 %v1070, %v1134
      %v1165 = vmax.f32 %v1071, %v1135
      %v1166 = vmax.f32 %v1072, %v1136
      %v1167 = vmax.f32 %v1073, %v1113
      %v1168 = vmax.f32 %v1074, %v1137
      %v1169 = vmax.f32 %v1075, %v1138
      %v1170 = vmax.f32 %v1076, %v1139
      %v1171 = vmax.f32 %v1077, %v1140
      %v1172 = vmax.f32 %v1078, %v1141
      %v1173 = vmax.f32 %v1079, %v1142
      %v1174 = vmax.f32 %v1080, %v1143
      %v1175 = vmax.f32 %v1081, %v1129
      %v1176 = vld [vmem:[%s3] sm:$0xff]
      %v1177 = vld [vmem:[%s3 + $0x8] sm:$0xff]
      %1179 = vset.pattern.permute.xlu0 0
      %1180 = vperm.xlu0 %1179, %v1176
      %v1181 = vpop.permute.xlu0 %1180
      %1184 = vset.pattern.permute.xlu0 0
      %1185 = vperm.xlu0 %1184, %v1177
      %v1186 = vpop.permute.xlu0 %1185
      %v1188 = vmul.f32 %v1160, %v1181
      %v1189 = vmul.f32 %v1161, %v1181
      %v1190 = vmul.f32 %v1162, %v1181
      %v1191 = vmul.f32 %v1163, %v1181
      %v1192 = vmul.f32 %v1164, %v1181
      %v1193 = vmul.f32 %v1165, %v1181
      %v1194 = vmul.f32 %v1166, %v1181
      %v1195 = vmul.f32 %v1167, %v1181
      %v1196 = vmul.f32 %v1168, %v1186
      %v1197 = vmul.f32 %v1169, %v1186
      %v1198 = vmul.f32 %v1170, %v1186
      %v1199 = vmul.f32 %v1171, %v1186
      %v1200 = vmul.f32 %v1172, %v1186
      %v1201 = vmul.f32 %v1173, %v1186
      %v1202 = vmul.f32 %v1174, %v1186
      %v1203 = vmul.f32 %v1175, %v1186
      %v1204 = vld [vmem:[%s4] sm:$0xff]
      %v1205 = vld [vmem:[%s4 + $0x8] sm:$0xff]
      %1207 = vset.pattern.permute.xlu0 0
      %1208 = vperm.xlu0 %1207, %v1204
      %v1209 = vpop.permute.xlu0 %1208
      %1212 = vset.pattern.permute.xlu0 0
      %1213 = vperm.xlu0 %1212, %v1205
      %v1214 = vpop.permute.xlu0 %1213
      %v1216 = vadd.f32 %v1188, %v1209
      %v1217 = vadd.f32 %v1189, %v1209
      %v1218 = vadd.f32 %v1190, %v1209
      %v1219 = vadd.f32 %v1191, %v1209
      %v1220 = vadd.f32 %v1192, %v1209
      %v1221 = vadd.f32 %v1193, %v1209
      %v1222 = vadd.f32 %v1194, %v1209
      %v1223 = vadd.f32 %v1195, %v1209
      %v1224 = vadd.f32 %v1196, %v1214
      %v1225 = vadd.f32 %v1197, %v1214
      %v1226 = vadd.f32 %v1198, %v1214
      %v1227 = vadd.f32 %v1199, %v1214
      %v1228 = vadd.f32 %v1200, %v1214
      %v1229 = vadd.f32 %v1201, %v1214
      %v1230 = vadd.f32 %v1202, %v1214
      %v1231 = vadd.f32 %v1203, %v1214
      %1248 = vrot.lane.b32.xlu0 %v1216, 126
      %v1249 = vpop.permute.xlu0 %1248
      %1250 = vrot.lane.b32.xlu0 %v1217, 126
      %v1251 = vpop.permute.xlu0 %1250
      %1252 = vrot.lane.b32.xlu0 %v1218, 126
      %v1253 = vpop.permute.xlu0 %1252
      %1254 = vrot.lane.b32.xlu0 %v1219, 126
      %v1255 = vpop.permute.xlu0 %1254
      %1256 = vrot.lane.b32.xlu0 %v1220, 126
      %v1257 = vpop.permute.xlu0 %1256
      %1258 = vrot.lane.b32.xlu0 %v1221, 126
      %v1259 = vpop.permute.xlu0 %1258
      %1260 = vrot.lane.b32.xlu0 %v1222, 126
      %v1261 = vpop.permute.xlu0 %1260
      %1262 = vrot.lane.b32.xlu0 %v1223, 126
      %v1263 = vpop.permute.xlu0 %1262
      %1264 = vrot.lane.b32.xlu0 %v1224, 126
      %v1265 = vpop.permute.xlu0 %1264
      %1266 = vrot.lane.b32.xlu0 %v1225, 126
      %v1267 = vpop.permute.xlu0 %1266
      %1268 = vrot.lane.b32.xlu0 %v1226, 126
      %v1269 = vpop.permute.xlu0 %1268
      %1270 = vrot.lane.b32.xlu0 %v1227, 126
      %v1271 = vpop.permute.xlu0 %1270
      %1272 = vrot.lane.b32.xlu0 %v1228, 126
      %v1273 = vpop.permute.xlu0 %1272
      %1274 = vrot.lane.b32.xlu0 %v1229, 126
      %v1275 = vpop.permute.xlu0 %1274
      %1276 = vrot.lane.b32.xlu0 %v1230, 126
      %v1277 = vpop.permute.xlu0 %1276
      %1278 = vrot.lane.b32.xlu0 %v1231, 126
      %v1279 = vpop.permute.xlu0 %1278
      %v1280 = vsel %vm559, %v1249, %v1251
      %v1281 = vsel %vm559, %v1251, %v1253
      %v1282 = vsel %vm559, %v1253, %v1255
      %v1283 = vsel %vm559, %v1255, %v1257
      %v1284 = vsel %vm559, %v1257, %v1259
      %v1285 = vsel %vm559, %v1259, %v1261
      %v1286 = vsel %vm559, %v1261, %v1263
      %v1287 = vsel %vm559, %v1265, %v1267
      %v1288 = vsel %vm559, %v1267, %v1269
      %v1289 = vsel %vm559, %v1269, %v1271
      %v1290 = vsel %vm559, %v1271, %v1273
      %v1291 = vsel %vm559, %v1273, %v1275
      %v1292 = vsel %vm559, %v1275, %v1277
      %v1293 = vsel %vm559, %v1277, %v1279
      %1310 = vrot.lane.b32.xlu0 %v1216, 124
      %v1311 = vpop.permute.xlu0 %1310
      %1312 = vrot.lane.b32.xlu0 %v1217, 124
      %v1313 = vpop.permute.xlu0 %1312
      %1314 = vrot.lane.b32.xlu0 %v1218, 124
      %v1315 = vpop.permute.xlu0 %1314
      %1316 = vrot.lane.b32.xlu0 %v1219, 124
      %v1317 = vpop.permute.xlu0 %1316
      %1318 = vrot.lane.b32.xlu0 %v1220, 124
      %v1319 = vpop.permute.xlu0 %1318
      %1320 = vrot.lane.b32.xlu0 %v1221, 124
      %v1321 = vpop.permute.xlu0 %1320
      %1322 = vrot.lane.b32.xlu0 %v1222, 124
      %v1323 = vpop.permute.xlu0 %1322
      %1324 = vrot.lane.b32.xlu0 %v1223, 124
      %v1325 = vpop.permute.xlu0 %1324
      %1326 = vrot.lane.b32.xlu0 %v1224, 124
      %v1327 = vpop.permute.xlu0 %1326
      %1328 = vrot.lane.b32.xlu0 %v1225, 124
      %v1329 = vpop.permute.xlu0 %1328
      %1330 = vrot.lane.b32.xlu0 %v1226, 124
      %v1331 = vpop.permute.xlu0 %1330
      %1332 = vrot.lane.b32.xlu0 %v1227, 124
      %v1333 = vpop.permute.xlu0 %1332
      %1334 = vrot.lane.b32.xlu0 %v1228, 124
      %v1335 = vpop.permute.xlu0 %1334
      %1336 = vrot.lane.b32.xlu0 %v1229, 124
      %v1337 = vpop.permute.xlu0 %1336
      %1338 = vrot.lane.b32.xlu0 %v1230, 124
      %v1339 = vpop.permute.xlu0 %1338
      %1340 = vrot.lane.b32.xlu0 %v1231, 124
      %v1341 = vpop.permute.xlu0 %1340
      %vm1342 = vcmask 1014784
      %v1343 = vsel %vm1342, %v1311, %v1313
      %v1344 = vsel %vm1342, %v1313, %v1315
      %v1345 = vsel %vm1342, %v1315, %v1317
      %v1346 = vsel %vm1342, %v1317, %v1319
      %v1347 = vsel %vm1342, %v1319, %v1321
      %v1348 = vsel %vm1342, %v1321, %v1323
      %v1349 = vsel %vm1342, %v1323, %v1325
      %v1350 = vsel %vm1342, %v1327, %v1329
      %v1351 = vsel %vm1342, %v1329, %v1331
      %v1352 = vsel %vm1342, %v1331, %v1333
      %v1353 = vsel %vm1342, %v1333, %v1335
      %v1354 = vsel %vm1342, %v1335, %v1337
      %v1355 = vsel %vm1342, %v1337, %v1339
      %v1356 = vsel %vm1342, %v1339, %v1341
      %1373 = vrot.lane.b32.xlu0 %v1216, 96
      %v1374 = vpop.permute.xlu0 %1373
      %1375 = vrot.lane.b32.xlu0 %v1217, 96
      %v1376 = vpop.permute.xlu0 %1375
      %1377 = vrot.lane.b32.xlu0 %v1218, 96
      %v1378 = vpop.permute.xlu0 %1377
      %1379 = vrot.lane.b32.xlu0 %v1219, 96
      %v1380 = vpop.permute.xlu0 %1379
      %1381 = vrot.lane.b32.xlu0 %v1220, 96
      %v1382 = vpop.permute.xlu0 %1381
      %1383 = vrot.lane.b32.xlu0 %v1221, 96
      %v1384 = vpop.permute.xlu0 %1383
      %1385 = vrot.lane.b32.xlu0 %v1222, 96
      %v1386 = vpop.permute.xlu0 %1385
      %1387 = vrot.lane.b32.xlu0 %v1223, 96
      %v1388 = vpop.permute.xlu0 %1387
      %1389 = vrot.lane.b32.xlu0 %v1224, 96
      %v1390 = vpop.permute.xlu0 %1389
      %1391 = vrot.lane.b32.xlu0 %v1225, 96
      %v1392 = vpop.permute.xlu0 %1391
      %1393 = vrot.lane.b32.xlu0 %v1226, 96
      %v1394 = vpop.permute.xlu0 %1393
      %1395 = vrot.lane.b32.xlu0 %v1227, 96
      %v1396 = vpop.permute.xlu0 %1395
      %1397 = vrot.lane.b32.xlu0 %v1228, 96
      %v1398 = vpop.permute.xlu0 %1397
      %1399 = vrot.lane.b32.xlu0 %v1229, 96
      %v1400 = vpop.permute.xlu0 %1399
      %1401 = vrot.lane.b32.xlu0 %v1230, 96
      %v1402 = vpop.permute.xlu0 %1401
      %1403 = vrot.lane.b32.xlu0 %v1231, 96
      %v1404 = vpop.permute.xlu0 %1403
      %v1405 = vsel %vm687, %v1374, %v1376
      %v1406 = vsel %vm687, %v1376, %v1378
      %v1407 = vsel %vm687, %v1378, %v1380
      %v1408 = vsel %vm687, %v1380, %v1382
      %v1409 = vsel %vm687, %v1382, %v1384
      %v1410 = vsel %vm687, %v1384, %v1386
      %v1411 = vsel %vm687, %v1386, %v1388
      %v1412 = vsel %vm687, %v1390, %v1392
      %v1413 = vsel %vm687, %v1392, %v1394
      %v1414 = vsel %vm687, %v1394, %v1396
      %v1415 = vsel %vm687, %v1396, %v1398
      %v1416 = vsel %vm687, %v1398, %v1400
      %v1417 = vsel %vm687, %v1400, %v1402
      %v1418 = vsel %vm687, %v1402, %v1404
      %1435 = vrot.lane.b32.xlu0 %v1216, 94
      %v1436 = vpop.permute.xlu0 %1435
      %1437 = vrot.lane.b32.xlu0 %v1217, 94
      %v1438 = vpop.permute.xlu0 %1437
      %1439 = vrot.lane.b32.xlu0 %v1218, 94
      %v1440 = vpop.permute.xlu0 %1439
      %1441 = vrot.lane.b32.xlu0 %v1219, 94
      %v1442 = vpop.permute.xlu0 %1441
      %1443 = vrot.lane.b32.xlu0 %v1220, 94
      %v1444 = vpop.permute.xlu0 %1443
      %1445 = vrot.lane.b32.xlu0 %v1221, 94
      %v1446 = vpop.permute.xlu0 %1445
      %1447 = vrot.lane.b32.xlu0 %v1222, 94
      %v1448 = vpop.permute.xlu0 %1447
      %1449 = vrot.lane.b32.xlu0 %v1223, 94
      %v1450 = vpop.permute.xlu0 %1449
      %1451 = vrot.lane.b32.xlu0 %v1224, 94
      %v1452 = vpop.permute.xlu0 %1451
      %1453 = vrot.lane.b32.xlu0 %v1225, 94
      %v1454 = vpop.permute.xlu0 %1453
      %1455 = vrot.lane.b32.xlu0 %v1226, 94
      %v1456 = vpop.permute.xlu0 %1455
      %1457 = vrot.lane.b32.xlu0 %v1227, 94
      %v1458 = vpop.permute.xlu0 %1457
      %1459 = vrot.lane.b32.xlu0 %v1228, 94
      %v1460 = vpop.permute.xlu0 %1459
      %1461 = vrot.lane.b32.xlu0 %v1229, 94
      %v1462 = vpop.permute.xlu0 %1461
      %1463 = vrot.lane.b32.xlu0 %v1230, 94
      %v1464 = vpop.permute.xlu0 %1463
      %1465 = vrot.lane.b32.xlu0 %v1231, 94
      %v1466 = vpop.permute.xlu0 %1465
      %v1467 = vsel %vm751, %v1436, %v1438
      %v1468 = vsel %vm751, %v1438, %v1440
      %v1469 = vsel %vm751, %v1440, %v1442
      %v1470 = vsel %vm751, %v1442, %v1444
      %v1471 = vsel %vm751, %v1444, %v1446
      %v1472 = vsel %vm751, %v1446, %v1448
      %v1473 = vsel %vm751, %v1448, %v1450
      %v1474 = vsel %vm751, %v1452, %v1454
      %v1475 = vsel %vm751, %v1454, %v1456
      %v1476 = vsel %vm751, %v1456, %v1458
      %v1477 = vsel %vm751, %v1458, %v1460
      %v1478 = vsel %vm751, %v1460, %v1462
      %v1479 = vsel %vm751, %v1462, %v1464
      %v1480 = vsel %vm751, %v1464, %v1466
      %1497 = vrot.lane.b32.xlu0 %v1216, 92
      %v1498 = vpop.permute.xlu0 %1497
      %1499 = vrot.lane.b32.xlu0 %v1217, 92
      %v1500 = vpop.permute.xlu0 %1499
      %1501 = vrot.lane.b32.xlu0 %v1218, 92
      %v1502 = vpop.permute.xlu0 %1501
      %1503 = vrot.lane.b32.xlu0 %v1219, 92
      %v1504 = vpop.permute.xlu0 %1503
      %1505 = vrot.lane.b32.xlu0 %v1220, 92
      %v1506 = vpop.permute.xlu0 %1505
      %1507 = vrot.lane.b32.xlu0 %v1221, 92
      %v1508 = vpop.permute.xlu0 %1507
      %1509 = vrot.lane.b32.xlu0 %v1222, 92
      %v1510 = vpop.permute.xlu0 %1509
      %1511 = vrot.lane.b32.xlu0 %v1223, 92
      %v1512 = vpop.permute.xlu0 %1511
      %1513 = vrot.lane.b32.xlu0 %v1224, 92
      %v1514 = vpop.permute.xlu0 %1513
      %1515 = vrot.lane.b32.xlu0 %v1225, 92
      %v1516 = vpop.permute.xlu0 %1515
      %1517 = vrot.lane.b32.xlu0 %v1226, 92
      %v1518 = vpop.permute.xlu0 %1517
      %1519 = vrot.lane.b32.xlu0 %v1227, 92
      %v1520 = vpop.permute.xlu0 %1519
      %1521 = vrot.lane.b32.xlu0 %v1228, 92
      %v1522 = vpop.permute.xlu0 %1521
      %1523 = vrot.lane.b32.xlu0 %v1229, 92
      %v1524 = vpop.permute.xlu0 %1523
      %1525 = vrot.lane.b32.xlu0 %v1230, 92
      %v1526 = vpop.permute.xlu0 %1525
      %1527 = vrot.lane.b32.xlu0 %v1231, 92
      %v1528 = vpop.permute.xlu0 %1527
      %vm1529 = vcmask 752640
      %v1530 = vsel %vm1529, %v1498, %v1500
      %v1531 = vsel %vm1529, %v1500, %v1502
      %v1532 = vsel %vm1529, %v1502, %v1504
      %v1533 = vsel %vm1529, %v1504, %v1506
      %v1534 = vsel %vm1529, %v1506, %v1508
      %v1535 = vsel %vm1529, %v1508, %v1510
      %v1536 = vsel %vm1529, %v1510, %v1512
      %v1537 = vsel %vm1529, %v1514, %v1516
      %v1538 = vsel %vm1529, %v1516, %v1518
      %v1539 = vsel %vm1529, %v1518, %v1520
      %v1540 = vsel %vm1529, %v1520, %v1522
      %v1541 = vsel %vm1529, %v1522, %v1524
      %v1542 = vsel %vm1529, %v1524, %v1526
      %v1543 = vsel %vm1529, %v1526, %v1528
      %1560 = vrot.lane.b32.xlu0 %v1216, 64
      %v1561 = vpop.permute.xlu0 %1560
      %1562 = vrot.lane.b32.xlu0 %v1217, 64
      %v1563 = vpop.permute.xlu0 %1562
      %1564 = vrot.lane.b32.xlu0 %v1218, 64
      %v1565 = vpop.permute.xlu0 %1564
      %1566 = vrot.lane.b32.xlu0 %v1219, 64
      %v1567 = vpop.permute.xlu0 %1566
      %1568 = vrot.lane.b32.xlu0 %v1220, 64
      %v1569 = vpop.permute.xlu0 %1568
      %1570 = vrot.lane.b32.xlu0 %v1221, 64
      %v1571 = vpop.permute.xlu0 %1570
      %1572 = vrot.lane.b32.xlu0 %v1222, 64
      %v1573 = vpop.permute.xlu0 %1572
      %1574 = vrot.lane.b32.xlu0 %v1223, 64
      %v1575 = vpop.permute.xlu0 %1574
      %1576 = vrot.lane.b32.xlu0 %v1224, 64
      %v1577 = vpop.permute.xlu0 %1576
      %1578 = vrot.lane.b32.xlu0 %v1225, 64
      %v1579 = vpop.permute.xlu0 %1578
      %1580 = vrot.lane.b32.xlu0 %v1226, 64
      %v1581 = vpop.permute.xlu0 %1580
      %1582 = vrot.lane.b32.xlu0 %v1227, 64
      %v1583 = vpop.permute.xlu0 %1582
      %1584 = vrot.lane.b32.xlu0 %v1228, 64
      %v1585 = vpop.permute.xlu0 %1584
      %1586 = vrot.lane.b32.xlu0 %v1229, 64
      %v1587 = vpop.permute.xlu0 %1586
      %1588 = vrot.lane.b32.xlu0 %v1230, 64
      %v1589 = vpop.permute.xlu0 %1588
      %1590 = vrot.lane.b32.xlu0 %v1231, 64
      %v1591 = vpop.permute.xlu0 %1590
      %vm1592 = vcmask 523264
      %v1593 = vsel %vm1592, %v1561, %v1563
      %v1594 = vsel %vm1592, %v1563, %v1565
      %v1595 = vsel %vm1592, %v1565, %v1567
      %v1596 = vsel %vm1592, %v1567, %v1569
      %v1597 = vsel %vm1592, %v1569, %v1571
      %v1598 = vsel %vm1592, %v1571, %v1573
      %v1599 = vsel %vm1592, %v1573, %v1575
      %v1600 = vsel %vm1592, %v1577, %v1579
      %v1601 = vsel %vm1592, %v1579, %v1581
      %v1602 = vsel %vm1592, %v1581, %v1583
      %v1603 = vsel %vm1592, %v1583, %v1585
      %v1604 = vsel %vm1592, %v1585, %v1587
      %v1605 = vsel %vm1592, %v1587, %v1589
      %v1606 = vsel %vm1592, %v1589, %v1591
      %1623 = vrot.lane.b32.xlu0 %v1216, 62
      %v1624 = vpop.permute.xlu0 %1623
      %1625 = vrot.lane.b32.xlu0 %v1217, 62
      %v1626 = vpop.permute.xlu0 %1625
      %1627 = vrot.lane.b32.xlu0 %v1218, 62
      %v1628 = vpop.permute.xlu0 %1627
      %1629 = vrot.lane.b32.xlu0 %v1219, 62
      %v1630 = vpop.permute.xlu0 %1629
      %1631 = vrot.lane.b32.xlu0 %v1220, 62
      %v1632 = vpop.permute.xlu0 %1631
      %1633 = vrot.lane.b32.xlu0 %v1221, 62
      %v1634 = vpop.permute.xlu0 %1633
      %1635 = vrot.lane.b32.xlu0 %v1222, 62
      %v1636 = vpop.permute.xlu0 %1635
      %1637 = vrot.lane.b32.xlu0 %v1223, 62
      %v1638 = vpop.permute.xlu0 %1637
      %1639 = vrot.lane.b32.xlu0 %v1224, 62
      %v1640 = vpop.permute.xlu0 %1639
      %1641 = vrot.lane.b32.xlu0 %v1225, 62
      %v1642 = vpop.permute.xlu0 %1641
      %1643 = vrot.lane.b32.xlu0 %v1226, 62
      %v1644 = vpop.permute.xlu0 %1643
      %1645 = vrot.lane.b32.xlu0 %v1227, 62
      %v1646 = vpop.permute.xlu0 %1645
      %1647 = vrot.lane.b32.xlu0 %v1228, 62
      %v1648 = vpop.permute.xlu0 %1647
      %1649 = vrot.lane.b32.xlu0 %v1229, 62
      %v1650 = vpop.permute.xlu0 %1649
      %1651 = vrot.lane.b32.xlu0 %v1230, 62
      %v1652 = vpop.permute.xlu0 %1651
      %1653 = vrot.lane.b32.xlu0 %v1231, 62
      %v1654 = vpop.permute.xlu0 %1653
      %vm1655 = vcmask 506880
      %v1656 = vsel %vm1655, %v1624, %v1626
      %v1657 = vsel %vm1655, %v1626, %v1628
      %v1658 = vsel %vm1655, %v1628, %v1630
      %v1659 = vsel %vm1655, %v1630, %v1632
      %v1660 = vsel %vm1655, %v1632, %v1634
      %v1661 = vsel %vm1655, %v1634, %v1636
      %v1662 = vsel %vm1655, %v1636, %v1638
      %v1663 = vsel %vm1655, %v1640, %v1642
      %v1664 = vsel %vm1655, %v1642, %v1644
      %v1665 = vsel %vm1655, %v1644, %v1646
      %v1666 = vsel %vm1655, %v1646, %v1648
      %v1667 = vsel %vm1655, %v1648, %v1650
      %v1668 = vsel %vm1655, %v1650, %v1652
      %v1669 = vsel %vm1655, %v1652, %v1654
      %1686 = vrot.lane.b32.xlu0 %v1216, 60
      %v1687 = vpop.permute.xlu0 %1686
      %1688 = vrot.lane.b32.xlu0 %v1217, 60
      %v1689 = vpop.permute.xlu0 %1688
      %1690 = vrot.lane.b32.xlu0 %v1218, 60
      %v1691 = vpop.permute.xlu0 %1690
      %1692 = vrot.lane.b32.xlu0 %v1219, 60
      %v1693 = vpop.permute.xlu0 %1692
      %1694 = vrot.lane.b32.xlu0 %v1220, 60
      %v1695 = vpop.permute.xlu0 %1694
      %1696 = vrot.lane.b32.xlu0 %v1221, 60
      %v1697 = vpop.permute.xlu0 %1696
      %1698 = vrot.lane.b32.xlu0 %v1222, 60
      %v1699 = vpop.permute.xlu0 %1698
      %1700 = vrot.lane.b32.xlu0 %v1223, 60
      %v1701 = vpop.permute.xlu0 %1700
      %1702 = vrot.lane.b32.xlu0 %v1224, 60
      %v1703 = vpop.permute.xlu0 %1702
      %1704 = vrot.lane.b32.xlu0 %v1225, 60
      %v1705 = vpop.permute.xlu0 %1704
      %1706 = vrot.lane.b32.xlu0 %v1226, 60
      %v1707 = vpop.permute.xlu0 %1706
      %1708 = vrot.lane.b32.xlu0 %v1227, 60
      %v1709 = vpop.permute.xlu0 %1708
      %1710 = vrot.lane.b32.xlu0 %v1228, 60
      %v1711 = vpop.permute.xlu0 %1710
      %1712 = vrot.lane.b32.xlu0 %v1229, 60
      %v1713 = vpop.permute.xlu0 %1712
      %1714 = vrot.lane.b32.xlu0 %v1230, 60
      %v1715 = vpop.permute.xlu0 %1714
      %1716 = vrot.lane.b32.xlu0 %v1231, 60
      %v1717 = vpop.permute.xlu0 %1716
      %vm1718 = vcmask 490496
      %v1719 = vsel %vm1718, %v1687, %v1689
      %v1720 = vsel %vm1718, %v1689, %v1691
      %v1721 = vsel %vm1718, %v1691, %v1693
      %v1722 = vsel %vm1718, %v1693, %v1695
      %v1723 = vsel %vm1718, %v1695, %v1697
      %v1724 = vsel %vm1718, %v1697, %v1699
      %v1725 = vsel %vm1718, %v1699, %v1701
      %v1726 = vsel %vm1718, %v1703, %v1705
      %v1727 = vsel %vm1718, %v1705, %v1707
      %v1728 = vsel %vm1718, %v1707, %v1709
      %v1729 = vsel %vm1718, %v1709, %v1711
      %v1730 = vsel %vm1718, %v1711, %v1713
      %v1731 = vsel %vm1718, %v1713, %v1715
      %v1732 = vsel %vm1718, %v1715, %v1717
      %v1749 = vld [vmem:[%s5] sm:$0xff]
      %v1750 = vld [vmem:[%s5 + $0x8] sm:$0xff]
      %v1751 = vld [vmem:[%s5 + $0x10] sm:$0xff]
      %v1752 = vld [vmem:[%s5 + $0x18] sm:$0xff]
      %v1753 = vld [vmem:[%s5 + $0x20] sm:$0xff]
      %v1754 = vld [vmem:[%s5 + $0x28] sm:$0xff]
      %v1755 = vld [vmem:[%s5 + $0x30] sm:$0xff]
      %v1756 = vld [vmem:[%s5 + $0x38] sm:$0xff]
      %v1757 = vld [vmem:[%s6] sm:$0xff]
      %v1758 = vld [vmem:[%s6 + $0x8] sm:$0xff]
      %v1759 = vld [vmem:[%s6 + $0x10] sm:$0xff]
      %v1760 = vld [vmem:[%s6 + $0x18] sm:$0xff]
      %1762 = vset.pattern.permute.xlu0 0
      %1763 = vperm.xlu0 %1762, %v1757
      %v1764 = vpop.permute.xlu0 %1763
      %1767 = vset.pattern.permute.xlu0 0
      %1768 = vperm.xlu0 %1767, %v1758
      %v1769 = vpop.permute.xlu0 %1768
      %1772 = vset.pattern.permute.xlu0 0
      %1773 = vperm.xlu0 %1772, %v1759
      %v1774 = vpop.permute.xlu0 %1773
      %1777 = vset.pattern.permute.xlu0 0
      %1778 = vperm.xlu0 %1777, %v1760
      %v1779 = vpop.permute.xlu0 %1778
      %vm1781 = vcmask 130048
      %v1783 = vsel %vm1781, %v1750, 0
      %v1786 = vsel %vm1781, %v1752, 0
      %v1789 = vsel %vm1781, %v1754, 0
      %v1792 = vsel %vm1781, %v1756, 0
      %1794 = vmatpush.msra.mxu0 %v1663
      %1795 = vmatpush.msra.mxu0 %v1656
      %1796 = vmatpush.msra.mxu0 %v1600
      %1797 = vmatpush.msra.mxu0 %v1593
      %1798 = vmatpush.msra.mxu0 %v1537
      %1799 = vmatpush.msra.mxu0 %v1530
      %1800 = vmatpush.msra.mxu0 %v1474
      %1801 = vmatpush.msra.mxu0 %v1467
      %1802 = vmatpush.msra.mxu0 %v1412
      %1803 = vmatpush.msra.mxu0 %v1405
      %1804 = vmatpush.msra.mxu0 %v1350
      %1805 = vmatpush.msra.mxu0 %v1343
      %1806 = vmatpush.msra.mxu0 %v1287
      %1807 = vmatpush.msra.mxu0 %v1280
      %1808 = vmatpush.msra.mxu0 %v1224
      %1809 = vmatpush.msra.mxu0 %v1216
      %1810 = vmatmul.f32.gmra.mxu0 %v1749
      %v1811 = vpop.f32.mrf.mxu0
      %v1812 = vadd.f32 %v1764, %v1811
      %1813 = vmatmul.f32.gmra.mxu0 %v1751
      %v1814 = vpop.f32.mrf.mxu0
      %v1815 = vadd.f32 %v1769, %v1814
      %1816 = vmatmul.f32.gmra.mxu0 %v1753
      %v1817 = vpop.f32.mrf.mxu0
      %v1818 = vadd.f32 %v1774, %v1817
      %1819 = vmatmul.f32.gmra.mxu0 %v1755
      %v1820 = vpop.f32.mrf.mxu0
      %v1821 = vadd.f32 %v1779, %v1820
      %1822 = vdwg.mxu0
      %1823 = vmatpush.msra.mxu0 0.0
      %1824 = vmatpush.msra.mxu0 0.0
      %1825 = vmatpush.msra.mxu0 0.0
      %1826 = vmatpush.msra.mxu0 0.0
      %1827 = vmatpush.msra.mxu0 0.0
      %1828 = vmatpush.msra.mxu0 0.0
      %1829 = vmatpush.msra.mxu0 0.0
      %1830 = vmatpush.msra.mxu0 0.0
      %1831 = vmatpush.msra.mxu0 0.0
      %1832 = vmatpush.msra.mxu0 0.0
      %1833 = vmatpush.msra.mxu0 0.0
      %1834 = vmatpush.msra.mxu0 0.0
      %1835 = vmatpush.msra.mxu0 0.0
      %1836 = vmatpush.msra.mxu0 0.0
      %1837 = vmatpush.msra.mxu0 %v1726
      %1838 = vmatpush.msra.mxu0 %v1719
      %1839 = vmatmul.f32.gmra.mxu0 %v1783
      %v1840 = vpop.f32.mrf.mxu0
      %v1841 = vadd.f32 %v1812, %v1840
      %1842 = vmatmul.f32.gmra.mxu0 %v1786
      %v1843 = vpop.f32.mrf.mxu0
      %v1844 = vadd.f32 %v1815, %v1843
      %1845 = vmatmul.f32.gmra.mxu0 %v1789
      %v1846 = vpop.f32.mrf.mxu0
      %v1847 = vadd.f32 %v1818, %v1846
      %1848 = vmatmul.f32.gmra.mxu0 %v1792
      %v1849 = vpop.f32.mrf.mxu0
      %v1850 = vadd.f32 %v1821, %v1849
      %1851 = vdwg.mxu0
      %1852 = vmatpush.msra.mxu0 %v1664
      %1853 = vmatpush.msra.mxu0 %v1657
      %1854 = vmatpush.msra.mxu0 %v1601
      %1855 = vmatpush.msra.mxu0 %v1594
      %1856 = vmatpush.msra.mxu0 %v1538
      %1857 = vmatpush.msra.mxu0 %v1531
      %1858 = vmatpush.msra.mxu0 %v1475
      %1859 = vmatpush.msra.mxu0 %v1468
      %1860 = vmatpush.msra.mxu0 %v1413
      %1861 = vmatpush.msra.mxu0 %v1406
      %1862 = vmatpush.msra.mxu0 %v1351
      %1863 = vmatpush.msra.mxu0 %v1344
      %1864 = vmatpush.msra.mxu0 %v1288
      %1865 = vmatpush.msra.mxu0 %v1281
      %1866 = vmatpush.msra.mxu0 %v1225
      %1867 = vmatpush.msra.mxu0 %v1217
      %1868 = vmatmul.f32.gmra.mxu0 %v1749
      %v1869 = vpop.f32.mrf.mxu0
      %v1870 = vadd.f32 %v1764, %v1869
      %1871 = vmatmul.f32.gmra.mxu0 %v1751
      %v1872 = vpop.f32.mrf.mxu0
      %v1873 = vadd.f32 %v1769, %v1872
      %1874 = vmatmul.f32.gmra.mxu0 %v1753
      %v1875 = vpop.f32.mrf.mxu0
      %v1876 = vadd.f32 %v1774, %v1875
      %1877 = vmatmul.f32.gmra.mxu0 %v1755
      %v1878 = vpop.f32.mrf.mxu0
      %v1879 = vadd.f32 %v1779, %v1878
      %1880 = vdwg.mxu0
      %1881 = vmatpush.msra.mxu0 0.0
      %1882 = vmatpush.msra.mxu0 0.0
      %1883 = vmatpush.msra.mxu0 0.0
      %1884 = vmatpush.msra.mxu0 0.0
      %1885 = vmatpush.msra.mxu0 0.0
      %1886 = vmatpush.msra.mxu0 0.0
      %1887 = vmatpush.msra.mxu0 0.0
      %1888 = vmatpush.msra.mxu0 0.0
      %1889 = vmatpush.msra.mxu0 0.0
      %1890 = vmatpush.msra.mxu0 0.0
      %1891 = vmatpush.msra.mxu0 0.0
      %1892 = vmatpush.msra.mxu0 0.0
      %1893 = vmatpush.msra.mxu0 0.0
      %1894 = vmatpush.msra.mxu0 0.0
      %1895 = vmatpush.msra.mxu0 %v1727
      %1896 = vmatpush.msra.mxu0 %v1720
      %1897 = vmatmul.f32.gmra.mxu0 %v1783
      %v1898 = vpop.f32.mrf.mxu0
      %v1899 = vadd.f32 %v1870, %v1898
      %1900 = vmatmul.f32.gmra.mxu0 %v1786
      %v1901 = vpop.f32.mrf.mxu0
      %v1902 = vadd.f32 %v1873, %v1901
      %1903 = vmatmul.f32.gmra.mxu0 %v1789
      %v1904 = vpop.f32.mrf.mxu0
      %v1905 = vadd.f32 %v1876, %v1904
      %1906 = vmatmul.f32.gmra.mxu0 %v1792
      %v1907 = vpop.f32.mrf.mxu0
      %v1908 = vadd.f32 %v1879, %v1907
      %1909 = vdwg.mxu0
      %1910 = vmatpush.msra.mxu0 %v1665
      %1911 = vmatpush.msra.mxu0 %v1658
      %1912 = vmatpush.msra.mxu0 %v1602
      %1913 = vmatpush.msra.mxu0 %v1595
      %1914 = vmatpush.msra.mxu0 %v1539
      %1915 = vmatpush.msra.mxu0 %v1532
      %1916 = vmatpush.msra.mxu0 %v1476
      %1917 = vmatpush.msra.mxu0 %v1469
      %1918 = vmatpush.msra.mxu0 %v1414
      %1919 = vmatpush.msra.mxu0 %v1407
      %1920 = vmatpush.msra.mxu0 %v1352
      %1921 = vmatpush.msra.mxu0 %v1345
      %1922 = vmatpush.msra.mxu0 %v1289
      %1923 = vmatpush.msra.mxu0 %v1282
      %1924 = vmatpush.msra.mxu0 %v1226
      %1925 = vmatpush.msra.mxu0 %v1218
      %1926 = vmatmul.f32.gmra.mxu0 %v1749
      %v1927 = vpop.f32.mrf.mxu0
      %v1928 = vadd.f32 %v1764, %v1927
      %1929 = vmatmul.f32.gmra.mxu0 %v1751
      %v1930 = vpop.f32.mrf.mxu0
      %v1931 = vadd.f32 %v1769, %v1930
      %1932 = vmatmul.f32.gmra.mxu0 %v1753
      %v1933 = vpop.f32.mrf.mxu0
      %v1934 = vadd.f32 %v1774, %v1933
      %1935 = vmatmul.f32.gmra.mxu0 %v1755
      %v1936 = vpop.f32.mrf.mxu0
      %v1937 = vadd.f32 %v1779, %v1936
      %1938 = vdwg.mxu0
      %1939 = vmatpush.msra.mxu0 0.0
      %1940 = vmatpush.msra.mxu0 0.0
      %1941 = vmatpush.msra.mxu0 0.0
      %1942 = vmatpush.msra.mxu0 0.0
      %1943 = vmatpush.msra.mxu0 0.0
      %1944 = vmatpush.msra.mxu0 0.0
      %1945 = vmatpush.msra.mxu0 0.0
      %1946 = vmatpush.msra.mxu0 0.0
      %1947 = vmatpush.msra.mxu0 0.0
      %1948 = vmatpush.msra.mxu0 0.0
      %1949 = vmatpush.msra.mxu0 0.0
      %1950 = vmatpush.msra.mxu0 0.0
      %1951 = vmatpush.msra.mxu0 0.0
      %1952 = vmatpush.msra.mxu0 0.0
      %1953 = vmatpush.msra.mxu0 %v1728
      %1954 = vmatpush.msra.mxu0 %v1721
      %1955 = vmatmul.f32.gmra.mxu0 %v1783
      %v1956 = vpop.f32.mrf.mxu0
      %v1957 = vadd.f32 %v1928, %v1956
      %1958 = vmatmul.f32.gmra.mxu0 %v1786
      %v1959 = vpop.f32.mrf.mxu0
      %v1960 = vadd.f32 %v1931, %v1959
      %1961 = vmatmul.f32.gmra.mxu0 %v1789
      %v1962 = vpop.f32.mrf.mxu0
      %v1963 = vadd.f32 %v1934, %v1962
      %1964 = vmatmul.f32.gmra.mxu0 %v1792
      %v1965 = vpop.f32.mrf.mxu0
      %v1966 = vadd.f32 %v1937, %v1965
      %1967 = vdwg.mxu0
      %1968 = vmatpush.msra.mxu0 %v1666
      %1969 = vmatpush.msra.mxu0 %v1659
      %1970 = vmatpush.msra.mxu0 %v1603
      %1971 = vmatpush.msra.mxu0 %v1596
      %1972 = vmatpush.msra.mxu0 %v1540
      %1973 = vmatpush.msra.mxu0 %v1533
      %1974 = vmatpush.msra.mxu0 %v1477
      %1975 = vmatpush.msra.mxu0 %v1470
      %1976 = vmatpush.msra.mxu0 %v1415
      %1977 = vmatpush.msra.mxu0 %v1408
      %1978 = vmatpush.msra.mxu0 %v1353
      %1979 = vmatpush.msra.mxu0 %v1346
      %1980 = vmatpush.msra.mxu0 %v1290
      %1981 = vmatpush.msra.mxu0 %v1283
      %1982 = vmatpush.msra.mxu0 %v1227
      %1983 = vmatpush.msra.mxu0 %v1219
      %1984 = vmatmul.f32.gmra.mxu0 %v1749
      %v1985 = vpop.f32.mrf.mxu0
      %v1986 = vadd.f32 %v1764, %v1985
      %1987 = vmatmul.f32.gmra.mxu0 %v1751
      %v1988 = vpop.f32.mrf.mxu0
      %v1989 = vadd.f32 %v1769, %v1988
      %1990 = vmatmul.f32.gmra.mxu0 %v1753
      %v1991 = vpop.f32.mrf.mxu0
      %v1992 = vadd.f32 %v1774, %v1991
      %1993 = vmatmul.f32.gmra.mxu0 %v1755
      %v1994 = vpop.f32.mrf.mxu0
      %v1995 = vadd.f32 %v1779, %v1994
      %1996 = vdwg.mxu0
      %1997 = vmatpush.msra.mxu0 0.0
      %1998 = vmatpush.msra.mxu0 0.0
      %1999 = vmatpush.msra.mxu0 0.0
      %2000 = vmatpush.msra.mxu0 0.0
      %2001 = vmatpush.msra.mxu0 0.0
      %2002 = vmatpush.msra.mxu0 0.0
      %2003 = vmatpush.msra.mxu0 0.0
      %2004 = vmatpush.msra.mxu0 0.0
      %2005 = vmatpush.msra.mxu0 0.0
      %2006 = vmatpush.msra.mxu0 0.0
      %2007 = vmatpush.msra.mxu0 0.0
      %2008 = vmatpush.msra.mxu0 0.0
      %2009 = vmatpush.msra.mxu0 0.0
      %2010 = vmatpush.msra.mxu0 0.0
      %2011 = vmatpush.msra.mxu0 %v1729
      %2012 = vmatpush.msra.mxu0 %v1722
      %2013 = vmatmul.f32.gmra.mxu0 %v1783
      %v2014 = vpop.f32.mrf.mxu0
      %v2015 = vadd.f32 %v1986, %v2014
      %2016 = vmatmul.f32.gmra.mxu0 %v1786
      %v2017 = vpop.f32.mrf.mxu0
      %v2018 = vadd.f32 %v1989, %v2017
      %2019 = vmatmul.f32.gmra.mxu0 %v1789
      %v2020 = vpop.f32.mrf.mxu0
      %v2021 = vadd.f32 %v1992, %v2020
      %2022 = vmatmul.f32.gmra.mxu0 %v1792
      %v2023 = vpop.f32.mrf.mxu0
      %v2024 = vadd.f32 %v1995, %v2023
      %2025 = vdwg.mxu0
      %2026 = vmatpush.msra.mxu0 %v1667
      %2027 = vmatpush.msra.mxu0 %v1660
      %2028 = vmatpush.msra.mxu0 %v1604
      %2029 = vmatpush.msra.mxu0 %v1597
      %2030 = vmatpush.msra.mxu0 %v1541
      %2031 = vmatpush.msra.mxu0 %v1534
      %2032 = vmatpush.msra.mxu0 %v1478
      %2033 = vmatpush.msra.mxu0 %v1471
      %2034 = vmatpush.msra.mxu0 %v1416
      %2035 = vmatpush.msra.mxu0 %v1409
      %2036 = vmatpush.msra.mxu0 %v1354
      %2037 = vmatpush.msra.mxu0 %v1347
      %2038 = vmatpush.msra.mxu0 %v1291
      %2039 = vmatpush.msra.mxu0 %v1284
      %2040 = vmatpush.msra.mxu0 %v1228
      %2041 = vmatpush.msra.mxu0 %v1220
      %2042 = vmatmul.f32.gmra.mxu0 %v1749
      %v2043 = vpop.f32.mrf.mxu0
      %v2044 = vadd.f32 %v1764, %v2043
      %2045 = vmatmul.f32.gmra.mxu0 %v1751
      %v2046 = vpop.f32.mrf.mxu0
      %v2047 = vadd.f32 %v1769, %v2046
      %2048 = vmatmul.f32.gmra.mxu0 %v1753
      %v2049 = vpop.f32.mrf.mxu0
      %v2050 = vadd.f32 %v1774, %v2049
      %2051 = vmatmul.f32.gmra.mxu0 %v1755
      %v2052 = vpop.f32.mrf.mxu0
      %v2053 = vadd.f32 %v1779, %v2052
      %2054 = vdwg.mxu0
      %2055 = vmatpush.msra.mxu0 0.0
      %2056 = vmatpush.msra.mxu0 0.0
      %2057 = vmatpush.msra.mxu0 0.0
      %2058 = vmatpush.msra.mxu0 0.0
      %2059 = vmatpush.msra.mxu0 0.0
      %2060 = vmatpush.msra.mxu0 0.0
      %2061 = vmatpush.msra.mxu0 0.0
      %2062 = vmatpush.msra.mxu0 0.0
      %2063 = vmatpush.msra.mxu0 0.0
      %2064 = vmatpush.msra.mxu0 0.0
      %2065 = vmatpush.msra.mxu0 0.0
      %2066 = vmatpush.msra.mxu0 0.0
      %2067 = vmatpush.msra.mxu0 0.0
      %2068 = vmatpush.msra.mxu0 0.0
      %2069 = vmatpush.msra.mxu0 %v1730
      %2070 = vmatpush.msra.mxu0 %v1723
      %2071 = vmatmul.f32.gmra.mxu0 %v1783
      %v2072 = vpop.f32.mrf.mxu0
      %v2073 = vadd.f32 %v2044, %v2072
      %2074 = vmatmul.f32.gmra.mxu0 %v1786
      %v2075 = vpop.f32.mrf.mxu0
      %v2076 = vadd.f32 %v2047, %v2075
      %2077 = vmatmul.f32.gmra.mxu0 %v1789
      %v2078 = vpop.f32.mrf.mxu0
      %v2079 = vadd.f32 %v2050, %v2078
      %2080 = vmatmul.f32.gmra.mxu0 %v1792
      %v2081 = vpop.f32.mrf.mxu0
      %v2082 = vadd.f32 %v2053, %v2081
      %2083 = vdwg.mxu0
      %2084 = vmatpush.msra.mxu0 %v1668
      %2085 = vmatpush.msra.mxu0 %v1661
      %2086 = vmatpush.msra.mxu0 %v1605
      %2087 = vmatpush.msra.mxu0 %v1598
      %2088 = vmatpush.msra.mxu0 %v1542
      %2089 = vmatpush.msra.mxu0 %v1535
      %2090 = vmatpush.msra.mxu0 %v1479
      %2091 = vmatpush.msra.mxu0 %v1472
      %2092 = vmatpush.msra.mxu0 %v1417
      %2093 = vmatpush.msra.mxu0 %v1410
      %2094 = vmatpush.msra.mxu0 %v1355
      %2095 = vmatpush.msra.mxu0 %v1348
      %2096 = vmatpush.msra.mxu0 %v1292
      %2097 = vmatpush.msra.mxu0 %v1285
      %2098 = vmatpush.msra.mxu0 %v1229
      %2099 = vmatpush.msra.mxu0 %v1221
      %2100 = vmatmul.f32.gmra.mxu0 %v1749
      %v2101 = vpop.f32.mrf.mxu0
      %v2102 = vadd.f32 %v1764, %v2101
      %2103 = vmatmul.f32.gmra.mxu0 %v1751
      %v2104 = vpop.f32.mrf.mxu0
      %v2105 = vadd.f32 %v1769, %v2104
      %2106 = vmatmul.f32.gmra.mxu0 %v1753
      %v2107 = vpop.f32.mrf.mxu0
      %v2108 = vadd.f32 %v1774, %v2107
      %2109 = vmatmul.f32.gmra.mxu0 %v1755
      %v2110 = vpop.f32.mrf.mxu0
      %v2111 = vadd.f32 %v1779, %v2110
      %2112 = vdwg.mxu0
      %2113 = vmatpush.msra.mxu0 0.0
      %2114 = vmatpush.msra.mxu0 0.0
      %2115 = vmatpush.msra.mxu0 0.0
      %2116 = vmatpush.msra.mxu0 0.0
      %2117 = vmatpush.msra.mxu0 0.0
      %2118 = vmatpush.msra.mxu0 0.0
      %2119 = vmatpush.msra.mxu0 0.0
      %2120 = vmatpush.msra.mxu0 0.0
      %2121 = vmatpush.msra.mxu0 0.0
      %2122 = vmatpush.msra.mxu0 0.0
      %2123 = vmatpush.msra.mxu0 0.0
      %2124 = vmatpush.msra.mxu0 0.0
      %2125 = vmatpush.msra.mxu0 0.0
      %2126 = vmatpush.msra.mxu0 0.0
      %2127 = vmatpush.msra.mxu0 %v1731
      %2128 = vmatpush.msra.mxu0 %v1724
      %2129 = vmatmul.f32.gmra.mxu0 %v1783
      %v2130 = vpop.f32.mrf.mxu0
      %v2131 = vadd.f32 %v2102, %v2130
      %2132 = vmatmul.f32.gmra.mxu0 %v1786
      %v2133 = vpop.f32.mrf.mxu0
      %v2134 = vadd.f32 %v2105, %v2133
      %2135 = vmatmul.f32.gmra.mxu0 %v1789
      %v2136 = vpop.f32.mrf.mxu0
      %v2137 = vadd.f32 %v2108, %v2136
      %2138 = vmatmul.f32.gmra.mxu0 %v1792
      %v2139 = vpop.f32.mrf.mxu0
      %v2140 = vadd.f32 %v2111, %v2139
      %2141 = vdwg.mxu0
      %2142 = vmatpush.msra.mxu0 %v1669
      %2143 = vmatpush.msra.mxu0 %v1662
      %2144 = vmatpush.msra.mxu0 %v1606
      %2145 = vmatpush.msra.mxu0 %v1599
      %2146 = vmatpush.msra.mxu0 %v1543
      %2147 = vmatpush.msra.mxu0 %v1536
      %2148 = vmatpush.msra.mxu0 %v1480
      %2149 = vmatpush.msra.mxu0 %v1473
      %2150 = vmatpush.msra.mxu0 %v1418
      %2151 = vmatpush.msra.mxu0 %v1411
      %2152 = vmatpush.msra.mxu0 %v1356
      %2153 = vmatpush.msra.mxu0 %v1349
      %2154 = vmatpush.msra.mxu0 %v1293
      %2155 = vmatpush.msra.mxu0 %v1286
      %2156 = vmatpush.msra.mxu0 %v1230
      %2157 = vmatpush.msra.mxu0 %v1222
      %2158 = vmatmul.f32.gmra.mxu0 %v1749
      %v2159 = vpop.f32.mrf.mxu0
      %v2160 = vadd.f32 %v1764, %v2159
      %2161 = vmatmul.f32.gmra.mxu0 %v1751
      %v2162 = vpop.f32.mrf.mxu0
      %v2163 = vadd.f32 %v1769, %v2162
      %2164 = vmatmul.f32.gmra.mxu0 %v1753
      %v2165 = vpop.f32.mrf.mxu0
      %v2166 = vadd.f32 %v1774, %v2165
      %2167 = vmatmul.f32.gmra.mxu0 %v1755
      %v2168 = vpop.f32.mrf.mxu0
      %v2169 = vadd.f32 %v1779, %v2168
      %2170 = vdwg.mxu0
      %2171 = vmatpush.msra.mxu0 0.0
      %2172 = vmatpush.msra.mxu0 0.0
      %2173 = vmatpush.msra.mxu0 0.0
      %2174 = vmatpush.msra.mxu0 0.0
      %2175 = vmatpush.msra.mxu0 0.0
      %2176 = vmatpush.msra.mxu0 0.0
      %2177 = vmatpush.msra.mxu0 0.0
      %2178 = vmatpush.msra.mxu0 0.0
      %2179 = vmatpush.msra.mxu0 0.0
      %2180 = vmatpush.msra.mxu0 0.0
      %2181 = vmatpush.msra.mxu0 0.0
      %2182 = vmatpush.msra.mxu0 0.0
      %2183 = vmatpush.msra.mxu0 0.0
      %2184 = vmatpush.msra.mxu0 0.0
      %2185 = vmatpush.msra.mxu0 %v1732
      %2186 = vmatpush.msra.mxu0 %v1725
      %2187 = vmatmul.f32.gmra.mxu0 %v1783
      %v2188 = vpop.f32.mrf.mxu0
      %v2189 = vadd.f32 %v2160, %v2188
      %2190 = vmatmul.f32.gmra.mxu0 %v1786
      %v2191 = vpop.f32.mrf.mxu0
      %v2192 = vadd.f32 %v2163, %v2191
      %2193 = vmatmul.f32.gmra.mxu0 %v1789
      %v2194 = vpop.f32.mrf.mxu0
      %v2195 = vadd.f32 %v2166, %v2194
      %2196 = vmatmul.f32.gmra.mxu0 %v1792
      %v2197 = vpop.f32.mrf.mxu0
      %v2198 = vadd.f32 %v2169, %v2197
      %2199 = vdwg.mxu0
      %2200 = vmatpush.msra.mxu0 %v1654
      %2201 = vmatpush.msra.mxu0 %v1638
      %2202 = vmatpush.msra.mxu0 %v1591
      %2203 = vmatpush.msra.mxu0 %v1575
      %2204 = vmatpush.msra.mxu0 %v1528
      %2205 = vmatpush.msra.mxu0 %v1512
      %2206 = vmatpush.msra.mxu0 %v1466
      %2207 = vmatpush.msra.mxu0 %v1450
      %2208 = vmatpush.msra.mxu0 %v1404
      %2209 = vmatpush.msra.mxu0 %v1388
      %2210 = vmatpush.msra.mxu0 %v1341
      %2211 = vmatpush.msra.mxu0 %v1325
      %2212 = vmatpush.msra.mxu0 %v1279
      %2213 = vmatpush.msra.mxu0 %v1263
      %2214 = vmatpush.msra.mxu0 %v1231
      %2215 = vmatpush.msra.mxu0 %v1223
      %2216 = vmatmul.f32.gmra.mxu0 %v1749
      %v2217 = vpop.f32.mrf.mxu0
      %v2218 = vadd.f32 %v1764, %v2217
      %2219 = vmatmul.f32.gmra.mxu0 %v1751
      %v2220 = vpop.f32.mrf.mxu0
      %v2221 = vadd.f32 %v1769, %v2220
      %2222 = vmatmul.f32.gmra.mxu0 %v1753
      %v2223 = vpop.f32.mrf.mxu0
      %v2224 = vadd.f32 %v1774, %v2223
      %2225 = vmatmul.f32.gmra.mxu0 %v1755
      %v2226 = vpop.f32.mrf.mxu0
      %v2227 = vadd.f32 %v1779, %v2226
      %2228 = vdwg.mxu0
      %2229 = vmatpush.msra.mxu0 0.0
      %2230 = vmatpush.msra.mxu0 0.0
      %2231 = vmatpush.msra.mxu0 0.0
      %2232 = vmatpush.msra.mxu0 0.0
      %2233 = vmatpush.msra.mxu0 0.0
      %2234 = vmatpush.msra.mxu0 0.0
      %2235 = vmatpush.msra.mxu0 0.0
      %2236 = vmatpush.msra.mxu0 0.0
      %2237 = vmatpush.msra.mxu0 0.0
      %2238 = vmatpush.msra.mxu0 0.0
      %2239 = vmatpush.msra.mxu0 0.0
      %2240 = vmatpush.msra.mxu0 0.0
      %2241 = vmatpush.msra.mxu0 0.0
      %2242 = vmatpush.msra.mxu0 0.0
      %2243 = vmatpush.msra.mxu0 %v1717
      %2244 = vmatpush.msra.mxu0 %v1701
      %2245 = vmatmul.f32.gmra.mxu0 %v1783
      %v2246 = vpop.f32.mrf.mxu0
      %v2247 = vadd.f32 %v2218, %v2246
      %2248 = vmatmul.f32.gmra.mxu0 %v1786
      %v2249 = vpop.f32.mrf.mxu0
      %v2250 = vadd.f32 %v2221, %v2249
      %2251 = vmatmul.f32.gmra.mxu0 %v1789
      %v2252 = vpop.f32.mrf.mxu0
      %v2253 = vadd.f32 %v2224, %v2252
      %2254 = vmatmul.f32.gmra.mxu0 %v1792
      %v2255 = vpop.f32.mrf.mxu0
      %v2256 = vadd.f32 %v2227, %v2255
      %2257 = vdwg.mxu0
      %v2258 = vmax.f32 %v1841, 0.0
      %v2259 = vmax.f32 %v1899, 0.0
      %v2260 = vmax.f32 %v1957, 0.0
      %v2261 = vmax.f32 %v2015, 0.0
      %v2262 = vmax.f32 %v2073, 0.0
      %v2263 = vmax.f32 %v2131, 0.0
      %v2264 = vmax.f32 %v2189, 0.0
      %v2265 = vmax.f32 %v2247, 0.0
      %v2266 = vmax.f32 %v1844, 0.0
      %v2267 = vmax.f32 %v1902, 0.0
      %v2268 = vmax.f32 %v1960, 0.0
      %v2269 = vmax.f32 %v2018, 0.0
      %v2270 = vmax.f32 %v2076, 0.0
      %v2271 = vmax.f32 %v2134, 0.0
      %v2272 = vmax.f32 %v2192, 0.0
      %v2273 = vmax.f32 %v2250, 0.0
      %v2274 = vmax.f32 %v1847, 0.0
      %v2275 = vmax.f32 %v1905, 0.0
      %v2276 = vmax.f32 %v1963, 0.0
      %v2277 = vmax.f32 %v2021, 0.0
      %v2278 = vmax.f32 %v2079, 0.0
      %v2279 = vmax.f32 %v2137, 0.0
      %v2280 = vmax.f32 %v2195, 0.0
      %v2281 = vmax.f32 %v2253, 0.0
      %v2282 = vmax.f32 %v1850, 0.0
      %v2283 = vmax.f32 %v1908, 0.0
      %v2284 = vmax.f32 %v1966, 0.0
      %v2285 = vmax.f32 %v2024, 0.0
      %v2286 = vmax.f32 %v2082, 0.0
      %v2287 = vmax.f32 %v2140, 0.0
      %v2288 = vmax.f32 %v2198, 0.0
      %v2289 = vmax.f32 %v2256, 0.0
      %2322 = vrot.lane.b32.xlu0 %v2258, 126
      %v2323 = vpop.permute.xlu0 %2322
      %2324 = vrot.lane.b32.xlu0 %v2259, 126
      %v2325 = vpop.permute.xlu0 %2324
      %2326 = vrot.lane.b32.xlu0 %v2260, 126
      %v2327 = vpop.permute.xlu0 %2326
      %2328 = vrot.lane.b32.xlu0 %v2261, 126
      %v2329 = vpop.permute.xlu0 %2328
      %2330 = vrot.lane.b32.xlu0 %v2262, 126
      %v2331 = vpop.permute.xlu0 %2330
      %2332 = vrot.lane.b32.xlu0 %v2263, 126
      %v2333 = vpop.permute.xlu0 %2332
      %2334 = vrot.lane.b32.xlu0 %v2264, 126
      %v2335 = vpop.permute.xlu0 %2334
      %2336 = vrot.lane.b32.xlu0 %v2265, 126
      %v2337 = vpop.permute.xlu0 %2336
      %2338 = vrot.lane.b32.xlu0 %v2266, 126
      %v2339 = vpop.permute.xlu0 %2338
      %2340 = vrot.lane.b32.xlu0 %v2267, 126
      %v2341 = vpop.permute.xlu0 %2340
      %2342 = vrot.lane.b32.xlu0 %v2268, 126
      %v2343 = vpop.permute.xlu0 %2342
      %2344 = vrot.lane.b32.xlu0 %v2269, 126
      %v2345 = vpop.permute.xlu0 %2344
      %2346 = vrot.lane.b32.xlu0 %v2270, 126
      %v2347 = vpop.permute.xlu0 %2346
      %2348 = vrot.lane.b32.xlu0 %v2271, 126
      %v2349 = vpop.permute.xlu0 %2348
      %2350 = vrot.lane.b32.xlu0 %v2272, 126
      %v2351 = vpop.permute.xlu0 %2350
      %2352 = vrot.lane.b32.xlu0 %v2273, 126
      %v2353 = vpop.permute.xlu0 %2352
      %2354 = vrot.lane.b32.xlu0 %v2274, 126
      %v2355 = vpop.permute.xlu0 %2354
      %2356 = vrot.lane.b32.xlu0 %v2275, 126
      %v2357 = vpop.permute.xlu0 %2356
      %2358 = vrot.lane.b32.xlu0 %v2276, 126
      %v2359 = vpop.permute.xlu0 %2358
      %2360 = vrot.lane.b32.xlu0 %v2277, 126
      %v2361 = vpop.permute.xlu0 %2360
      %2362 = vrot.lane.b32.xlu0 %v2278, 126
      %v2363 = vpop.permute.xlu0 %2362
      %2364 = vrot.lane.b32.xlu0 %v2279, 126
      %v2365 = vpop.permute.xlu0 %2364
      %2366 = vrot.lane.b32.xlu0 %v2280, 126
      %v2367 = vpop.permute.xlu0 %2366
      %2368 = vrot.lane.b32.xlu0 %v2281, 126
      %v2369 = vpop.permute.xlu0 %2368
      %2370 = vrot.lane.b32.xlu0 %v2282, 126
      %v2371 = vpop.permute.xlu0 %2370
      %2372 = vrot.lane.b32.xlu0 %v2283, 126
      %v2373 = vpop.permute.xlu0 %2372
      %2374 = vrot.lane.b32.xlu0 %v2284, 126
      %v2375 = vpop.permute.xlu0 %2374
      %2376 = vrot.lane.b32.xlu0 %v2285, 126
      %v2377 = vpop.permute.xlu0 %2376
      %2378 = vrot.lane.b32.xlu0 %v2286, 126
      %v2379 = vpop.permute.xlu0 %2378
      %2380 = vrot.lane.b32.xlu0 %v2287, 126
      %v2381 = vpop.permute.xlu0 %2380
      %2382 = vrot.lane.b32.xlu0 %v2288, 126
      %v2383 = vpop.permute.xlu0 %2382
      %2384 = vrot.lane.b32.xlu0 %v2289, 126
      %v2385 = vpop.permute.xlu0 %2384
      %v2386 = vsel %vm559, %v2323, %v2325
      %v2387 = vsel %vm559, %v2325, %v2327
      %v2388 = vsel %vm559, %v2327, %v2329
      %v2389 = vsel %vm559, %v2329, %v2331
      %v2390 = vsel %vm559, %v2331, %v2333
      %v2391 = vsel %vm559, %v2333, %v2335
      %v2392 = vsel %vm559, %v2335, %v2337
      %v2393 = vsel %vm559, %v2339, %v2341
      %v2394 = vsel %vm559, %v2341, %v2343
      %v2395 = vsel %vm559, %v2343, %v2345
      %v2396 = vsel %vm559, %v2345, %v2347
      %v2397 = vsel %vm559, %v2347, %v2349
      %v2398 = vsel %vm559, %v2349, %v2351
      %v2399 = vsel %vm559, %v2351, %v2353
      %v2400 = vsel %vm559, %v2355, %v2357
      %v2401 = vsel %vm559, %v2357, %v2359
      %v2402 = vsel %vm559, %v2359, %v2361
      %v2403 = vsel %vm559, %v2361, %v2363
      %v2404 = vsel %vm559, %v2363, %v2365
      %v2405 = vsel %vm559, %v2365, %v2367
      %v2406 = vsel %vm559, %v2367, %v2369
      %v2407 = vsel %vm559, %v2371, %v2373
      %v2408 = vsel %vm559, %v2373, %v2375
      %v2409 = vsel %vm559, %v2375, %v2377
      %v2410 = vsel %vm559, %v2377, %v2379
      %v2411 = vsel %vm559, %v2379, %v2381
      %v2412 = vsel %vm559, %v2381, %v2383
      %v2413 = vsel %vm559, %v2383, %v2385
      %v2446 = vmax.f32 %v2258, %v2386
      %v2447 = vmax.f32 %v2259, %v2387
      %v2448 = vmax.f32 %v2260, %v2388
      %v2449 = vmax.f32 %v2261, %v2389
      %v2450 = vmax.f32 %v2262, %v2390
      %v2451 = vmax.f32 %v2263, %v2391
      %v2452 = vmax.f32 %v2264, %v2392
      %v2453 = vmax.f32 %v2265, %v2337
      %v2454 = vmax.f32 %v2266, %v2393
      %v2455 = vmax.f32 %v2267, %v2394
      %v2456 = vmax.f32 %v2268, %v2395
      %v2457 = vmax.f32 %v2269, %v2396
      %v2458 = vmax.f32 %v2270, %v2397
      %v2459 = vmax.f32 %v2271, %v2398
      %v2460 = vmax.f32 %v2272, %v2399
      %v2461 = vmax.f32 %v2273, %v2353
      %v2462 = vmax.f32 %v2274, %v2400
      %v2463 = vmax.f32 %v2275, %v2401
      %v2464 = vmax.f32 %v2276, %v2402
      %v2465 = vmax.f32 %v2277, %v2403
      %v2466 = vmax.f32 %v2278, %v2404
      %v2467 = vmax.f32 %v2279, %v2405
      %v2468 = vmax.f32 %v2280, %v2406
      %v2469 = vmax.f32 %v2281, %v2369
      %v2470 = vmax.f32 %v2282, %v2407
      %v2471 = vmax.f32 %v2283, %v2408
      %v2472 = vmax.f32 %v2284, %v2409
      %v2473 = vmax.f32 %v2285, %v2410
      %v2474 = vmax.f32 %v2286, %v2411
      %v2475 = vmax.f32 %v2287, %v2412
      %v2476 = vmax.f32 %v2288, %v2413
      %v2477 = vmax.f32 %v2289, %v2385
      %2510 = vrot.lane.b32.xlu0 %v2446, 96
      %v2511 = vpop.permute.xlu0 %2510
      %2512 = vrot.lane.b32.xlu0 %v2447, 96
      %v2513 = vpop.permute.xlu0 %2512
      %2514 = vrot.lane.b32.xlu0 %v2448, 96
      %v2515 = vpop.permute.xlu0 %2514
      %2516 = vrot.lane.b32.xlu0 %v2449, 96
      %v2517 = vpop.permute.xlu0 %2516
      %2518 = vrot.lane.b32.xlu0 %v2450, 96
      %v2519 = vpop.permute.xlu0 %2518
      %2520 = vrot.lane.b32.xlu0 %v2451, 96
      %v2521 = vpop.permute.xlu0 %2520
      %2522 = vrot.lane.b32.xlu0 %v2452, 96
      %v2523 = vpop.permute.xlu0 %2522
      %2524 = vrot.lane.b32.xlu0 %v2453, 96
      %v2525 = vpop.permute.xlu0 %2524
      %2526 = vrot.lane.b32.xlu0 %v2454, 96
      %v2527 = vpop.permute.xlu0 %2526
      %2528 = vrot.lane.b32.xlu0 %v2455, 96
      %v2529 = vpop.permute.xlu0 %2528
      %2530 = vrot.lane.b32.xlu0 %v2456, 96
      %v2531 = vpop.permute.xlu0 %2530
      %2532 = vrot.lane.b32.xlu0 %v2457, 96
      %v2533 = vpop.permute.xlu0 %2532
      %2534 = vrot.lane.b32.xlu0 %v2458, 96
      %v2535 = vpop.permute.xlu0 %2534
      %2536 = vrot.lane.b32.xlu0 %v2459, 96
      %v2537 = vpop.permute.xlu0 %2536
      %2538 = vrot.lane.b32.xlu0 %v2460, 96
      %v2539 = vpop.permute.xlu0 %2538
      %2540 = vrot.lane.b32.xlu0 %v2461, 96
      %v2541 = vpop.permute.xlu0 %2540
      %2542 = vrot.lane.b32.xlu0 %v2462, 96
      %v2543 = vpop.permute.xlu0 %2542
      %2544 = vrot.lane.b32.xlu0 %v2463, 96
      %v2545 = vpop.permute.xlu0 %2544
      %2546 = vrot.lane.b32.xlu0 %v2464, 96
      %v2547 = vpop.permute.xlu0 %2546
      %2548 = vrot.lane.b32.xlu0 %v2465, 96
      %v2549 = vpop.permute.xlu0 %2548
      %2550 = vrot.lane.b32.xlu0 %v2466, 96
      %v2551 = vpop.permute.xlu0 %2550
      %2552 = vrot.lane.b32.xlu0 %v2467, 96
      %v2553 = vpop.permute.xlu0 %2552
      %2554 = vrot.lane.b32.xlu0 %v2468, 96
      %v2555 = vpop.permute.xlu0 %2554
      %2556 = vrot.lane.b32.xlu0 %v2469, 96
      %v2557 = vpop.permute.xlu0 %2556
      %2558 = vrot.lane.b32.xlu0 %v2470, 96
      %v2559 = vpop.permute.xlu0 %2558
      %2560 = vrot.lane.b32.xlu0 %v2471, 96
      %v2561 = vpop.permute.xlu0 %2560
      %2562 = vrot.lane.b32.xlu0 %v2472, 96
      %v2563 = vpop.permute.xlu0 %2562
      %2564 = vrot.lane.b32.xlu0 %v2473, 96
      %v2565 = vpop.permute.xlu0 %2564
      %2566 = vrot.lane.b32.xlu0 %v2474, 96
      %v2567 = vpop.permute.xlu0 %2566
      %2568 = vrot.lane.b32.xlu0 %v2475, 96
      %v2569 = vpop.permute.xlu0 %2568
      %2570 = vrot.lane.b32.xlu0 %v2476, 96
      %v2571 = vpop.permute.xlu0 %2570
      %2572 = vrot.lane.b32.xlu0 %v2477, 96
      %v2573 = vpop.permute.xlu0 %2572
      %v2574 = vsel %vm687, %v2511, %v2513
      %v2575 = vsel %vm687, %v2513, %v2515
      %v2576 = vsel %vm687, %v2515, %v2517
      %v2577 = vsel %vm687, %v2517, %v2519
      %v2578 = vsel %vm687, %v2519, %v2521
      %v2579 = vsel %vm687, %v2521, %v2523
      %v2580 = vsel %vm687, %v2523, %v2525
      %v2581 = vsel %vm687, %v2527, %v2529
      %v2582 = vsel %vm687, %v2529, %v2531
      %v2583 = vsel %vm687, %v2531, %v2533
      %v2584 = vsel %vm687, %v2533, %v2535
      %v2585 = vsel %vm687, %v2535, %v2537
      %v2586 = vsel %vm687, %v2537, %v2539
      %v2587 = vsel %vm687, %v2539, %v2541
      %v2588 = vsel %vm687, %v2543, %v2545
      %v2589 = vsel %vm687, %v2545, %v2547
      %v2590 = vsel %vm687, %v2547, %v2549
      %v2591 = vsel %vm687, %v2549, %v2551
      %v2592 = vsel %vm687, %v2551, %v2553
      %v2593 = vsel %vm687, %v2553, %v2555
      %v2594 = vsel %vm687, %v2555, %v2557
      %v2595 = vsel %vm687, %v2559, %v2561
      %v2596 = vsel %vm687, %v2561, %v2563
      %v2597 = vsel %vm687, %v2563, %v2565
      %v2598 = vsel %vm687, %v2565, %v2567
      %v2599 = vsel %vm687, %v2567, %v2569
      %v2600 = vsel %vm687, %v2569, %v2571
      %v2601 = vsel %vm687, %v2571, %v2573
      %v2630 = vmax.f32 %v2446, %v2574
      %v2631 = vmax.f32 %v2447, %v2575
      %v2632 = vmax.f32 %v2448, %v2576
      %v2633 = vmax.f32 %v2449, %v2577
      %v2634 = vmax.f32 %v2450, %v2578
      %v2635 = vmax.f32 %v2451, %v2579
      %v2636 = vmax.f32 %v2452, %v2580
      %v2637 = vmax.f32 %v2454, %v2581
      %v2638 = vmax.f32 %v2455, %v2582
      %v2639 = vmax.f32 %v2456, %v2583
      %v2640 = vmax.f32 %v2457, %v2584
      %v2641 = vmax.f32 %v2458, %v2585
      %v2642 = vmax.f32 %v2459, %v2586
      %v2643 = vmax.f32 %v2460, %v2587
      %v2644 = vmax.f32 %v2462, %v2588
      %v2645 = vmax.f32 %v2463, %v2589
      %v2646 = vmax.f32 %v2464, %v2590
      %v2647 = vmax.f32 %v2465, %v2591
      %v2648 = vmax.f32 %v2466, %v2592
      %v2649 = vmax.f32 %v2467, %v2593
      %v2650 = vmax.f32 %v2468, %v2594
      %v2651 = vmax.f32 %v2470, %v2595
      %v2652 = vmax.f32 %v2471, %v2596
      %v2653 = vmax.f32 %v2472, %v2597
      %v2654 = vmax.f32 %v2473, %v2598
      %v2655 = vmax.f32 %v2474, %v2599
      %v2656 = vmax.f32 %v2475, %v2600
      %v2657 = vmax.f32 %v2476, %v2601
      %v2658 = vlaneseq
      %v2659 = vshrl.u32 %v2658, 7
      %v2660 = vadd.s32 %v2659, 8
      %v2661 = vadd.s32 %v2659, 16
      %v2662 = vadd.s32 %v2659, 24
      %v2663 = vadd.s32 %v2659, 32
      %v2664 = vadd.s32 %v2659, 40
      %v2665 = vadd.s32 %v2659, 48
      %v2666 = vadd.s32 %v2659, 56
      %v2667 = vadd.s32 %v2659, 64
      %v2668 = vadd.s32 %v2659, 72
      %v2669 = vadd.s32 %v2659, 80
      %v2670 = vadd.s32 %v2659, 88
      %v2671 = vadd.s32 %v2659, 96
      %v2672 = vadd.s32 %v2659, 104
      %v2673 = vadd.s32 %v2659, 112
      %v2674 = vadd.s32 %v2659, 120
      %v2675 = vadd.s32 %v2659, 128
      %v2676 = vadd.s32 %v2659, 136
      %v2677 = vadd.s32 %v2659, 144
      %v2678 = vadd.s32 %v2659, 152
      %v2679 = vadd.s32 %v2659, 160
      %v2680 = vadd.s32 %v2659, 168
      %v2681 = vadd.s32 %v2659, 176
      %v2682 = vadd.s32 %v2659, 184
      %v2683 = vadd.s32 %v2659, 192
      %v2684 = vadd.s32 %v2659, 200
      %v2685 = vadd.s32 %v2659, 208
      %v2686 = vadd.s32 %v2659, 216
      %v2687 = vadd.s32 %v2659, 224
      %v2688 = vadd.s32 %v2659, 232
      %v2689 = vadd.s32 %v2659, 240
      %v2690 = vadd.s32 %v2659, 248
      %v2691 = vadd.s32 %v2659, 256
      %v2692 = vadd.s32 %v2659, 264
      %v2693 = vadd.s32 %v2659, 272
      %v2694 = vadd.s32 %v2659, 280
      %v2695 = vadd.s32 %v2659, 288
      %v2696 = vadd.s32 %v2659, 296
      %v2697 = vadd.s32 %v2659, 304
      %v2698 = vadd.s32 %v2659, 312
      %v2699 = vadd.s32 %v2659, 320
      %v2700 = vadd.s32 %v2659, 328
      %v2701 = vadd.s32 %v2659, 336
      %v2702 = vadd.s32 %v2659, 344
      %v2703 = vadd.s32 %v2659, 352
      %v2704 = vadd.s32 %v2659, 360
      %v2705 = vadd.s32 %v2659, 368
      %v2706 = vadd.s32 %v2659, 376
      %v2707 = vadd.s32 %v2659, 384
      %v2708 = vadd.s32 %v2659, 392
      %v2709 = vadd.s32 %v2659, 400
      %v2710 = vadd.s32 %v2659, 408
      %v2711 = vadd.s32 %v2659, 416
      %v2712 = vadd.s32 %v2659, 424
      %v2713 = vadd.s32 %v2659, 432
      %v2714 = vadd.s32 %v2659, 440
      %v2715 = vadd.s32 %v2659, 448
      %v2716 = vadd.s32 %v2659, 456
      %v2717 = vadd.s32 %v2659, 464
      %v2718 = vadd.s32 %v2659, 472
      %v2719 = vadd.s32 %v2659, 480
      %v2720 = vadd.s32 %v2659, 488
      %v2721 = vadd.s32 %v2659, 496
      %v2722 = vadd.s32 %v2659, 504
      %v2723 = vadd.s32 %v2659, 512
      %v2724 = vadd.s32 %v2659, 520
      %v2725 = vadd.s32 %v2659, 528
      %v2726 = vadd.s32 %v2659, 536
      %v2727 = vadd.s32 %v2659, 544
      %v2728 = vadd.s32 %v2659, 552
      %v2729 = vadd.s32 %v2659, 560
      %v2730 = vadd.s32 %v2659, 568
      %v2731 = vadd.s32 %v2659, 576
      %v2732 = vadd.s32 %v2659, 584
      %v2733 = vadd.s32 %v2659, 592
      %v2734 = vadd.s32 %v2659, 600
      %v2735 = vadd.s32 %v2659, 608
      %v2736 = vadd.s32 %v2659, 616
      %v2737 = vadd.s32 %v2659, 624
      %v2738 = vadd.s32 %v2659, 632
      %v2739 = vadd.s32 %v2659, 640
      %v2740 = vadd.s32 %v2659, 648
      %v2741 = vadd.s32 %v2659, 656
      %v2742 = vadd.s32 %v2659, 664
      %v2743 = vadd.s32 %v2659, 672
      %v2744 = vadd.s32 %v2659, 680
      %v2745 = vadd.s32 %v2659, 688
      %v2746 = vadd.s32 %v2659, 696
      %v2747 = vadd.s32 %v2659, 704
      %v2748 = vadd.s32 %v2659, 712
      %v2749 = vadd.s32 %v2659, 720
      %v2750 = vadd.s32 %v2659, 728
      %v2751 = vadd.s32 %v2659, 736
      %v2752 = vadd.s32 %v2659, 744
      %v2753 = vadd.s32 %v2659, 752
      %v2754 = vadd.s32 %v2659, 760
      %v2755 = vadd.s32 %v2659, 768
      %v2756 = vadd.s32 %v2659, 776
      %v2757 = vadd.s32 %v2659, 784
      %v2758 = vadd.s32 %v2659, 792
      %v2759 = vadd.s32 %v2659, 800
      %v2760 = vadd.s32 %v2659, 808
      %v2761 = vadd.s32 %v2659, 816
      %v2762 = vadd.s32 %v2659, 824
      %v2763 = vadd.s32 %v2659, 832
      %v2764 = vadd.s32 %v2659, 840
      %v2765 = vadd.s32 %v2659, 848
      %v2766 = vadd.s32 %v2659, 856
      %v2767 = vadd.s32 %v2659, 864
      %v2768 = vlaneseq
      %v2769 = vand.u32 %v2768, 127
      %v2770 = vmul.u32 %v2769, 256
      %v2771 = vsub.s32 %v2659, %v2770
      %v2772 = vsub.s32 %v2660, %v2770
      %v2773 = vsub.s32 %v2661, %v2770
      %v2774 = vsub.s32 %v2662, %v2770
      %v2775 = vsub.s32 %v2663, %v2770
      %v2776 = vsub.s32 %v2664, %v2770
      %v2777 = vsub.s32 %v2665, %v2770
      %v2778 = vsub.s32 %v2666, %v2770
      %v2779 = vsub.s32 %v2667, %v2770
      %v2780 = vsub.s32 %v2668, %v2770
      %v2781 = vsub.s32 %v2669, %v2770
      %v2782 = vsub.s32 %v2670, %v2770
      %v2783 = vsub.s32 %v2671, %v2770
      %v2784 = vsub.s32 %v2672, %v2770
      %v2785 = vsub.s32 %v2673, %v2770
      %v2786 = vsub.s32 %v2674, %v2770
      %v2787 = vsub.s32 %v2675, %v2770
      %v2788 = vsub.s32 %v2676, %v2770
      %v2789 = vsub.s32 %v2677, %v2770
      %v2790 = vsub.s32 %v2678, %v2770
      %v2791 = vsub.s32 %v2679, %v2770
      %v2792 = vsub.s32 %v2680, %v2770
      %v2793 = vsub.s32 %v2681, %v2770
      %v2794 = vsub.s32 %v2682, %v2770
      %v2795 = vsub.s32 %v2683, %v2770
      %v2796 = vsub.s32 %v2684, %v2770
      %v2797 = vsub.s32 %v2685, %v2770
      %v2798 = vsub.s32 %v2686, %v2770
      %v2799 = vsub.s32 %v2687, %v2770
      %v2800 = vsub.s32 %v2688, %v2770
      %v2801 = vsub.s32 %v2689, %v2770
      %v2802 = vsub.s32 %v2690, %v2770
      %v2803 = vsub.s32 %v2691, %v2770
      %v2804 = vsub.s32 %v2692, %v2770
      %v2805 = vsub.s32 %v2693, %v2770
      %v2806 = vsub.s32 %v2694, %v2770
      %v2807 = vsub.s32 %v2695, %v2770
      %v2808 = vsub.s32 %v2696, %v2770
      %v2809 = vsub.s32 %v2697, %v2770
      %v2810 = vsub.s32 %v2698, %v2770
      %v2811 = vsub.s32 %v2699, %v2770
      %v2812 = vsub.s32 %v2700, %v2770
      %v2813 = vsub.s32 %v2701, %v2770
      %v2814 = vsub.s32 %v2702, %v2770
      %v2815 = vsub.s32 %v2703, %v2770
      %v2816 = vsub.s32 %v2704, %v2770
      %v2817 = vsub.s32 %v2705, %v2770
      %v2818 = vsub.s32 %v2706, %v2770
      %v2819 = vsub.s32 %v2707, %v2770
      %v2820 = vsub.s32 %v2708, %v2770
      %v2821 = vsub.s32 %v2709, %v2770
      %v2822 = vsub.s32 %v2710, %v2770
      %v2823 = vsub.s32 %v2711, %v2770
      %v2824 = vsub.s32 %v2712, %v2770
      %v2825 = vsub.s32 %v2713, %v2770
      %v2826 = vsub.s32 %v2714, %v2770
      %v2827 = vsub.s32 %v2715, %v2770
      %v2828 = vsub.s32 %v2716, %v2770
      %v2829 = vsub.s32 %v2717, %v2770
      %v2830 = vsub.s32 %v2718, %v2770
      %v2831 = vsub.s32 %v2719, %v2770
      %v2832 = vsub.s32 %v2720, %v2770
      %v2833 = vsub.s32 %v2721, %v2770
      %v2834 = vsub.s32 %v2722, %v2770
      %v2835 = vsub.s32 %v2723, %v2770
      %v2836 = vsub.s32 %v2724, %v2770
      %v2837 = vsub.s32 %v2725, %v2770
      %v2838 = vsub.s32 %v2726, %v2770
      %v2839 = vsub.s32 %v2727, %v2770
      %v2840 = vsub.s32 %v2728, %v2770
      %v2841 = vsub.s32 %v2729, %v2770
      %v2842 = vsub.s32 %v2730, %v2770
      %v2843 = vsub.s32 %v2731, %v2770
      %v2844 = vsub.s32 %v2732, %v2770
      %v2845 = vsub.s32 %v2733, %v2770
      %v2846 = vsub.s32 %v2734, %v2770
      %v2847 = vsub.s32 %v2735, %v2770
      %v2848 = vsub.s32 %v2736, %v2770
      %v2849 = vsub.s32 %v2737, %v2770
      %v2850 = vsub.s32 %v2738, %v2770
      %v2851 = vsub.s32 %v2739, %v2770
      %v2852 = vsub.s32 %v2740, %v2770
      %v2853 = vsub.s32 %v2741, %v2770
      %v2854 = vsub.s32 %v2742, %v2770
      %v2855 = vsub.s32 %v2743, %v2770
      %v2856 = vsub.s32 %v2744, %v2770
      %v2857 = vsub.s32 %v2745, %v2770
      %v2858 = vsub.s32 %v2746, %v2770
      %v2859 = vsub.s32 %v2747, %v2770
      %v2860 = vsub.s32 %v2748, %v2770
      %v2861 = vsub.s32 %v2749, %v2770
      %v2862 = vsub.s32 %v2750, %v2770
      %v2863 = vsub.s32 %v2751, %v2770
      %v2864 = vsub.s32 %v2752, %v2770
      %v2865 = vsub.s32 %v2753, %v2770
      %v2866 = vsub.s32 %v2754, %v2770
      %v2867 = vsub.s32 %v2755, %v2770
      %v2868 = vsub.s32 %v2756, %v2770
      %v2869 = vsub.s32 %v2757, %v2770
      %v2870 = vsub.s32 %v2758, %v2770
      %v2871 = vsub.s32 %v2759, %v2770
      %v2872 = vsub.s32 %v2760, %v2770
      %v2873 = vsub.s32 %v2761, %v2770
      %v2874 = vsub.s32 %v2762, %v2770
      %v2875 = vsub.s32 %v2763, %v2770
      %v2876 = vsub.s32 %v2764, %v2770
      %v2877 = vsub.s32 %v2765, %v2770
      %v2878 = vsub.s32 %v2766, %v2770
      %v2879 = vsub.s32 %v2767, %v2770
      %vm2880 = vcmp.eq.s32.totalorder %v2771, 0
      %vm2881 = vcmp.eq.s32.totalorder %v2772, 0
      %vm2882 = vcmp.eq.s32.totalorder %v2773, 0
      %vm2883 = vcmp.eq.s32.totalorder %v2774, 0
      %vm2884 = vcmp.eq.s32.totalorder %v2775, 0
      %vm2885 = vcmp.eq.s32.totalorder %v2776, 0
      %vm2886 = vcmp.eq.s32.totalorder %v2777, 0
      %vm2887 = vcmp.eq.s32.totalorder %v2778, 0
      %vm2888 = vcmp.eq.s32.totalorder %v2779, 0
      %vm2889 = vcmp.eq.s32.totalorder %v2780, 0
      %vm2890 = vcmp.eq.s32.totalorder %v2781, 0
      %vm2891 = vcmp.eq.s32.totalorder %v2782, 0
      %vm2892 = vcmp.eq.s32.totalorder %v2783, 0
      %vm2893 = vcmp.eq.s32.totalorder %v2784, 0
      %vm2894 = vcmp.eq.s32.totalorder %v2785, 0
      %vm2895 = vcmp.eq.s32.totalorder %v2786, 0
      %vm2896 = vcmp.eq.s32.totalorder %v2787, 0
      %vm2897 = vcmp.eq.s32.totalorder %v2788, 0
      %vm2898 = vcmp.eq.s32.totalorder %v2789, 0
      %vm2899 = vcmp.eq.s32.totalorder %v2790, 0
      %vm2900 = vcmp.eq.s32.totalorder %v2791, 0
      %vm2901 = vcmp.eq.s32.totalorder %v2792, 0
      %vm2902 = vcmp.eq.s32.totalorder %v2793, 0
      %vm2903 = vcmp.eq.s32.totalorder %v2794, 0
      %vm2904 = vcmp.eq.s32.totalorder %v2795, 0
      %vm2905 = vcmp.eq.s32.totalorder %v2796, 0
      %vm2906 = vcmp.eq.s32.totalorder %v2797, 0
      %vm2907 = vcmp.eq.s32.totalorder %v2798, 0
      %vm2908 = vcmp.eq.s32.totalorder %v2799, 0
      %vm2909 = vcmp.eq.s32.totalorder %v2800, 0
      %vm2910 = vcmp.eq.s32.totalorder %v2801, 0
      %vm2911 = vcmp.eq.s32.totalorder %v2802, 0
      %vm2912 = vcmp.eq.s32.totalorder %v2803, 0
      %vm2913 = vcmp.eq.s32.totalorder %v2804, 0
      %vm2914 = vcmp.eq.s32.totalorder %v2805, 0
      %vm2915 = vcmp.eq.s32.totalorder %v2806, 0
      %vm2916 = vcmp.eq.s32.totalorder %v2807, 0
      %vm2917 = vcmp.eq.s32.totalorder %v2808, 0
      %vm2918 = vcmp.eq.s32.totalorder %v2809, 0
      %vm2919 = vcmp.eq.s32.totalorder %v2810, 0
      %vm2920 = vcmp.eq.s32.totalorder %v2811, 0
      %vm2921 = vcmp.eq.s32.totalorder %v2812, 0
      %vm2922 = vcmp.eq.s32.totalorder %v2813, 0
      %vm2923 = vcmp.eq.s32.totalorder %v2814, 0
      %vm2924 = vcmp.eq.s32.totalorder %v2815, 0
      %vm2925 = vcmp.eq.s32.totalorder %v2816, 0
      %vm2926 = vcmp.eq.s32.totalorder %v2817, 0
      %vm2927 = vcmp.eq.s32.totalorder %v2818, 0
      %vm2928 = vcmp.eq.s32.totalorder %v2819, 0
      %vm2929 = vcmp.eq.s32.totalorder %v2820, 0
      %vm2930 = vcmp.eq.s32.totalorder %v2821, 0
      %vm2931 = vcmp.eq.s32.totalorder %v2822, 0
      %vm2932 = vcmp.eq.s32.totalorder %v2823, 0
      %vm2933 = vcmp.eq.s32.totalorder %v2824, 0
      %vm2934 = vcmp.eq.s32.totalorder %v2825, 0
      %vm2935 = vcmp.eq.s32.totalorder %v2826, 0
      %vm2936 = vcmp.eq.s32.totalorder %v2827, 0
      %vm2937 = vcmp.eq.s32.totalorder %v2828, 0
      %vm2938 = vcmp.eq.s32.totalorder %v2829, 0
      %vm2939 = vcmp.eq.s32.totalorder %v2830, 0
      %vm2940 = vcmp.eq.s32.totalorder %v2831, 0
      %vm2941 = vcmp.eq.s32.totalorder %v2832, 0
      %vm2942 = vcmp.eq.s32.totalorder %v2833, 0
      %vm2943 = vcmp.eq.s32.totalorder %v2834, 0
      %vm2944 = vcmp.eq.s32.totalorder %v2835, 0
      %vm2945 = vcmp.eq.s32.totalorder %v2836, 0
      %vm2946 = vcmp.eq.s32.totalorder %v2837, 0
      %vm2947 = vcmp.eq.s32.totalorder %v2838, 0
      %vm2948 = vcmp.eq.s32.totalorder %v2839, 0
      %vm2949 = vcmp.eq.s32.totalorder %v2840, 0
      %vm2950 = vcmp.eq.s32.totalorder %v2841, 0
      %vm2951 = vcmp.eq.s32.totalorder %v2842, 0
      %vm2952 = vcmp.eq.s32.totalorder %v2843, 0
      %vm2953 = vcmp.eq.s32.totalorder %v2844, 0
      %vm2954 = vcmp.eq.s32.totalorder %v2845, 0
      %vm2955 = vcmp.eq.s32.totalorder %v2846, 0
      %vm2956 = vcmp.eq.s32.totalorder %v2847, 0
      %vm2957 = vcmp.eq.s32.totalorder %v2848, 0
      %vm2958 = vcmp.eq.s32.totalorder %v2849, 0
      %vm2959 = vcmp.eq.s32.totalorder %v2850, 0
      %vm2960 = vcmp.eq.s32.totalorder %v2851, 0
      %vm2961 = vcmp.eq.s32.totalorder %v2852, 0
      %vm2962 = vcmp.eq.s32.totalorder %v2853, 0
      %vm2963 = vcmp.eq.s32.totalorder %v2854, 0
      %vm2964 = vcmp.eq.s32.totalorder %v2855, 0
      %vm2965 = vcmp.eq.s32.totalorder %v2856, 0
      %vm2966 = vcmp.eq.s32.totalorder %v2857, 0
      %vm2967 = vcmp.eq.s32.totalorder %v2858, 0
      %vm2968 = vcmp.eq.s32.totalorder %v2859, 0
      %vm2969 = vcmp.eq.s32.totalorder %v2860, 0
      %vm2970 = vcmp.eq.s32.totalorder %v2861, 0
      %vm2971 = vcmp.eq.s32.totalorder %v2862, 0
      %vm2972 = vcmp.eq.s32.totalorder %v2863, 0
      %vm2973 = vcmp.eq.s32.totalorder %v2864, 0
      %vm2974 = vcmp.eq.s32.totalorder %v2865, 0
      %vm2975 = vcmp.eq.s32.totalorder %v2866, 0
      %vm2976 = vcmp.eq.s32.totalorder %v2867, 0
      %vm2977 = vcmp.eq.s32.totalorder %v2868, 0
      %vm2978 = vcmp.eq.s32.totalorder %v2869, 0
      %vm2979 = vcmp.eq.s32.totalorder %v2870, 0
      %vm2980 = vcmp.eq.s32.totalorder %v2871, 0
      %vm2981 = vcmp.eq.s32.totalorder %v2872, 0
      %vm2982 = vcmp.eq.s32.totalorder %v2873, 0
      %vm2983 = vcmp.eq.s32.totalorder %v2874, 0
      %vm2984 = vcmp.eq.s32.totalorder %v2875, 0
      %vm2985 = vcmp.eq.s32.totalorder %v2876, 0
      %vm2986 = vcmp.eq.s32.totalorder %v2877, 0
      %vm2987 = vcmp.eq.s32.totalorder %v2878, 0
      %vm2988 = vcmp.eq.s32.totalorder %v2879, 0
      %vm2989 = vcmp.eq.s32.totalorder %v2771, 4
      %vm2990 = vcmp.eq.s32.totalorder %v2772, 4
      %vm2991 = vcmp.eq.s32.totalorder %v2773, 4
      %vm2992 = vcmp.eq.s32.totalorder %v2774, 4
      %vm2993 = vcmp.eq.s32.totalorder %v2775, 4
      %vm2994 = vcmp.eq.s32.totalorder %v2776, 4
      %vm2995 = vcmp.eq.s32.totalorder %v2777, 4
      %vm2996 = vcmp.eq.s32.totalorder %v2778, 4
      %vm2997 = vcmp.eq.s32.totalorder %v2779, 4
      %vm2998 = vcmp.eq.s32.totalorder %v2780, 4
      %vm2999 = vcmp.eq.s32.totalorder %v2781, 4
      %vm3000 = vcmp.eq.s32.totalorder %v2782, 4
      %vm3001 = vcmp.eq.s32.totalorder %v2783, 4
      %vm3002 = vcmp.eq.s32.totalorder %v2784, 4
      %vm3003 = vcmp.eq.s32.totalorder %v2785, 4
      %vm3004 = vcmp.eq.s32.totalorder %v2786, 4
      %vm3005 = vcmp.eq.s32.totalorder %v2787, 4
      %vm3006 = vcmp.eq.s32.totalorder %v2788, 4
      %vm3007 = vcmp.eq.s32.totalorder %v2789, 4
      %vm3008 = vcmp.eq.s32.totalorder %v2790, 4
      %vm3009 = vcmp.eq.s32.totalorder %v2791, 4
      %vm3010 = vcmp.eq.s32.totalorder %v2792, 4
      %vm3011 = vcmp.eq.s32.totalorder %v2793, 4
      %vm3012 = vcmp.eq.s32.totalorder %v2794, 4
      %vm3013 = vcmp.eq.s32.totalorder %v2795, 4
      %vm3014 = vcmp.eq.s32.totalorder %v2796, 4
      %vm3015 = vcmp.eq.s32.totalorder %v2797, 4
      %vm3016 = vcmp.eq.s32.totalorder %v2798, 4
      %vm3017 = vcmp.eq.s32.totalorder %v2799, 4
      %vm3018 = vcmp.eq.s32.totalorder %v2800, 4
      %vm3019 = vcmp.eq.s32.totalorder %v2801, 4
      %vm3020 = vcmp.eq.s32.totalorder %v2802, 4
      %vm3021 = vcmp.eq.s32.totalorder %v2803, 4
      %vm3022 = vcmp.eq.s32.totalorder %v2804, 4
      %vm3023 = vcmp.eq.s32.totalorder %v2805, 4
      %vm3024 = vcmp.eq.s32.totalorder %v2806, 4
      %vm3025 = vcmp.eq.s32.totalorder %v2807, 4
      %vm3026 = vcmp.eq.s32.totalorder %v2808, 4
      %vm3027 = vcmp.eq.s32.totalorder %v2809, 4
      %vm3028 = vcmp.eq.s32.totalorder %v2810, 4
      %vm3029 = vcmp.eq.s32.totalorder %v2811, 4
      %vm3030 = vcmp.eq.s32.totalorder %v2812, 4
      %vm3031 = vcmp.eq.s32.totalorder %v2813, 4
      %vm3032 = vcmp.eq.s32.totalorder %v2814, 4
      %vm3033 = vcmp.eq.s32.totalorder %v2815, 4
      %vm3034 = vcmp.eq.s32.totalorder %v2816, 4
      %vm3035 = vcmp.eq.s32.totalorder %v2817, 4
      %vm3036 = vcmp.eq.s32.totalorder %v2818, 4
      %vm3037 = vcmp.eq.s32.totalorder %v2819, 4
      %vm3038 = vcmp.eq.s32.totalorder %v2820, 4
      %vm3039 = vcmp.eq.s32.totalorder %v2821, 4
      %vm3040 = vcmp.eq.s32.totalorder %v2822, 4
      %vm3041 = vcmp.eq.s32.totalorder %v2823, 4
      %vm3042 = vcmp.eq.s32.totalorder %v2824, 4
      %vm3043 = vcmp.eq.s32.totalorder %v2825, 4
      %vm3044 = vcmp.eq.s32.totalorder %v2826, 4
      %vm3045 = vcmp.eq.s32.totalorder %v2827, 4
      %vm3046 = vcmp.eq.s32.totalorder %v2828, 4
      %vm3047 = vcmp.eq.s32.totalorder %v2829, 4
      %vm3048 = vcmp.eq.s32.totalorder %v2830, 4
      %vm3049 = vcmp.eq.s32.totalorder %v2831, 4
      %vm3050 = vcmp.eq.s32.totalorder %v2832, 4
      %vm3051 = vcmp.eq.s32.totalorder %v2833, 4
      %vm3052 = vcmp.eq.s32.totalorder %v2834, 4
      %vm3053 = vcmp.eq.s32.totalorder %v2835, 4
      %vm3054 = vcmp.eq.s32.totalorder %v2836, 4
      %vm3055 = vcmp.eq.s32.totalorder %v2837, 4
      %vm3056 = vcmp.eq.s32.totalorder %v2838, 4
      %vm3057 = vcmp.eq.s32.totalorder %v2839, 4
      %vm3058 = vcmp.eq.s32.totalorder %v2840, 4
      %vm3059 = vcmp.eq.s32.totalorder %v2841, 4
      %vm3060 = vcmp.eq.s32.totalorder %v2842, 4
      %vm3061 = vcmp.eq.s32.totalorder %v2843, 4
      %vm3062 = vcmp.eq.s32.totalorder %v2844, 4
      %vm3063 = vcmp.eq.s32.totalorder %v2845, 4
      %vm3064 = vcmp.eq.s32.totalorder %v2846, 4
      %vm3065 = vcmp.eq.s32.totalorder %v2847, 4
      %vm3066 = vcmp.eq.s32.totalorder %v2848, 4
      %vm3067 = vcmp.eq.s32.totalorder %v2849, 4
      %vm3068 = vcmp.eq.s32.totalorder %v2850, 4
      %vm3069 = vcmp.eq.s32.totalorder %v2851, 4
      %vm3070 = vcmp.eq.s32.totalorder %v2852, 4
      %vm3071 = vcmp.eq.s32.totalorder %v2853, 4
      %vm3072 = vcmp.eq.s32.totalorder %v2854, 4
      %vm3073 = vcmp.eq.s32.totalorder %v2855, 4
      %vm3074 = vcmp.eq.s32.totalorder %v2856, 4
      %vm3075 = vcmp.eq.s32.totalorder %v2857, 4
      %vm3076 = vcmp.eq.s32.totalorder %v2858, 4
      %vm3077 = vcmp.eq.s32.totalorder %v2859, 4
      %vm3078 = vcmp.eq.s32.totalorder %v2860, 4
      %vm3079 = vcmp.eq.s32.totalorder %v2861, 4
      %vm3080 = vcmp.eq.s32.totalorder %v2862, 4
      %vm3081 = vcmp.eq.s32.totalorder %v2863, 4
      %vm3082 = vcmp.eq.s32.totalorder %v2864, 4
      %vm3083 = vcmp.eq.s32.totalorder %v2865, 4
      %vm3084 = vcmp.eq.s32.totalorder %v2866, 4
      %vm3085 = vcmp.eq.s32.totalorder %v2867, 4
      %vm3086 = vcmp.eq.s32.totalorder %v2868, 4
      %vm3087 = vcmp.eq.s32.totalorder %v2869, 4
      %vm3088 = vcmp.eq.s32.totalorder %v2870, 4
      %vm3089 = vcmp.eq.s32.totalorder %v2871, 4
      %vm3090 = vcmp.eq.s32.totalorder %v2872, 4
      %vm3091 = vcmp.eq.s32.totalorder %v2873, 4
      %vm3092 = vcmp.eq.s32.totalorder %v2874, 4
      %vm3093 = vcmp.eq.s32.totalorder %v2875, 4
      %vm3094 = vcmp.eq.s32.totalorder %v2876, 4
      %vm3095 = vcmp.eq.s32.totalorder %v2877, 4
      %vm3096 = vcmp.eq.s32.totalorder %v2878, 4
      %vm3097 = vcmp.eq.s32.totalorder %v2879, 4
      %vm3098 = vcmp.eq.s32.totalorder %v2771, 64
      %vm3099 = vcmp.eq.s32.totalorder %v2772, 64
      %vm3100 = vcmp.eq.s32.totalorder %v2773, 64
      %vm3101 = vcmp.eq.s32.totalorder %v2774, 64
      %vm3102 = vcmp.eq.s32.totalorder %v2775, 64
      %vm3103 = vcmp.eq.s32.totalorder %v2776, 64
      %vm3104 = vcmp.eq.s32.totalorder %v2777, 64
      %vm3105 = vcmp.eq.s32.totalorder %v2778, 64
      %vm3106 = vcmp.eq.s32.totalorder %v2779, 64
      %vm3107 = vcmp.eq.s32.totalorder %v2780, 64
      %vm3108 = vcmp.eq.s32.totalorder %v2781, 64
      %vm3109 = vcmp.eq.s32.totalorder %v2782, 64
      %vm3110 = vcmp.eq.s32.totalorder %v2783, 64
      %vm3111 = vcmp.eq.s32.totalorder %v2784, 64
      %vm3112 = vcmp.eq.s32.totalorder %v2785, 64
      %vm3113 = vcmp.eq.s32.totalorder %v2786, 64
      %vm3114 = vcmp.eq.s32.totalorder %v2787, 64
      %vm3115 = vcmp.eq.s32.totalorder %v2788, 64
      %vm3116 = vcmp.eq.s32.totalorder %v2789, 64
      %vm3117 = vcmp.eq.s32.totalorder %v2790, 64
      %vm3118 = vcmp.eq.s32.totalorder %v2791, 64
      %vm3119 = vcmp.eq.s32.totalorder %v2792, 64
      %vm3120 = vcmp.eq.s32.totalorder %v2793, 64
      %vm3121 = vcmp.eq.s32.totalorder %v2794, 64
      %vm3122 = vcmp.eq.s32.totalorder %v2795, 64
      %vm3123 = vcmp.eq.s32.totalorder %v2796, 64
      %vm3124 = vcmp.eq.s32.totalorder %v2797, 64
      %vm3125 = vcmp.eq.s32.totalorder %v2798, 64
      %vm3126 = vcmp.eq.s32.totalorder %v2799, 64
      %vm3127 = vcmp.eq.s32.totalorder %v2800, 64
      %vm3128 = vcmp.eq.s32.totalorder %v2801, 64
      %vm3129 = vcmp.eq.s32.totalorder %v2802, 64
      %vm3130 = vcmp.eq.s32.totalorder %v2803, 64
      %vm3131 = vcmp.eq.s32.totalorder %v2804, 64
      %vm3132 = vcmp.eq.s32.totalorder %v2805, 64
      %vm3133 = vcmp.eq.s32.totalorder %v2806, 64
      %vm3134 = vcmp.eq.s32.totalorder %v2807, 64
      %vm3135 = vcmp.eq.s32.totalorder %v2808, 64
      %vm3136 = vcmp.eq.s32.totalorder %v2809, 64
      %vm3137 = vcmp.eq.s32.totalorder %v2810, 64
      %vm3138 = vcmp.eq.s32.totalorder %v2811, 64
      %vm3139 = vcmp.eq.s32.totalorder %v2812, 64
      %vm3140 = vcmp.eq.s32.totalorder %v2813, 64
      %vm3141 = vcmp.eq.s32.totalorder %v2814, 64
      %vm3142 = vcmp.eq.s32.totalorder %v2815, 64
      %vm3143 = vcmp.eq.s32.totalorder %v2816, 64
      %vm3144 = vcmp.eq.s32.totalorder %v2817, 64
      %vm3145 = vcmp.eq.s32.totalorder %v2818, 64
      %vm3146 = vcmp.eq.s32.totalorder %v2819, 64
      %vm3147 = vcmp.eq.s32.totalorder %v2820, 64
      %vm3148 = vcmp.eq.s32.totalorder %v2821, 64
      %vm3149 = vcmp.eq.s32.totalorder %v2822, 64
      %vm3150 = vcmp.eq.s32.totalorder %v2823, 64
      %vm3151 = vcmp.eq.s32.totalorder %v2824, 64
      %vm3152 = vcmp.eq.s32.totalorder %v2825, 64
      %vm3153 = vcmp.eq.s32.totalorder %v2826, 64
      %vm3154 = vcmp.eq.s32.totalorder %v2827, 64
      %vm3155 = vcmp.eq.s32.totalorder %v2828, 64
      %vm3156 = vcmp.eq.s32.totalorder %v2829, 64
      %vm3157 = vcmp.eq.s32.totalorder %v2830, 64
      %vm3158 = vcmp.eq.s32.totalorder %v2831, 64
      %vm3159 = vcmp.eq.s32.totalorder %v2832, 64
      %vm3160 = vcmp.eq.s32.totalorder %v2833, 64
      %vm3161 = vcmp.eq.s32.totalorder %v2834, 64
      %vm3162 = vcmp.eq.s32.totalorder %v2835, 64
      %vm3163 = vcmp.eq.s32.totalorder %v2836, 64
      %vm3164 = vcmp.eq.s32.totalorder %v2837, 64
      %vm3165 = vcmp.eq.s32.totalorder %v2838, 64
      %vm3166 = vcmp.eq.s32.totalorder %v2839, 64
      %vm3167 = vcmp.eq.s32.totalorder %v2840, 64
      %vm3168 = vcmp.eq.s32.totalorder %v2841, 64
      %vm3169 = vcmp.eq.s32.totalorder %v2842, 64
      %vm3170 = vcmp.eq.s32.totalorder %v2843, 64
      %vm3171 = vcmp.eq.s32.totalorder %v2844, 64
      %vm3172 = vcmp.eq.s32.totalorder %v2845, 64
      %vm3173 = vcmp.eq.s32.totalorder %v2846, 64
      %vm3174 = vcmp.eq.s32.totalorder %v2847, 64
      %vm3175 = vcmp.eq.s32.totalorder %v2848, 64
      %vm3176 = vcmp.eq.s32.totalorder %v2849, 64
      %vm3177 = vcmp.eq.s32.totalorder %v2850, 64
      %vm3178 = vcmp.eq.s32.totalorder %v2851, 64
      %vm3179 = vcmp.eq.s32.totalorder %v2852, 64
      %vm3180 = vcmp.eq.s32.totalorder %v2853, 64
      %vm3181 = vcmp.eq.s32.totalorder %v2854, 64
      %vm3182 = vcmp.eq.s32.totalorder %v2855, 64
      %vm3183 = vcmp.eq.s32.totalorder %v2856, 64
      %vm3184 = vcmp.eq.s32.totalorder %v2857, 64
      %vm3185 = vcmp.eq.s32.totalorder %v2858, 64
      %vm3186 = vcmp.eq.s32.totalorder %v2859, 64
      %vm3187 = vcmp.eq.s32.totalorder %v2860, 64
      %vm3188 = vcmp.eq.s32.totalorder %v2861, 64
      %vm3189 = vcmp.eq.s32.totalorder %v2862, 64
      %vm3190 = vcmp.eq.s32.totalorder %v2863, 64
      %vm3191 = vcmp.eq.s32.totalorder %v2864, 64
      %vm3192 = vcmp.eq.s32.totalorder %v2865, 64
      %vm3193 = vcmp.eq.s32.totalorder %v2866, 64
      %vm3194 = vcmp.eq.s32.totalorder %v2867, 64
      %vm3195 = vcmp.eq.s32.totalorder %v2868, 64
      %vm3196 = vcmp.eq.s32.totalorder %v2869, 64
      %vm3197 = vcmp.eq.s32.totalorder %v2870, 64
      %vm3198 = vcmp.eq.s32.totalorder %v2871, 64
      %vm3199 = vcmp.eq.s32.totalorder %v2872, 64
      %vm3200 = vcmp.eq.s32.totalorder %v2873, 64
      %vm3201 = vcmp.eq.s32.totalorder %v2874, 64
      %vm3202 = vcmp.eq.s32.totalorder %v2875, 64
      %vm3203 = vcmp.eq.s32.totalorder %v2876, 64
      %vm3204 = vcmp.eq.s32.totalorder %v2877, 64
      %vm3205 = vcmp.eq.s32.totalorder %v2878, 64
      %vm3206 = vcmp.eq.s32.totalorder %v2879, 64
      %vm3207 = vcmp.eq.s32.totalorder %v2771, 68
      %vm3208 = vcmp.eq.s32.totalorder %v2772, 68
      %vm3209 = vcmp.eq.s32.totalorder %v2773, 68
      %vm3210 = vcmp.eq.s32.totalorder %v2774, 68
      %vm3211 = vcmp.eq.s32.totalorder %v2775, 68
      %vm3212 = vcmp.eq.s32.totalorder %v2776, 68
      %vm3213 = vcmp.eq.s32.totalorder %v2777, 68
      %vm3214 = vcmp.eq.s32.totalorder %v2778, 68
      %vm3215 = vcmp.eq.s32.totalorder %v2779, 68
      %vm3216 = vcmp.eq.s32.totalorder %v2780, 68
      %vm3217 = vcmp.eq.s32.totalorder %v2781, 68
      %vm3218 = vcmp.eq.s32.totalorder %v2782, 68
      %vm3219 = vcmp.eq.s32.totalorder %v2783, 68
      %vm3220 = vcmp.eq.s32.totalorder %v2784, 68
      %vm3221 = vcmp.eq.s32.totalorder %v2785, 68
      %vm3222 = vcmp.eq.s32.totalorder %v2786, 68
      %vm3223 = vcmp.eq.s32.totalorder %v2787, 68
      %vm3224 = vcmp.eq.s32.totalorder %v2788, 68
      %vm3225 = vcmp.eq.s32.totalorder %v2789, 68
      %vm3226 = vcmp.eq.s32.totalorder %v2790, 68
      %vm3227 = vcmp.eq.s32.totalorder %v2791, 68
      %vm3228 = vcmp.eq.s32.totalorder %v2792, 68
      %vm3229 = vcmp.eq.s32.totalorder %v2793, 68
      %vm3230 = vcmp.eq.s32.totalorder %v2794, 68
      %vm3231 = vcmp.eq.s32.totalorder %v2795, 68
      %vm3232 = vcmp.eq.s32.totalorder %v2796, 68
      %vm3233 = vcmp.eq.s32.totalorder %v2797, 68
      %vm3234 = vcmp.eq.s32.totalorder %v2798, 68
      %vm3235 = vcmp.eq.s32.totalorder %v2799, 68
      %vm3236 = vcmp.eq.s32.totalorder %v2800, 68
      %vm3237 = vcmp.eq.s32.totalorder %v2801, 68
      %vm3238 = vcmp.eq.s32.totalorder %v2802, 68
      %vm3239 = vcmp.eq.s32.totalorder %v2803, 68
      %vm3240 = vcmp.eq.s32.totalorder %v2804, 68
      %vm3241 = vcmp.eq.s32.totalorder %v2805, 68
      %vm3242 = vcmp.eq.s32.totalorder %v2806, 68
      %vm3243 = vcmp.eq.s32.totalorder %v2807, 68
      %vm3244 = vcmp.eq.s32.totalorder %v2808, 68
      %vm3245 = vcmp.eq.s32.totalorder %v2809, 68
      %vm3246 = vcmp.eq.s32.totalorder %v2810, 68
      %vm3247 = vcmp.eq.s32.totalorder %v2811, 68
      %vm3248 = vcmp.eq.s32.totalorder %v2812, 68
      %vm3249 = vcmp.eq.s32.totalorder %v2813, 68
      %vm3250 = vcmp.eq.s32.totalorder %v2814, 68
      %vm3251 = vcmp.eq.s32.totalorder %v2815, 68
      %vm3252 = vcmp.eq.s32.totalorder %v2816, 68
      %vm3253 = vcmp.eq.s32.totalorder %v2817, 68
      %vm3254 = vcmp.eq.s32.totalorder %v2818, 68
      %vm3255 = vcmp.eq.s32.totalorder %v2819, 68
      %vm3256 = vcmp.eq.s32.totalorder %v2820, 68
      %vm3257 = vcmp.eq.s32.totalorder %v2821, 68
      %vm3258 = vcmp.eq.s32.totalorder %v2822, 68
      %vm3259 = vcmp.eq.s32.totalorder %v2823, 68
      %vm3260 = vcmp.eq.s32.totalorder %v2824, 68
      %vm3261 = vcmp.eq.s32.totalorder %v2825, 68
      %vm3262 = vcmp.eq.s32.totalorder %v2826, 68
      %vm3263 = vcmp.eq.s32.totalorder %v2827, 68
      %vm3264 = vcmp.eq.s32.totalorder %v2828, 68
      %vm3265 = vcmp.eq.s32.totalorder %v2829, 68
      %vm3266 = vcmp.eq.s32.totalorder %v2830, 68
      %vm3267 = vcmp.eq.s32.totalorder %v2831, 68
      %vm3268 = vcmp.eq.s32.totalorder %v2832, 68
      %vm3269 = vcmp.eq.s32.totalorder %v2833, 68
      %vm3270 = vcmp.eq.s32.totalorder %v2834, 68
      %vm3271 = vcmp.eq.s32.totalorder %v2835, 68
      %vm3272 = vcmp.eq.s32.totalorder %v2836, 68
      %vm3273 = vcmp.eq.s32.totalorder %v2837, 68
      %vm3274 = vcmp.eq.s32.totalorder %v2838, 68
      %vm3275 = vcmp.eq.s32.totalorder %v2839, 68
      %vm3276 = vcmp.eq.s32.totalorder %v2840, 68
      %vm3277 = vcmp.eq.s32.totalorder %v2841, 68
      %vm3278 = vcmp.eq.s32.totalorder %v2842, 68
      %vm3279 = vcmp.eq.s32.totalorder %v2843, 68
      %vm3280 = vcmp.eq.s32.totalorder %v2844, 68
      %vm3281 = vcmp.eq.s32.totalorder %v2845, 68
      %vm3282 = vcmp.eq.s32.totalorder %v2846, 68
      %vm3283 = vcmp.eq.s32.totalorder %v2847, 68
      %vm3284 = vcmp.eq.s32.totalorder %v2848, 68
      %vm3285 = vcmp.eq.s32.totalorder %v2849, 68
      %vm3286 = vcmp.eq.s32.totalorder %v2850, 68
      %vm3287 = vcmp.eq.s32.totalorder %v2851, 68
      %vm3288 = vcmp.eq.s32.totalorder %v2852, 68
      %vm3289 = vcmp.eq.s32.totalorder %v2853, 68
      %vm3290 = vcmp.eq.s32.totalorder %v2854, 68
      %vm3291 = vcmp.eq.s32.totalorder %v2855, 68
      %vm3292 = vcmp.eq.s32.totalorder %v2856, 68
      %vm3293 = vcmp.eq.s32.totalorder %v2857, 68
      %vm3294 = vcmp.eq.s32.totalorder %v2858, 68
      %vm3295 = vcmp.eq.s32.totalorder %v2859, 68
      %vm3296 = vcmp.eq.s32.totalorder %v2860, 68
      %vm3297 = vcmp.eq.s32.totalorder %v2861, 68
      %vm3298 = vcmp.eq.s32.totalorder %v2862, 68
      %vm3299 = vcmp.eq.s32.totalorder %v2863, 68
      %vm3300 = vcmp.eq.s32.totalorder %v2864, 68
      %vm3301 = vcmp.eq.s32.totalorder %v2865, 68
      %vm3302 = vcmp.eq.s32.totalorder %v2866, 68
      %vm3303 = vcmp.eq.s32.totalorder %v2867, 68
      %vm3304 = vcmp.eq.s32.totalorder %v2868, 68
      %vm3305 = vcmp.eq.s32.totalorder %v2869, 68
      %vm3306 = vcmp.eq.s32.totalorder %v2870, 68
      %vm3307 = vcmp.eq.s32.totalorder %v2871, 68
      %vm3308 = vcmp.eq.s32.totalorder %v2872, 68
      %vm3309 = vcmp.eq.s32.totalorder %v2873, 68
      %vm3310 = vcmp.eq.s32.totalorder %v2874, 68
      %vm3311 = vcmp.eq.s32.totalorder %v2875, 68
      %vm3312 = vcmp.eq.s32.totalorder %v2876, 68
      %vm3313 = vcmp.eq.s32.totalorder %v2877, 68
      %vm3314 = vcmp.eq.s32.totalorder %v2878, 68
      %vm3315 = vcmp.eq.s32.totalorder %v2879, 68
      %vm3316 = vmor %vm2880, %vm2989
      %vm3317 = vmor %vm2881, %vm2990
      %vm3318 = vmor %vm2882, %vm2991
      %vm3319 = vmor %vm2883, %vm2992
      %vm3320 = vmor %vm2884, %vm2993
      %vm3321 = vmor %vm2885, %vm2994
      %vm3322 = vmor %vm2886, %vm2995
      %vm3323 = vmor %vm2887, %vm2996
      %vm3324 = vmor %vm2888, %vm2997
      %vm3325 = vmor %vm2889, %vm2998
      %vm3326 = vmor %vm2890, %vm2999
      %vm3327 = vmor %vm2891, %vm3000
      %vm3328 = vmor %vm2892, %vm3001
      %vm3329 = vmor %vm2893, %vm3002
      %vm3330 = vmor %vm2894, %vm3003
      %vm3331 = vmor %vm2895, %vm3004
      %vm3332 = vmor %vm2896, %vm3005
      %vm3333 = vmor %vm2897, %vm3006
      %vm3334 = vmor %vm2898, %vm3007
      %vm3335 = vmor %vm2899, %vm3008
      %vm3336 = vmor %vm2900, %vm3009
      %vm3337 = vmor %vm2901, %vm3010
      %vm3338 = vmor %vm2902, %vm3011
      %vm3339 = vmor %vm2903, %vm3012
      %vm3340 = vmor %vm2904, %vm3013
      %vm3341 = vmor %vm2905, %vm3014
      %vm3342 = vmor %vm2906, %vm3015
      %vm3343 = vmor %vm2907, %vm3016
      %vm3344 = vmor %vm2908, %vm3017
      %vm3345 = vmor %vm2909, %vm3018
      %vm3346 = vmor %vm2910, %vm3019
      %vm3347 = vmor %vm2911, %vm3020
      %vm3348 = vmor %vm2912, %vm3021
      %vm3349 = vmor %vm2913, %vm3022
      %vm3350 = vmor %vm2914, %vm3023
      %vm3351 = vmor %vm2915, %vm3024
      %vm3352 = vmor %vm2916, %vm3025
      %vm3353 = vmor %vm2917, %vm3026
      %vm3354 = vmor %vm2918, %vm3027
      %vm3355 = vmor %vm2919, %vm3028
      %vm3356 = vmor %vm2920, %vm3029
      %vm3357 = vmor %vm2921, %vm3030
      %vm3358 = vmor %vm2922, %vm3031
      %vm3359 = vmor %vm2923, %vm3032
      %vm3360 = vmor %vm2924, %vm3033
      %vm3361 = vmor %vm2925, %vm3034
      %vm3362 = vmor %vm2926, %vm3035
      %vm3363 = vmor %vm2927, %vm3036
      %vm3364 = vmor %vm2928, %vm3037
      %vm3365 = vmor %vm2929, %vm3038
      %vm3366 = vmor %vm2930, %vm3039
      %vm3367 = vmor %vm2931, %vm3040
      %vm3368 = vmor %vm2932, %vm3041
      %vm3369 = vmor %vm2933, %vm3042
      %vm3370 = vmor %vm2934, %vm3043
      %vm3371 = vmor %vm2935, %vm3044
      %vm3372 = vmor %vm2936, %vm3045
      %vm3373 = vmor %vm2937, %vm3046
      %vm3374 = vmor %vm2938, %vm3047
      %vm3375 = vmor %vm2939, %vm3048
      %vm3376 = vmor %vm2940, %vm3049
      %vm3377 = vmor %vm2941, %vm3050
      %vm3378 = vmor %vm2942, %vm3051
      %vm3379 = vmor %vm2943, %vm3052
      %vm3380 = vmor %vm2944, %vm3053
      %vm3381 = vmor %vm2945, %vm3054
      %vm3382 = vmor %vm2946, %vm3055
      %vm3383 = vmor %vm2947, %vm3056
      %vm3384 = vmor %vm2948, %vm3057
      %vm3385 = vmor %vm2949, %vm3058
      %vm3386 = vmor %vm2950, %vm3059
      %vm3387 = vmor %vm2951, %vm3060
      %vm3388 = vmor %vm2952, %vm3061
      %vm3389 = vmor %vm2953, %vm3062
      %vm3390 = vmor %vm2954, %vm3063
      %vm3391 = vmor %vm2955, %vm3064
      %vm3392 = vmor %vm2956, %vm3065
      %vm3393 = vmor %vm2957, %vm3066
      %vm3394 = vmor %vm2958, %vm3067
      %vm3395 = vmor %vm2959, %vm3068
      %vm3396 = vmor %vm2960, %vm3069
      %vm3397 = vmor %vm2961, %vm3070
      %vm3398 = vmor %vm2962, %vm3071
      %vm3399 = vmor %vm2963, %vm3072
      %vm3400 = vmor %vm2964, %vm3073
      %vm3401 = vmor %vm2965, %vm3074
      %vm3402 = vmor %vm2966, %vm3075
      %vm3403 = vmor %vm2967, %vm3076
      %vm3404 = vmor %vm2968, %vm3077
      %vm3405 = vmor %vm2969, %vm3078
      %vm3406 = vmor %vm2970, %vm3079
      %vm3407 = vmor %vm2971, %vm3080
      %vm3408 = vmor %vm2972, %vm3081
      %vm3409 = vmor %vm2973, %vm3082
      %vm3410 = vmor %vm2974, %vm3083
      %vm3411 = vmor %vm2975, %vm3084
      %vm3412 = vmor %vm2976, %vm3085
      %vm3413 = vmor %vm2977, %vm3086
      %vm3414 = vmor %vm2978, %vm3087
      %vm3415 = vmor %vm2979, %vm3088
      %vm3416 = vmor %vm2980, %vm3089
      %vm3417 = vmor %vm2981, %vm3090
      %vm3418 = vmor %vm2982, %vm3091
      %vm3419 = vmor %vm2983, %vm3092
      %vm3420 = vmor %vm2984, %vm3093
      %vm3421 = vmor %vm2985, %vm3094
      %vm3422 = vmor %vm2986, %vm3095
      %vm3423 = vmor %vm2987, %vm3096
      %vm3424 = vmor %vm2988, %vm3097
      %vm3425 = vmor %vm3316, %vm3098
      %vm3426 = vmor %vm3317, %vm3099
      %vm3427 = vmor %vm3318, %vm3100
      %vm3428 = vmor %vm3319, %vm3101
      %vm3429 = vmor %vm3320, %vm3102
      %vm3430 = vmor %vm3321, %vm3103
      %vm3431 = vmor %vm3322, %vm3104
      %vm3432 = vmor %vm3323, %vm3105
      %vm3433 = vmor %vm3324, %vm3106
      %vm3434 = vmor %vm3325, %vm3107
      %vm3435 = vmor %vm3326, %vm3108
      %vm3436 = vmor %vm3327, %vm3109
      %vm3437 = vmor %vm3328, %vm3110
      %vm3438 = vmor %vm3329, %vm3111
      %vm3439 = vmor %vm3330, %vm3112
      %vm3440 = vmor %vm3331, %vm3113
      %vm3441 = vmor %vm3332, %vm3114
      %vm3442 = vmor %vm3333, %vm3115
      %vm3443 = vmor %vm3334, %vm3116
      %vm3444 = vmor %vm3335, %vm3117
      %vm3445 = vmor %vm3336, %vm3118
      %vm3446 = vmor %vm3337, %vm3119
      %vm3447 = vmor %vm3338, %vm3120
      %vm3448 = vmor %vm3339, %vm3121
      %vm3449 = vmor %vm3340, %vm3122
      %vm3450 = vmor %vm3341, %vm3123
      %vm3451 = vmor %vm3342, %vm3124
      %vm3452 = vmor %vm3343, %vm3125
      %vm3453 = vmor %vm3344, %vm3126
      %vm3454 = vmor %vm3345, %vm3127
      %vm3455 = vmor %vm3346, %vm3128
      %vm3456 = vmor %vm3347, %vm3129
      %vm3457 = vmor %vm3348, %vm3130
      %vm3458 = vmor %vm3349, %vm3131
      %vm3459 = vmor %vm3350, %vm3132
      %vm3460 = vmor %vm3351, %vm3133
      %vm3461 = vmor %vm3352, %vm3134
      %vm3462 = vmor %vm3353, %vm3135
      %vm3463 = vmor %vm3354, %vm3136
      %vm3464 = vmor %vm3355, %vm3137
      %vm3465 = vmor %vm3356, %vm3138
      %vm3466 = vmor %vm3357, %vm3139
      %vm3467 = vmor %vm3358, %vm3140
      %vm3468 = vmor %vm3359, %vm3141
      %vm3469 = vmor %vm3360, %vm3142
      %vm3470 = vmor %vm3361, %vm3143
      %vm3471 = vmor %vm3362, %vm3144
      %vm3472 = vmor %vm3363, %vm3145
      %vm3473 = vmor %vm3364, %vm3146
      %vm3474 = vmor %vm3365, %vm3147
      %vm3475 = vmor %vm3366, %vm3148
      %vm3476 = vmor %vm3367, %vm3149
      %vm3477 = vmor %vm3368, %vm3150
      %vm3478 = vmor %vm3369, %vm3151
      %vm3479 = vmor %vm3370, %vm3152
      %vm3480 = vmor %vm3371, %vm3153
      %vm3481 = vmor %vm3372, %vm3154
      %vm3482 = vmor %vm3373, %vm3155
      %vm3483 = vmor %vm3374, %vm3156
      %vm3484 = vmor %vm3375, %vm3157
      %vm3485 = vmor %vm3376, %vm3158
      %vm3486 = vmor %vm3377, %vm3159
      %vm3487 = vmor %vm3378, %vm3160
      %vm3488 = vmor %vm3379, %vm3161
      %vm3489 = vmor %vm3380, %vm3162
      %vm3490 = vmor %vm3381, %vm3163
      %vm3491 = vmor %vm3382, %vm3164
      %vm3492 = vmor %vm3383, %vm3165
      %vm3493 = vmor %vm3384, %vm3166
      %vm3494 = vmor %vm3385, %vm3167
      %vm3495 = vmor %vm3386, %vm3168
      %vm3496 = vmor %vm3387, %vm3169
      %vm3497 = vmor %vm3388, %vm3170
      %vm3498 = vmor %vm3389, %vm3171
      %vm3499 = vmor %vm3390, %vm3172
      %vm3500 = vmor %vm3391, %vm3173
      %vm3501 = vmor %vm3392, %vm3174
      %vm3502 = vmor %vm3393, %vm3175
      %vm3503 = vmor %vm3394, %vm3176
      %vm3504 = vmor %vm3395, %vm3177
      %vm3505 = vmor %vm3396, %vm3178
      %vm3506 = vmor %vm3397, %vm3179
      %vm3507 = vmor %vm3398, %vm3180
      %vm3508 = vmor %vm3399, %vm3181
      %vm3509 = vmor %vm3400, %vm3182
      %vm3510 = vmor %vm3401, %vm3183
      %vm3511 = vmor %vm3402, %vm3184
      %vm3512 = vmor %vm3403, %vm3185
      %vm3513 = vmor %vm3404, %vm3186
      %vm3514 = vmor %vm3405, %vm3187
      %vm3515 = vmor %vm3406, %vm3188
      %vm3516 = vmor %vm3407, %vm3189
      %vm3517 = vmor %vm3408, %vm3190
      %vm3518 = vmor %vm3409, %vm3191
      %vm3519 = vmor %vm3410, %vm3192
      %vm3520 = vmor %vm3411, %vm3193
      %vm3521 = vmor %vm3412, %vm3194
      %vm3522 = vmor %vm3413, %vm3195
      %vm3523 = vmor %vm3414, %vm3196
      %vm3524 = vmor %vm3415, %vm3197
      %vm3525 = vmor %vm3416, %vm3198
      %vm3526 = vmor %vm3417, %vm3199
      %vm3527 = vmor %vm3418, %vm3200
      %vm3528 = vmor %vm3419, %vm3201
      %vm3529 = vmor %vm3420, %vm3202
      %vm3530 = vmor %vm3421, %vm3203
      %vm3531 = vmor %vm3422, %vm3204
      %vm3532 = vmor %vm3423, %vm3205
      %vm3533 = vmor %vm3424, %vm3206
      %vm3534 = vmor %vm3425, %vm3207
      %vm3535 = vmor %vm3426, %vm3208
      %vm3536 = vmor %vm3427, %vm3209
      %vm3537 = vmor %vm3428, %vm3210
      %vm3538 = vmor %vm3429, %vm3211
      %vm3539 = vmor %vm3430, %vm3212
      %vm3540 = vmor %vm3431, %vm3213
      %vm3541 = vmor %vm3432, %vm3214
      %vm3542 = vmor %vm3433, %vm3215
      %vm3543 = vmor %vm3434, %vm3216
      %vm3544 = vmor %vm3435, %vm3217
      %vm3545 = vmor %vm3436, %vm3218
      %vm3546 = vmor %vm3437, %vm3219
      %vm3547 = vmor %vm3438, %vm3220
      %vm3548 = vmor %vm3439, %vm3221
      %vm3549 = vmor %vm3440, %vm3222
      %vm3550 = vmor %vm3441, %vm3223
      %vm3551 = vmor %vm3442, %vm3224
      %vm3552 = vmor %vm3443, %vm3225
      %vm3553 = vmor %vm3444, %vm3226
      %vm3554 = vmor %vm3445, %vm3227
      %vm3555 = vmor %vm3446, %vm3228
      %vm3556 = vmor %vm3447, %vm3229
      %vm3557 = vmor %vm3448, %vm3230
      %vm3558 = vmor %vm3449, %vm3231
      %vm3559 = vmor %vm3450, %vm3232
      %vm3560 = vmor %vm3451, %vm3233
      %vm3561 = vmor %vm3452, %vm3234
      %vm3562 = vmor %vm3453, %vm3235
      %vm3563 = vmor %vm3454, %vm3236
      %vm3564 = vmor %vm3455, %vm3237
      %vm3565 = vmor %vm3456, %vm3238
      %vm3566 = vmor %vm3457, %vm3239
      %vm3567 = vmor %vm3458, %vm3240
      %vm3568 = vmor %vm3459, %vm3241
      %vm3569 = vmor %vm3460, %vm3242
      %vm3570 = vmor %vm3461, %vm3243
      %vm3571 = vmor %vm3462, %vm3244
      %vm3572 = vmor %vm3463, %vm3245
      %vm3573 = vmor %vm3464, %vm3246
      %vm3574 = vmor %vm3465, %vm3247
      %vm3575 = vmor %vm3466, %vm3248
      %vm3576 = vmor %vm3467, %vm3249
      %vm3577 = vmor %vm3468, %vm3250
      %vm3578 = vmor %vm3469, %vm3251
      %vm3579 = vmor %vm3470, %vm3252
      %vm3580 = vmor %vm3471, %vm3253
      %vm3581 = vmor %vm3472, %vm3254
      %vm3582 = vmor %vm3473, %vm3255
      %vm3583 = vmor %vm3474, %vm3256
      %vm3584 = vmor %vm3475, %vm3257
      %vm3585 = vmor %vm3476, %vm3258
      %vm3586 = vmor %vm3477, %vm3259
      %vm3587 = vmor %vm3478, %vm3260
      %vm3588 = vmor %vm3479, %vm3261
      %vm3589 = vmor %vm3480, %vm3262
      %vm3590 = vmor %vm3481, %vm3263
      %vm3591 = vmor %vm3482, %vm3264
      %vm3592 = vmor %vm3483, %vm3265
      %vm3593 = vmor %vm3484, %vm3266
      %vm3594 = vmor %vm3485, %vm3267
      %vm3595 = vmor %vm3486, %vm3268
      %vm3596 = vmor %vm3487, %vm3269
      %vm3597 = vmor %vm3488, %vm3270
      %vm3598 = vmor %vm3489, %vm3271
      %vm3599 = vmor %vm3490, %vm3272
      %vm3600 = vmor %vm3491, %vm3273
      %vm3601 = vmor %vm3492, %vm3274
      %vm3602 = vmor %vm3493, %vm3275
      %vm3603 = vmor %vm3494, %vm3276
      %vm3604 = vmor %vm3495, %vm3277
      %vm3605 = vmor %vm3496, %vm3278
      %vm3606 = vmor %vm3497, %vm3279
      %vm3607 = vmor %vm3498, %vm3280
      %vm3608 = vmor %vm3499, %vm3281
      %vm3609 = vmor %vm3500, %vm3282
      %vm3610 = vmor %vm3501, %vm3283
      %vm3611 = vmor %vm3502, %vm3284
      %vm3612 = vmor %vm3503, %vm3285
      %vm3613 = vmor %vm3504, %vm3286
      %vm3614 = vmor %vm3505, %vm3287
      %vm3615 = vmor %vm3506, %vm3288
      %vm3616 = vmor %vm3507, %vm3289
      %vm3617 = vmor %vm3508, %vm3290
      %vm3618 = vmor %vm3509, %vm3291
      %vm3619 = vmor %vm3510, %vm3292
      %vm3620 = vmor %vm3511, %vm3293
      %vm3621 = vmor %vm3512, %vm3294
      %vm3622 = vmor %vm3513, %vm3295
      %vm3623 = vmor %vm3514, %vm3296
      %vm3624 = vmor %vm3515, %vm3297
      %vm3625 = vmor %vm3516, %vm3298
      %vm3626 = vmor %vm3517, %vm3299
      %vm3627 = vmor %vm3518, %vm3300
      %vm3628 = vmor %vm3519, %vm3301
      %vm3629 = vmor %vm3520, %vm3302
      %vm3630 = vmor %vm3521, %vm3303
      %vm3631 = vmor %vm3522, %vm3304
      %vm3632 = vmor %vm3523, %vm3305
      %vm3633 = vmor %vm3524, %vm3306
      %vm3634 = vmor %vm3525, %vm3307
      %vm3635 = vmor %vm3526, %vm3308
      %vm3636 = vmor %vm3527, %vm3309
      %vm3637 = vmor %vm3528, %vm3310
      %vm3638 = vmor %vm3529, %vm3311
      %vm3639 = vmor %vm3530, %vm3312
      %vm3640 = vmor %vm3531, %vm3313
      %vm3641 = vmor %vm3532, %vm3314
      %vm3642 = vmor %vm3533, %vm3315
      %v3643 = vsel %vm3534, 0.25, 0.0
      %v3644 = vsel %vm3535, 0.25, 0.0
      %v3645 = vsel %vm3536, 0.25, 0.0
      %v3646 = vsel %vm3537, 0.25, 0.0
      %v3647 = vsel %vm3538, 0.25, 0.0
      %v3648 = vsel %vm3539, 0.25, 0.0
      %v3649 = vsel %vm3540, 0.25, 0.0
      %v3650 = vsel %vm3541, 0.25, 0.0
      %v3651 = vsel %vm3542, 0.25, 0.0
      %v3652 = vsel %vm3543, 0.25, 0.0
      %v3653 = vsel %vm3544, 0.25, 0.0
      %v3654 = vsel %vm3545, 0.25, 0.0
      %v3655 = vsel %vm3546, 0.25, 0.0
      %v3656 = vsel %vm3547, 0.25, 0.0
      %v3657 = vsel %vm3548, 0.25, 0.0
      %v3658 = vsel %vm3549, 0.25, 0.0
      %v3659 = vsel %vm3550, 0.25, 0.0
      %v3660 = vsel %vm3551, 0.25, 0.0
      %v3661 = vsel %vm3552, 0.25, 0.0
      %v3662 = vsel %vm3553, 0.25, 0.0
      %v3663 = vsel %vm3554, 0.25, 0.0
      %v3664 = vsel %vm3555, 0.25, 0.0
      %v3665 = vsel %vm3556, 0.25, 0.0
      %v3666 = vsel %vm3557, 0.25, 0.0
      %v3667 = vsel %vm3558, 0.25, 0.0
      %v3668 = vsel %vm3559, 0.25, 0.0
      %v3669 = vsel %vm3560, 0.25, 0.0
      %v3670 = vsel %vm3561, 0.25, 0.0
      %v3671 = vsel %vm3562, 0.25, 0.0
      %v3672 = vsel %vm3563, 0.25, 0.0
      %v3673 = vsel %vm3564, 0.25, 0.0
      %v3674 = vsel %vm3565, 0.25, 0.0
      %v3675 = vsel %vm3566, 0.25, 0.0
      %v3676 = vsel %vm3567, 0.25, 0.0
      %v3677 = vsel %vm3568, 0.25, 0.0
      %v3678 = vsel %vm3569, 0.25, 0.0
      %v3679 = vsel %vm3570, 0.25, 0.0
      %v3680 = vsel %vm3571, 0.25, 0.0
      %v3681 = vsel %vm3572, 0.25, 0.0
      %v3682 = vsel %vm3573, 0.25, 0.0
      %v3683 = vsel %vm3574, 0.25, 0.0
      %v3684 = vsel %vm3575, 0.25, 0.0
      %v3685 = vsel %vm3576, 0.25, 0.0
      %v3686 = vsel %vm3577, 0.25, 0.0
      %v3687 = vsel %vm3578, 0.25, 0.0
      %v3688 = vsel %vm3579, 0.25, 0.0
      %v3689 = vsel %vm3580, 0.25, 0.0
      %v3690 = vsel %vm3581, 0.25, 0.0
      %v3691 = vsel %vm3582, 0.25, 0.0
      %v3692 = vsel %vm3583, 0.25, 0.0
      %v3693 = vsel %vm3584, 0.25, 0.0
      %v3694 = vsel %vm3585, 0.25, 0.0
      %v3695 = vsel %vm3586, 0.25, 0.0
      %v3696 = vsel %vm3587, 0.25, 0.0
      %v3697 = vsel %vm3588, 0.25, 0.0
      %v3698 = vsel %vm3589, 0.25, 0.0
      %v3699 = vsel %vm3590, 0.25, 0.0
      %v3700 = vsel %vm3591, 0.25, 0.0
      %v3701 = vsel %vm3592, 0.25, 0.0
      %v3702 = vsel %vm3593, 0.25, 0.0
      %v3703 = vsel %vm3594, 0.25, 0.0
      %v3704 = vsel %vm3595, 0.25, 0.0
      %v3705 = vsel %vm3596, 0.25, 0.0
      %v3706 = vsel %vm3597, 0.25, 0.0
      %v3707 = vsel %vm3598, 0.25, 0.0
      %v3708 = vsel %vm3599, 0.25, 0.0
      %v3709 = vsel %vm3600, 0.25, 0.0
      %v3710 = vsel %vm3601, 0.25, 0.0
      %v3711 = vsel %vm3602, 0.25, 0.0
      %v3712 = vsel %vm3603, 0.25, 0.0
      %v3713 = vsel %vm3604, 0.25, 0.0
      %v3714 = vsel %vm3605, 0.25, 0.0
      %v3715 = vsel %vm3606, 0.25, 0.0
      %v3716 = vsel %vm3607, 0.25, 0.0
      %v3717 = vsel %vm3608, 0.25, 0.0
      %v3718 = vsel %vm3609, 0.25, 0.0
      %v3719 = vsel %vm3610, 0.25, 0.0
      %v3720 = vsel %vm3611, 0.25, 0.0
      %v3721 = vsel %vm3612, 0.25, 0.0
      %v3722 = vsel %vm3613, 0.25, 0.0
      %v3723 = vsel %vm3614, 0.25, 0.0
      %v3724 = vsel %vm3615, 0.25, 0.0
      %v3725 = vsel %vm3616, 0.25, 0.0
      %v3726 = vsel %vm3617, 0.25, 0.0
      %v3727 = vsel %vm3618, 0.25, 0.0
      %v3728 = vsel %vm3619, 0.25, 0.0
      %v3729 = vsel %vm3620, 0.25, 0.0
      %v3730 = vsel %vm3621, 0.25, 0.0
      %v3731 = vsel %vm3622, 0.25, 0.0
      %v3732 = vsel %vm3623, 0.25, 0.0
      %v3733 = vsel %vm3624, 0.25, 0.0
      %v3734 = vsel %vm3625, 0.25, 0.0
      %v3735 = vsel %vm3626, 0.25, 0.0
      %v3736 = vsel %vm3627, 0.25, 0.0
      %v3737 = vsel %vm3628, 0.25, 0.0
      %v3738 = vsel %vm3629, 0.25, 0.0
      %v3739 = vsel %vm3630, 0.25, 0.0
      %v3740 = vsel %vm3631, 0.25, 0.0
      %v3741 = vsel %vm3632, 0.25, 0.0
      %v3742 = vsel %vm3633, 0.25, 0.0
      %v3743 = vsel %vm3634, 0.25, 0.0
      %v3744 = vsel %vm3635, 0.25, 0.0
      %v3745 = vsel %vm3636, 0.25, 0.0
      %v3746 = vsel %vm3637, 0.25, 0.0
      %v3747 = vsel %vm3638, 0.25, 0.0
      %v3748 = vsel %vm3639, 0.25, 0.0
      %v3749 = vsel %vm3640, 0.25, 0.0
      %v3750 = vsel %vm3641, 0.25, 0.0
      %v3751 = vsel %vm3642, 0.25, 0.0
      %vm3752 = vcmask 842752
      %v3754 = vsel %vm3752, %v2636, 0
      %v3757 = vsel %vm3752, %v2643, 0
      %v3760 = vsel %vm3752, %v2650, 0
      %v3763 = vsel %vm3752, %v2657, 0
      %vm3765 = vcmask 1046528
      %v3767 = vsel %vm3765, %v3751, 0
      %3769 = vmatpush.msra.mxu0 %v3658
      %3770 = vmatpush.msra.mxu0 %v3657
      %3771 = vmatpush.msra.mxu0 %v3656
      %3772 = vmatpush.msra.mxu0 %v3655
      %3773 = vmatpush.msra.mxu0 %v3654
      %3774 = vmatpush.msra.mxu0 %v3653
      %3775 = vmatpush.msra.mxu0 %v3652
      %3776 = vmatpush.msra.mxu0 %v3651
      %3777 = vmatpush.msra.mxu0 %v3650
      %3778 = vmatpush.msra.mxu0 %v3649
      %3779 = vmatpush.msra.mxu0 %v3648
      %3780 = vmatpush.msra.mxu0 %v3647
      %3781 = vmatpush.msra.mxu0 %v3646
      %3782 = vmatpush.msra.mxu0 %v3645
      %3783 = vmatpush.msra.mxu0 %v3644
      %3784 = vmatpush.msra.mxu0 %v3643
      %3785 = vmatmul.f32.gmra.mxu0 %v2630
      %v3786 = vpop.f32.mrf.mxu0
      %v3787 = vadd.f32 0.0, %v3786
      %3788 = vmatmul.f32.gmra.mxu0 %v2637
      %v3789 = vpop.f32.mrf.mxu0
      %v3790 = vadd.f32 0.0, %v3789
      %3791 = vmatmul.f32.gmra.mxu0 %v2644
      %v3792 = vpop.f32.mrf.mxu0
      %v3793 = vadd.f32 0.0, %v3792
      %3794 = vmatmul.f32.gmra.mxu0 %v2651
      %v3795 = vpop.f32.mrf.mxu0
      %v3796 = vadd.f32 0.0, %v3795
      %3797 = vdwg.mxu0
      %3798 = vmatpush.msra.mxu0 %v3674
      %3799 = vmatpush.msra.mxu0 %v3673
      %3800 = vmatpush.msra.mxu0 %v3672
      %3801 = vmatpush.msra.mxu0 %v3671
      %3802 = vmatpush.msra.mxu0 %v3670
      %3803 = vmatpush.msra.mxu0 %v3669
      %3804 = vmatpush.msra.mxu0 %v3668
      %3805 = vmatpush.msra.mxu0 %v3667
      %3806 = vmatpush.msra.mxu0 %v3666
      %3807 = vmatpush.msra.mxu0 %v3665
      %3808 = vmatpush.msra.mxu0 %v3664
      %3809 = vmatpush.msra.mxu0 %v3663
      %3810 = vmatpush.msra.mxu0 %v3662
      %3811 = vmatpush.msra.mxu0 %v3661
      %3812 = vmatpush.msra.mxu0 %v3660
      %3813 = vmatpush.msra.mxu0 %v3659
      %3814 = vmatmul.f32.gmra.mxu0 %v2631
      %v3815 = vpop.f32.mrf.mxu0
      %v3816 = vadd.f32 %v3787, %v3815
      %3817 = vmatmul.f32.gmra.mxu0 %v2638
      %v3818 = vpop.f32.mrf.mxu0
      %v3819 = vadd.f32 %v3790, %v3818
      %3820 = vmatmul.f32.gmra.mxu0 %v2645
      %v3821 = vpop.f32.mrf.mxu0
      %v3822 = vadd.f32 %v3793, %v3821
      %3823 = vmatmul.f32.gmra.mxu0 %v2652
      %v3824 = vpop.f32.mrf.mxu0
      %v3825 = vadd.f32 %v3796, %v3824
      %3826 = vdwg.mxu0
      %3827 = vmatpush.msra.mxu0 %v3690
      %3828 = vmatpush.msra.mxu0 %v3689
      %3829 = vmatpush.msra.mxu0 %v3688
      %3830 = vmatpush.msra.mxu0 %v3687
      %3831 = vmatpush.msra.mxu0 %v3686
      %3832 = vmatpush.msra.mxu0 %v3685
      %3833 = vmatpush.msra.mxu0 %v3684
      %3834 = vmatpush.msra.mxu0 %v3683
      %3835 = vmatpush.msra.mxu0 %v3682
      %3836 = vmatpush.msra.mxu0 %v3681
      %3837 = vmatpush.msra.mxu0 %v3680
      %3838 = vmatpush.msra.mxu0 %v3679
      %3839 = vmatpush.msra.mxu0 %v3678
      %3840 = vmatpush.msra.mxu0 %v3677
      %3841 = vmatpush.msra.mxu0 %v3676
      %3842 = vmatpush.msra.mxu0 %v3675
      %3843 = vmatmul.f32.gmra.mxu0 %v2632
      %v3844 = vpop.f32.mrf.mxu0
      %v3845 = vadd.f32 %v3816, %v3844
      %3846 = vmatmul.f32.gmra.mxu0 %v2639
      %v3847 = vpop.f32.mrf.mxu0
      %v3848 = vadd.f32 %v3819, %v3847
      %3849 = vmatmul.f32.gmra.mxu0 %v2646
      %v3850 = vpop.f32.mrf.mxu0
      %v3851 = vadd.f32 %v3822, %v3850
      %3852 = vmatmul.f32.gmra.mxu0 %v2653
      %v3853 = vpop.f32.mrf.mxu0
      %v3854 = vadd.f32 %v3825, %v3853
      %3855 = vdwg.mxu0
      %3856 = vmatpush.msra.mxu0 %v3706
      %3857 = vmatpush.msra.mxu0 %v3705
      %3858 = vmatpush.msra.mxu0 %v3704
      %3859 = vmatpush.msra.mxu0 %v3703
      %3860 = vmatpush.msra.mxu0 %v3702
      %3861 = vmatpush.msra.mxu0 %v3701
      %3862 = vmatpush.msra.mxu0 %v3700
      %3863 = vmatpush.msra.mxu0 %v3699
      %3864 = vmatpush.msra.mxu0 %v3698
      %3865 = vmatpush.msra.mxu0 %v3697
      %3866 = vmatpush.msra.mxu0 %v3696
      %3867 = vmatpush.msra.mxu0 %v3695
      %3868 = vmatpush.msra.mxu0 %v3694
      %3869 = vmatpush.msra.mxu0 %v3693
      %3870 = vmatpush.msra.mxu0 %v3692
      %3871 = vmatpush.msra.mxu0 %v3691
      %3872 = vmatmul.f32.gmra.mxu0 %v2633
      %v3873 = vpop.f32.mrf.mxu0
      %v3874 = vadd.f32 %v3845, %v3873
      %3875 = vmatmul.f32.gmra.mxu0 %v2640
      %v3876 = vpop.f32.mrf.mxu0
      %v3877 = vadd.f32 %v3848, %v3876
      %3878 = vmatmul.f32.gmra.mxu0 %v2647
      %v3879 = vpop.f32.mrf.mxu0
      %v3880 = vadd.f32 %v3851, %v3879
      %3881 = vmatmul.f32.gmra.mxu0 %v2654
      %v3882 = vpop.f32.mrf.mxu0
      %v3883 = vadd.f32 %v3854, %v3882
      %3884 = vdwg.mxu0
      %3885 = vmatpush.msra.mxu0 %v3722
      %3886 = vmatpush.msra.mxu0 %v3721
      %3887 = vmatpush.msra.mxu0 %v3720
      %3888 = vmatpush.msra.mxu0 %v3719
      %3889 = vmatpush.msra.mxu0 %v3718
      %3890 = vmatpush.msra.mxu0 %v3717
      %3891 = vmatpush.msra.mxu0 %v3716
      %3892 = vmatpush.msra.mxu0 %v3715
      %3893 = vmatpush.msra.mxu0 %v3714
      %3894 = vmatpush.msra.mxu0 %v3713
      %3895 = vmatpush.msra.mxu0 %v3712
      %3896 = vmatpush.msra.mxu0 %v3711
      %3897 = vmatpush.msra.mxu0 %v3710
      %3898 = vmatpush.msra.mxu0 %v3709
      %3899 = vmatpush.msra.mxu0 %v3708
      %3900 = vmatpush.msra.mxu0 %v3707
      %3901 = vmatmul.f32.gmra.mxu0 %v2634
      %v3902 = vpop.f32.mrf.mxu0
      %v3903 = vadd.f32 %v3874, %v3902
      %3904 = vmatmul.f32.gmra.mxu0 %v2641
      %v3905 = vpop.f32.mrf.mxu0
      %v3906 = vadd.f32 %v3877, %v3905
      %3907 = vmatmul.f32.gmra.mxu0 %v2648
      %v3908 = vpop.f32.mrf.mxu0
      %v3909 = vadd.f32 %v3880, %v3908
      %3910 = vmatmul.f32.gmra.mxu0 %v2655
      %v3911 = vpop.f32.mrf.mxu0
      %v3912 = vadd.f32 %v3883, %v3911
      %3913 = vdwg.mxu0
      %3914 = vmatpush.msra.mxu0 %v3738
      %3915 = vmatpush.msra.mxu0 %v3737
      %3916 = vmatpush.msra.mxu0 %v3736
      %3917 = vmatpush.msra.mxu0 %v3735
      %3918 = vmatpush.msra.mxu0 %v3734
      %3919 = vmatpush.msra.mxu0 %v3733
      %3920 = vmatpush.msra.mxu0 %v3732
      %3921 = vmatpush.msra.mxu0 %v3731
      %3922 = vmatpush.msra.mxu0 %v3730
      %3923 = vmatpush.msra.mxu0 %v3729
      %3924 = vmatpush.msra.mxu0 %v3728
      %3925 = vmatpush.msra.mxu0 %v3727
      %3926 = vmatpush.msra.mxu0 %v3726
      %3927 = vmatpush.msra.mxu0 %v3725
      %3928 = vmatpush.msra.mxu0 %v3724
      %3929 = vmatpush.msra.mxu0 %v3723
      %3930 = vmatmul.f32.gmra.mxu0 %v2635
      %v3931 = vpop.f32.mrf.mxu0
      %v3932 = vadd.f32 %v3903, %v3931
      %3933 = vmatmul.f32.gmra.mxu0 %v2642
      %v3934 = vpop.f32.mrf.mxu0
      %v3935 = vadd.f32 %v3906, %v3934
      %3936 = vmatmul.f32.gmra.mxu0 %v2649
      %v3937 = vpop.f32.mrf.mxu0
      %v3938 = vadd.f32 %v3909, %v3937
      %3939 = vmatmul.f32.gmra.mxu0 %v2656
      %v3940 = vpop.f32.mrf.mxu0
      %v3941 = vadd.f32 %v3912, %v3940
      %3942 = vdwg.mxu0
      %3943 = vmatpush.msra.mxu0 0.0
      %3944 = vmatpush.msra.mxu0 0.0
      %3945 = vmatpush.msra.mxu0 0.0
      %3946 = vmatpush.msra.mxu0 %v3767
      %3947 = vmatpush.msra.mxu0 %v3750
      %3948 = vmatpush.msra.mxu0 %v3749
      %3949 = vmatpush.msra.mxu0 %v3748
      %3950 = vmatpush.msra.mxu0 %v3747
      %3951 = vmatpush.msra.mxu0 %v3746
      %3952 = vmatpush.msra.mxu0 %v3745
      %3953 = vmatpush.msra.mxu0 %v3744
      %3954 = vmatpush.msra.mxu0 %v3743
      %3955 = vmatpush.msra.mxu0 %v3742
      %3956 = vmatpush.msra.mxu0 %v3741
      %3957 = vmatpush.msra.mxu0 %v3740
      %3958 = vmatpush.msra.mxu0 %v3739
      %3959 = vmatmul.f32.gmra.mxu0 %v3754
      %v3960 = vpop.f32.mrf.mxu0
      %v3961 = vadd.f32 %v3932, %v3960
      %3962 = vmatmul.f32.gmra.mxu0 %v3757
      %v3963 = vpop.f32.mrf.mxu0
      %v3964 = vadd.f32 %v3935, %v3963
      %3965 = vmatmul.f32.gmra.mxu0 %v3760
      %v3966 = vpop.f32.mrf.mxu0
      %v3967 = vadd.f32 %v3938, %v3966
      %3968 = vmatmul.f32.gmra.mxu0 %v3763
      %v3969 = vpop.f32.mrf.mxu0
      %v3970 = vadd.f32 %v3941, %v3969
      %3971 = vdwg.mxu0
      %v3972 = vld [vmem:[%s7] sm:$0xff]
      %v3973 = vld [vmem:[%s7 + $0x8] sm:$0xff]
      %v3974 = vld [vmem:[%s7 + $0x10] sm:$0xff]
      %v3975 = vld [vmem:[%s7 + $0x18] sm:$0xff]
      %3977 = vset.pattern.permute.xlu0 0
      %3978 = vperm.xlu0 %3977, %v3972
      %v3979 = vpop.permute.xlu0 %3978
      %3982 = vset.pattern.permute.xlu0 0
      %3983 = vperm.xlu0 %3982, %v3973
      %v3984 = vpop.permute.xlu0 %3983
      %3987 = vset.pattern.permute.xlu0 0
      %3988 = vperm.xlu0 %3987, %v3974
      %v3989 = vpop.permute.xlu0 %3988
      %3992 = vset.pattern.permute.xlu0 0
      %3993 = vperm.xlu0 %3992, %v3975
      %v3994 = vpop.permute.xlu0 %3993
      %v3996 = vmul.f32 %v3961, %v3979
      %v3997 = vmul.f32 %v3964, %v3984
      %v3998 = vmul.f32 %v3967, %v3989
      %v3999 = vmul.f32 %v3970, %v3994
      %v4000 = vld [vmem:[%s8] sm:$0xff]
      %v4001 = vld [vmem:[%s8 + $0x8] sm:$0xff]
      %v4002 = vld [vmem:[%s8 + $0x10] sm:$0xff]
      %v4003 = vld [vmem:[%s8 + $0x18] sm:$0xff]
      %4005 = vset.pattern.permute.xlu0 0
      %4006 = vperm.xlu0 %4005, %v4000
      %v4007 = vpop.permute.xlu0 %4006
      %4010 = vset.pattern.permute.xlu0 0
      %4011 = vperm.xlu0 %4010, %v4001
      %v4012 = vpop.permute.xlu0 %4011
      %4015 = vset.pattern.permute.xlu0 0
      %4016 = vperm.xlu0 %4015, %v4002
      %v4017 = vpop.permute.xlu0 %4016
      %4020 = vset.pattern.permute.xlu0 0
      %4021 = vperm.xlu0 %4020, %v4003
      %v4022 = vpop.permute.xlu0 %4021
      %v4024 = vadd.f32 %v3996, %v4007
      %v4025 = vadd.f32 %v3997, %v4012
      %v4026 = vadd.f32 %v3998, %v4017
      %v4027 = vadd.f32 %v3999, %v4022
      %v4028 = vld [vmem:[%s9] sm:$0xff]
      %v4029 = vld [vmem:[%s9 + $0x8] sm:$0xff]
      %v4030 = vld [vmem:[%s10] sm:$0xff]
      %v4031 = vld [vmem:[%s10 + $0x8] sm:$0xff]
      %4033 = vset.pattern.permute.xlu0 0
      %4034 = vperm.xlu0 %4033, %v4030
      %v4035 = vpop.permute.xlu0 %4034
      %4038 = vset.pattern.permute.xlu0 0
      %4039 = vperm.xlu0 %4038, %v4031
      %v4040 = vpop.permute.xlu0 %4039
      %vm4042 = vcmask 261120
      %v4044 = vsel %vm4042, %v4028, 0
      %v4047 = vsel %vm4042, %v4029, 0
      %4049 = vmatpush.msra.mxu0 0.0
      %4050 = vmatpush.msra.mxu0 0.0
      %4051 = vmatpush.msra.mxu0 0.0
      %4052 = vmatpush.msra.mxu0 0.0
      %4053 = vmatpush.msra.mxu0 0.0
      %4054 = vmatpush.msra.mxu0 0.0
      %4055 = vmatpush.msra.mxu0 0.0
      %4056 = vmatpush.msra.mxu0 0.0
      %4057 = vmatpush.msra.mxu0 0.0
      %4058 = vmatpush.msra.mxu0 0.0
      %4059 = vmatpush.msra.mxu0 0.0
      %4060 = vmatpush.msra.mxu0 0.0
      %4061 = vmatpush.msra.mxu0 %v4027
      %4062 = vmatpush.msra.mxu0 %v4026
      %4063 = vmatpush.msra.mxu0 %v4025
      %4064 = vmatpush.msra.mxu0 %v4024
      %4065 = vmatmul.f32.gmra.mxu0 %v4044
      %v4066 = vpop.f32.mrf.mxu0
      %v4067 = vadd.f32 %v4035, %v4066
      %4068 = vmatmul.f32.gmra.mxu0 %v4047
      %v4069 = vpop.f32.mrf.mxu0
      %v4070 = vadd.f32 %v4040, %v4069
      %4071 = vdwg.mxu0
      %v4072 = vmax.f32 %v4067, 0.0
      %v4073 = vmax.f32 %v4070, 0.0
      %v4074 = vld [vmem:[%s11] sm:$0xff]
      %v4075 = vld [vmem:[%s12] sm:$0xff]
      %4077 = vset.pattern.permute.xlu0 0
      %4078 = vperm.xlu0 %4077, %v4075
      %v4079 = vpop.permute.xlu0 %4078
      %v4082 = vsel %vm1781, %v4074, 0
      %4084 = vmatpush.msra.mxu0 0.0
      %4085 = vmatpush.msra.mxu0 0.0
      %4086 = vmatpush.msra.mxu0 0.0
      %4087 = vmatpush.msra.mxu0 0.0
      %4088 = vmatpush.msra.mxu0 0.0
      %4089 = vmatpush.msra.mxu0 0.0
      %4090 = vmatpush.msra.mxu0 0.0
      %4091 = vmatpush.msra.mxu0 0.0
      %4092 = vmatpush.msra.mxu0 0.0
      %4093 = vmatpush.msra.mxu0 0.0
      %4094 = vmatpush.msra.mxu0 0.0
      %4095 = vmatpush.msra.mxu0 0.0
      %4096 = vmatpush.msra.mxu0 0.0
      %4097 = vmatpush.msra.mxu0 0.0
      %4098 = vmatpush.msra.mxu0 %v4073
      %4099 = vmatpush.msra.mxu0 %v4072
      %4100 = vmatmul.f32.gmra.mxu0 %v4082
      %v4101 = vpop.f32.mrf.mxu0
      %v4102 = vadd.f32 %v4079, %v4101
      %4103 = vdwg.mxu0
      %v4104 = vmax.f32 %v4102, 0.0
      %v4105 = vld [vmem:[%s13] sm:$0x1]
      %v4106 = vld [vmem:[#allocation2] sm:$0x1]
      %4108 = vset.pattern.permute.xlu0 0
      %4109 = vperm.xlu0 %4108, %v4106
      %v4110 = vpop.permute.xlu0 %4109
      %v4112 = vperm.slane %v4110, 0
      %vm4113 = vcmask 64512
      %v4115 = vsel %vm4113, %v4105, 0
      %4117 = vmatpush.msra.mxu0 0.0
      %4118 = vmatpush.msra.mxu0 0.0
      %4119 = vmatpush.msra.mxu0 0.0
      %4120 = vmatpush.msra.mxu0 0.0
      %4121 = vmatpush.msra.mxu0 0.0
      %4122 = vmatpush.msra.mxu0 0.0
      %4123 = vmatpush.msra.mxu0 0.0
      %4124 = vmatpush.msra.mxu0 0.0
      %4125 = vmatpush.msra.mxu0 0.0
      %4126 = vmatpush.msra.mxu0 0.0
      %4127 = vmatpush.msra.mxu0 0.0
      %4128 = vmatpush.msra.mxu0 0.0
      %4129 = vmatpush.msra.mxu0 0.0
      %4130 = vmatpush.msra.mxu0 0.0
      %4131 = vmatpush.msra.mxu0 0.0
      %4132 = vmatpush.msra.mxu0 %v4104
      %4133 = vmatmul.f32.gmra.mxu0 %v4115
      %v4134 = vpop.f32.mrf.mxu0
      %v4135 = vadd.f32 %v4112, %v4134
      %4136 = vdwg.mxu0
      %v4137 = vsub.f32 0.0, %v4135
      %v4138 = vmul.f32 %v4137, 1.442695
      %v4139 = vpow.pop %v4138
      %v4140 = vadd.f32 %v4139, 1.0
      %v4141 = vrcp.pop %v4140
      %v4142 = vmul.f32 %v4140, %v4141
      %v4143 = vsub.f32 1.0, %v4142
      %v4144 = vmul.f32 %v4141, %v4143
      %v4145 = vadd.f32 %v4141, %v4144
      %vm4146 = vweird.f32 %v4140
      %vm4147 = vweird.f32 %v4141
      %vm4148 = vmor %vm4146, %vm4147
      %v4149 = vsel %vm4148, %v4141, %v4145
      %v4150 = vand.u32 2147483647, %v4140
      %vm4151 = vcmp.eq.f32.partialorder %v4150, 8.507059e+37
      %v4152 = vand.u32 %v4140, 2147483648
      %v4153 = vor.u32 1.1754944e-38, %v4152
      %v4154 = vsel %vm4151, %v4153, %v4149
      %v4155 = vmul.f32 1.0, %v4154
      %vm4156 = vcmask 24576
      %4157 = vst.msk [vmem:[%s494] sm:$0x1] %vm4156, %v4155
      %p4158 = scmp.lt.s32.totalorder %s28, 1
      %s4159 = scalar_select %p4158, %s28, 1
      %s4160 = scalar_lea.vmem %s15, %s4159
      // Predicated region
      $region81: #{net_forward.1} parent=79 // pred_check
        %p4161 = pneg %p366
      $region82: #{net_forward.1} parent=79 // pred_check_branch
        %4163 = sbr.rel (%p4161) target = $region84
      $region83: #{net_forward.1} parent=79 // pred_region
        _
      $region84: #{net_forward.1} parent=79 // pred_fallthru
        _
    $region80: #{net_forward.1} parent=5 // pred_fallthru
      _
    %p4164 = scmp.le.s32.totalorder 2, %s23
    // Predicated region
    $region85: #{net_forward.1} parent=5 // pred_check
      %p4165 = pneg %p4164
    $region86: #{net_forward.1} parent=5 // pred_check_branch
      %4167 = sbr.rel (%p4165) target = $region88
    $region87: #{net_forward.1} parent=5 // pred_region
      %s4168 = ssub.s32 %s23, 2
      // Predicated region
      $region89: #{net_forward.1} parent=87 // pred_check
        %p4169 = pneg %p372
      $region90: #{net_forward.1} parent=87 // pred_check_branch
        %4171 = sbr.rel (%p4169) target = $region92
      $region91: #{net_forward.1} parent=87 // pred_region
        %p4172 = scmp.lt.s32.totalorder %s29, 1
        %s4173 = scalar_select %p4172, %s29, 1
        %s4174 = scalar_lea.vmem %s15, %s4173
      $region92: #{net_forward.1} parent=87 // pred_fallthru
        _
    $region88: #{net_forward.1} parent=5 // pred_fallthru
      _
  $region6: #{net_forward.1} parent=0 // loop_footer
    %s27 = sadd.s32 1, %s23
  $region7: #{net_forward.1} parent=0 // loop_footer_branch
    %22 = sbr.rel target = $region3
  $region8: #{net_forward.1} parent=0 // loop_exit
    _

</llo_original>
